<compile_context>
chip_gen: v7x
topology: tpu7x:2x2x1
jax: 0.10.0
libtpu: 0.0.40
codegen_flags: <defaults>
</compile_context>

<pallas_src>
import jax
import jax.numpy as jnp
from jax.experimental import pallas as pl
from jax.experimental.pallas import tpu as pltpu


# ----------------------------------------------------------------------------
# Fused kernel: per frame-block, for each stream g in {static, gripper}:
#   for each conv-output row i:
#     row   = sum_{di in 0..2}  x[g, 2i+di] @ Wband[g, di]      (bf16 -> f32)
#     row   = relu(row + bconv_row[g])
#     acc_g += row.bf16 @ Wfc[g, i]                              (bf16 -> f32)
#   proprio = state @ Wpr                                        (bf16 -> f32)
#   out[:, 0:32] = acc_static + b ; out[:, 32:64] = acc_grip + b ; out[:, 64:80] = proprio + b
# ----------------------------------------------------------------------------
def _fused_kernel(x_ref, st_ref, wband_ref, bconv_ref, wfc_ref, wpr_ref,
                  btail_ref, o_ref):
    bf = o_ref.shape[0]
    n_streams, k_h, _, u = wband_ref.shape
    h2 = wfc_ref.shape[1]
    vis = wfc_ref.shape[-1]

    acc = [jnp.zeros((bf, vis), jnp.float32) for _ in range(n_streams)]

    # TODO(synk): at real CALVIN resolutions switch this static unroll to a
    # lax.fori_loop (with the accumulators as carry) and/or a row-block grid
    # axis with a VMEM scratch accumulator so compile time and resident VMEM
    # stay bounded for large H2.
    for i in range(h2):
        for g in range(n_streams):
            row = jnp.zeros((bf, u), jnp.float32)
            for di in range(k_h):
                row = row + jnp.dot(x_ref[g, 2 * i + di],
                                    wband_ref[g, di],
                                    preferred_element_type=jnp.float32)
            row = jnp.maximum(row + bconv_ref[g], 0.0)
            acc[g] = acc[g] + jnp.dot(row.astype(jnp.bfloat16), wfc_ref[g, i],
                                      preferred_element_type=jnp.float32)

    prop = jnp.dot(st_ref[...], wpr_ref[...],
                   preferred_element_type=jnp.float32)
    b = btail_ref[...]
    o_ref[:, 0:vis] = (acc[0] + b[:, 0:vis]).astype(o_ref.dtype)
    o_ref[:, vis:2 * vis] = (acc[1] + b[:, vis:2 * vis]).astype(o_ref.dtype)
    o_ref[:, 2 * vis:] = (prop + b[:, 2 * vis:]).astype(o_ref.dtype)


def _fused_pallas_call(x, st, wband, bconv, wfc, wpr, btail, *, bf):
    n_streams, hp, fpad, lrow = x.shape
    latent = btail.shape[-1]
    grid = (fpad // bf,)
    return pl.pallas_call(
        _fused_kernel,
        out_shape=jax.ShapeDtypeStruct((fpad, latent), jnp.float32),
        grid=grid,
        in_specs=[
            pl.BlockSpec((n_streams, hp, bf, lrow), lambda i: (0, 0, i, 0)),
            pl.BlockSpec((bf, st.shape[-1]), lambda i: (i, 0)),
            pl.BlockSpec(wband.shape, lambda i: (0, 0, 0, 0)),
            pl.BlockSpec(bconv.shape, lambda i: (0, 0, 0)),
            pl.BlockSpec(wfc.shape, lambda i: (0, 0, 0, 0)),
            pl.BlockSpec(wpr.shape, lambda i: (0, 0)),
            pl.BlockSpec(btail.shape, lambda i: (0, 0)),
        ],
        out_specs=pl.BlockSpec((bf, latent), lambda i: (i, 0)),
        compiler_params=pltpu.CompilerParams(
            dimension_semantics=("parallel",),
            vmem_limit_bytes=32 * 1024 * 1024,
        ),
    )(x, st, wband, bconv, wfc, wpr, btail)


# ----------------------------------------------------------------------------
# Synthetic "checkpoint" in PyTorch layout (same init as before).
# ----------------------------------------------------------------------------
def init_params(key, h, w, n_state, vs_feats=32, vg_feats=32, proprio_out=16,
                conv_ch=8, k=3):
    ks = jax.random.split(key, 8)
    h2, w2 = h // 2, w // 2

    def dense(kk, fan_in, shape):
        return jax.random.normal(kk, shape, jnp.float32) / jnp.sqrt(fan_in)

    return {
        "vs_conv_w": dense(ks[0], 4 * k * k, (conv_ch, 4, k, k)),   # rgb + depth
        "vs_conv_b": jnp.zeros((conv_ch,), jnp.float32),
        "vs_fc_w": dense(ks[1], conv_ch * h2 * w2, (conv_ch * h2 * w2, vs_feats)),
        "vs_fc_b": jnp.zeros((vs_feats,), jnp.float32),
        "vg_conv_w": dense(ks[2], 3 * k * k, (conv_ch, 3, k, k)),   # rgb only
        "vg_conv_b": jnp.zeros((conv_ch,), jnp.float32),
        "vg_fc_w": dense(ks[3], conv_ch * h2 * w2, (conv_ch * h2 * w2, vg_feats)),
        "vg_fc_b": jnp.zeros((vg_feats,), jnp.float32),
        "pr_w": dense(ks[4], n_state, (n_state, proprio_out)),
        "pr_b": jnp.zeros((proprio_out,), jnp.float32),
    }


# ----------------------------------------------------------------------------
# One-time parameter fusion:
#   * banded conv weights (one (W+2)*Cin x W2*Cout matrix per kernel row per
#     stream) so the in-kernel conv needs no im2col,
#   * FC weights permuted to the kernel's per-row (j, cout) lane order and kept
#     compact (no zero-embedding into the 80-wide latent),
#   * biases in f32, all GEMM operands in bf16.
# ----------------------------------------------------------------------------
def prepare_fused_params(params, h, w, n_state, conv_ch=8, k=3,
                         vs_feats=32, vg_feats=32, proprio_out=16,
                         compute_dtype=jnp.bfloat16):
    h2, w2 = h // 2, w // 2
    wp = w + 2
    cin = 4                       # static stream = rgb+depth; gripper padded to 4
    u = w2 * conv_ch

    def banded(conv_w):
        cw = conv_w
        if cw.shape[1] < cin:     # gripper conv: zero weights for the pad channel
            cw = jnp.pad(cw, ((0, 0), (0, cin - cw.shape[1]), (0, 0), (0, 0)))
        jj = jnp.arange(w2)
        bands = []
        for di in range(k):
            m = jnp.zeros((wp, cin, w2, conv_ch), jnp.float32)
            for dj in range(k):
                tap = jnp.broadcast_to(cw[:, :, di, dj].T, (w2, cin, conv_ch))
                # padded input column 2j+dj feeds output column j with tap (di,dj)
                m = m.at[2 * jj + dj, :, jj, :].set(tap)
            bands.append(m.reshape(wp * cin, u))
        return jnp.stack(bands, axis=0)                        # (3, wp*cin, u)

    def fc_rows(fc_w, feats):
        # torch flatten of the conv output is NCHW: row = co*h2*w2 + i*w2 + j;
        # kernel consumes per output row i with lane order (j, co).
        return (fc_w.reshape(conv_ch, h2, w2, feats)
                .transpose(1, 2, 0, 3)
                .reshape(h2, w2 * conv_ch, feats))

    wband = jnp.stack([banded(params["vs_conv_w"]),
                       banded(params["vg_conv_w"])], axis=0)   # (2, 3, wp*cin, u)
    bconv = jnp.stack([jnp.tile(params["vs_conv_b"], w2),
                       jnp.tile(params["vg_conv_b"], w2)],
                      axis=0).reshape(2, 1, u)
    wfc = jnp.stack([fc_rows(params["vs_fc_w"], vs_feats),
                     fc_rows(params["vg_fc_w"], vg_feats)], axis=0)
    btail = jnp.concatenate([params["vs_fc_b"], params["vg_fc_b"],
                             params["pr_b"]]).reshape(1, -1)

    return {
        "wband": wband.astype(compute_dtype),
        "bconv": bconv.astype(jnp.float32),
        "wfc": wfc.astype(compute_dtype),
        "wpr": params["pr_w"].astype(compute_dtype),
        "btail": btail.astype(jnp.float32),
    }


# ----------------------------------------------------------------------------
# ConcatEncoders.forward (config: rgb_static + depth_static + rgb_gripper + state)
# ----------------------------------------------------------------------------
def concat_encoders_forward(fused, imgs, depth_imgs, state_obs, *, frame_block=8):
    imgs_static = imgs["rgb_static"]                      # (b, s, 3, h, w)
    imgs_gripper = imgs["rgb_gripper"]                    # (b, s, 3, h, w)
    depth_static = depth_imgs["depth_static"]             # (b, s, h, w)
    # TODO(synk): tactile / depth_gripper / gripper-absent branches are not
    # instantiated in this config (None in __init__) and are not implemented.

    b, s, c, h, w = imgs_static.shape
    frames = b * s
    x_s = imgs_static.reshape(frames, c, h, w)
    d = depth_static[:, :, None].reshape(frames, 1, h, w)   # unsqueeze(2)
    x_s = jnp.concatenate([x_s, d], axis=1)                 # (F, 4, h, w)
    cin = x_s.shape[1]
    x_g = imgs_gripper.reshape(frames, c, h, w)
    x_g = jnp.pad(x_g, ((0, 0), (0, cin - c), (0, 0), (0, 0)))  # zero 4th channel

    # Layout plumbing only (1x image bytes): NHWC, spatial pad 1, flatten (w, c)
    # into the lane dim, pad frames to a multiple of the block, and put frames
    # inside the row axis so each in-kernel conv-row read is contiguous.
    x = jnp.stack([x_s, x_g], axis=0)                        # (2, F, 4, h, w)
    x = x.transpose(0, 1, 3, 4, 2)                           # (2, F, h, w, 4)
    x = jnp.pad(x, ((0, 0), (0, 0), (1, 1), (1, 1), (0, 0))) # (2, F, h+2, w+2, 4)
    hp, wp = h + 2, w + 2

    bf = frame_block
    fpad = ((frames + bf - 1) // bf) * bf
    x = jnp.pad(x, ((0, 0), (0, fpad - frames), (0, 0), (0, 0), (0, 0)))
    x = x.reshape(2, fpad, hp, wp * cin).transpose(0, 2, 1, 3)   # (2, hp, Fpad, wp*4)
    x = x.astype(jnp.bfloat16)

    st = state_obs.reshape(frames, state_obs.shape[-1])
    st = jnp.pad(st, ((0, fpad - frames), (0, 0))).astype(jnp.bfloat16)

    out = _fused_pallas_call(x, st, fused["wband"], fused["bconv"],
                             fused["wfc"], fused["wpr"], fused["btail"], bf=bf)
    return out[:frames].reshape(b, s, -1)


# ----------------------------------------------------------------------------
# Reference mirroring the original module's computation path.  dtype controls
# the GEMM/conv operand precision (accumulation is always f32), so a
# bf16-matched reference gives a tight correctness check of the kernel.
# ----------------------------------------------------------------------------
def reference_forward(params, imgs, depth_imgs, state_obs, dtype=jnp.float32):
    imgs_static = imgs["rgb_static"]
    imgs_gripper = imgs["rgb_gripper"]
    depth_static = depth_imgs["depth_static"]
    b, s, c, h, w = imgs_static.shape
    x_s = imgs_static.reshape(-1, c, h, w)
    d = depth_static[:, :, None].reshape(-1, 1, h, w)
    x_s = jnp.concatenate([x_s, d], axis=1)
    x_g = imgs_gripper.reshape(-1, c, h, w)

    def conv_relu(x, wconv, bconv):
        y = jax.lax.conv_general_dilated(
            x.astype(dtype), wconv.astype(dtype),
            window_strides=(2, 2), padding=((1, 1), (1, 1)),
            dimension_numbers=("NCHW", "OIHW", "NCHW"),
            preferred_element_type=jnp.float32)
        return jnp.maximum(y + bconv[None, :, None, None], 0.0)

    def fc(a, wfc, bfc):
        return jnp.dot(a.astype(dtype), wfc.astype(dtype),
                       preferred_element_type=jnp.float32) + bfc

    enc_s = conv_relu(x_s, params["vs_conv_w"], params["vs_conv_b"])
    enc_s = fc(enc_s.reshape(enc_s.shape[0], -1), params["vs_fc_w"], params["vs_fc_b"])
    enc_g = conv_relu(x_g, params["vg_conv_w"], params["vg_conv_b"])
    enc_g = fc(enc_g.reshape(enc_g.shape[0], -1), params["vg_fc_w"], params["vg_fc_b"])
    st = fc(state_obs.reshape(-1, state_obs.shape[-1]), params["pr_w"], params["pr_b"])
    out = jnp.concatenate([enc_s, enc_g, st], axis=-1)
    return out.reshape(b, s, -1)


# ----------------------------------------------------------------------------
if __name__ == "__main__":
    key = jax.random.PRNGKey(0)
    b, s, h, w = 2, 8, 16, 16
    n_state = 8

    k_rgb_s, k_rgb_g, k_depth, k_state, k_params = jax.random.split(key, 5)
    imgs = {
        "rgb_static": jax.random.normal(k_rgb_s, (b, s, 3, h, w), jnp.float32),
        "rgb_gripper": jax.random.normal(k_rgb_g, (b, s, 3, h, w), jnp.float32),
    }
    depth_imgs = {
        "depth_static": jax.random.normal(k_depth, (b, s, h, w), jnp.float32),
    }
    state_obs = jax.random.normal(k_state, (b, s, n_state), jnp.float32)

    params = init_params(k_params, h, w, n_state)
    fused = prepare_fused_params(params, h, w, n_state)

    fwd = jax.jit(concat_encoders_forward)
    out = jax.block_until_ready(fwd(fused, imgs, depth_imgs, state_obs))

    # latent_size = 32 (static) + 32 (gripper) + 16 (proprio) = 80
    assert out.shape == (b, s, 80), out.shape
    assert out.dtype == jnp.float32

    # Tight check vs a matched-precision (bf16 operands, f32 accumulation)
    # reference -- catches any layout / permutation / banding bug.
    ref_bf16 = jax.block_until_ready(
        reference_forward(params, imgs, depth_imgs, state_obs, dtype=jnp.bfloat16))
    err_bf16 = float(jnp.max(jnp.abs(out - ref_bf16)))
    assert err_bf16 < 3e-3, f"mismatch vs bf16-matched reference: {err_bf16}"

    # Loose sanity check vs the full-f32 reference (bounds bf16 quantisation).
    ref_f32 = jax.block_until_ready(
        reference_forward(params, imgs, depth_imgs, state_obs, dtype=jnp.float32))
    err_f32 = float(jnp.max(jnp.abs(out - ref_f32)))
    assert err_f32 < 1e-1, f"mismatch vs f32 reference: {err_f32}"

    print("KERNEL_OK")
</pallas_src>

<mosaic_0001>
module attributes {stable_mosaic.version = 11 : i64} {
  func.func @_fused_kernel(%arg0: i32, %arg1: memref<2x18x8x72xbf16, #tpu.memory_space<vmem>>, %arg2: memref<8x8xbf16, #tpu.memory_space<vmem>>, %arg3: memref<2x3x72x64xbf16, #tpu.memory_space<vmem>>, %arg4: memref<2x1x64xf32, #tpu.memory_space<vmem>>, %arg5: memref<2x8x64x32xbf16, #tpu.memory_space<vmem>>, %arg6: memref<8x16xbf16, #tpu.memory_space<vmem>>, %arg7: memref<1x80xf32, #tpu.memory_space<vmem>>, %arg8: memref<8x80xf32, #tpu.memory_space<vmem>>) attributes {dimension_semantics = [#tpu.dimension_semantics<parallel>], iteration_bounds = array<i64: 2>, scalar_prefetch = 0 : i64, scratch_operands = 0 : i64, tpu.core_type = #tpu.core_type<tc>, window_params = [{transform_indices = @transform_0, window_bounds = array<i64: 2, 18, 8, 72>}, {transform_indices = @transform_1, window_bounds = array<i64: 8, 8>}, {pipeline_mode = #tpu.pipeline_mode<synchronous>, transform_indices = @transform_2, window_bounds = array<i64: 2, 3, 72, 64>}, {pipeline_mode = #tpu.pipeline_mode<synchronous>, transform_indices = @transform_3, window_bounds = array<i64: 2, 1, 64>}, {pipeline_mode = #tpu.pipeline_mode<synchronous>, transform_indices = @transform_4, window_bounds = array<i64: 2, 8, 64, 32>}, {pipeline_mode = #tpu.pipeline_mode<synchronous>, transform_indices = @transform_5, window_bounds = array<i64: 8, 16>}, {pipeline_mode = #tpu.pipeline_mode<synchronous>, transform_indices = @transform_6, window_bounds = array<i64: 1, 80>}, {transform_indices = @transform_7, window_bounds = array<i64: 8, 80>}]} {
    %cst = arith.constant 0.000000e+00 : f32
    %0 = vector.broadcast %cst : f32 to vector<8x32xf32>
    %cst_0 = arith.constant 0.000000e+00 : f32
    %1 = vector.broadcast %cst_0 : f32 to vector<8x32xf32>
    %cst_1 = arith.constant 0.000000e+00 : f32
    %2 = vector.broadcast %cst_1 : f32 to vector<8x64xf32>
    %c0 = arith.constant 0 : index
    %c0_2 = arith.constant 0 : index
    %c0_3 = arith.constant 0 : index
    %c0_4 = arith.constant 0 : index
    %3 = vector.load %arg1[%c0, %c0_2, %c0_3, %c0_4] : memref<2x18x8x72xbf16, #tpu.memory_space<vmem>>, vector<1x1x8x72xbf16>
    %4 = vector.shape_cast %3 : vector<1x1x8x72xbf16> to vector<8x72xbf16>
    %c0_5 = arith.constant 0 : index
    %c0_6 = arith.constant 0 : index
    %c0_7 = arith.constant 0 : index
    %c0_8 = arith.constant 0 : index
    %5 = vector.load %arg3[%c0_5, %c0_6, %c0_7, %c0_8] : memref<2x3x72x64xbf16, #tpu.memory_space<vmem>>, vector<1x1x72x64xbf16>
    %6 = vector.shape_cast %5 : vector<1x1x72x64xbf16> to vector<72x64xbf16>
    %cst_9 = arith.constant dense<0.000000e+00> : vector<8x64xf32>
    %7 = tpu.matmul %4, %6, %cst_9 {dimension_numbers = #tpu.dot_dimension_numbers<[1], [0], [0], [1], [0, 0, 1, 1], [], []>} : vector<8x72xbf16>, vector<72x64xbf16>, vector<8x64xf32> -> vector<8x64xf32>
    %8 = arith.addf %2, %7 : vector<8x64xf32>
    %c0_10 = arith.constant 0 : index
    %c1 = arith.constant 1 : index
    %c0_11 = arith.constant 0 : index
    %c0_12 = arith.constant 0 : index
    %9 = vector.load %arg1[%c0_10, %c1, %c0_11, %c0_12] : memref<2x18x8x72xbf16, #tpu.memory_space<vmem>>, vector<1x1x8x72xbf16>
    %10 = vector.shape_cast %9 : vector<1x1x8x72xbf16> to vector<8x72xbf16>
    %c0_13 = arith.constant 0 : index
    %c1_14 = arith.constant 1 : index
    %c0_15 = arith.constant 0 : index
    %c0_16 = arith.constant 0 : index
    %11 = vector.load %arg3[%c0_13, %c1_14, %c0_15, %c0_16] : memref<2x3x72x64xbf16, #tpu.memory_space<vmem>>, vector<1x1x72x64xbf16>
    %12 = vector.shape_cast %11 : vector<1x1x72x64xbf16> to vector<72x64xbf16>
    %cst_17 = arith.constant dense<0.000000e+00> : vector<8x64xf32>
    %13 = tpu.matmul %10, %12, %cst_17 {dimension_numbers = #tpu.dot_dimension_numbers<[1], [0], [0], [1], [0, 0, 1, 1], [], []>} : vector<8x72xbf16>, vector<72x64xbf16>, vector<8x64xf32> -> vector<8x64xf32>
    %14 = arith.addf %8, %13 : vector<8x64xf32>
    %c0_18 = arith.constant 0 : index
    %c2 = arith.constant 2 : index
    %c0_19 = arith.constant 0 : index
    %c0_20 = arith.constant 0 : index
    %15 = vector.load %arg1[%c0_18, %c2, %c0_19, %c0_20] : memref<2x18x8x72xbf16, #tpu.memory_space<vmem>>, vector<1x1x8x72xbf16>
    %16 = vector.shape_cast %15 : vector<1x1x8x72xbf16> to vector<8x72xbf16>
    %c0_21 = arith.constant 0 : index
    %c2_22 = arith.constant 2 : index
    %c0_23 = arith.constant 0 : index
    %c0_24 = arith.constant 0 : index
    %17 = vector.load %arg3[%c0_21, %c2_22, %c0_23, %c0_24] : memref<2x3x72x64xbf16, #tpu.memory_space<vmem>>, vector<1x1x72x64xbf16>
    %18 = vector.shape_cast %17 : vector<1x1x72x64xbf16> to vector<72x64xbf16>
    %cst_25 = arith.constant dense<0.000000e+00> : vector<8x64xf32>
    %19 = tpu.matmul %16, %18, %cst_25 {dimension_numbers = #tpu.dot_dimension_numbers<[1], [0], [0], [1], [0, 0, 1, 1], [], []>} : vector<8x72xbf16>, vector<72x64xbf16>, vector<8x64xf32> -> vector<8x64xf32>
    %20 = arith.addf %14, %19 : vector<8x64xf32>
    %c0_26 = arith.constant 0 : index
    %c0_27 = arith.constant 0 : index
    %c0_28 = arith.constant 0 : index
    %21 = vector.load %arg4[%c0_26, %c0_27, %c0_28] : memref<2x1x64xf32, #tpu.memory_space<vmem>>, vector<1x1x64xf32>
    %22 = vector.shape_cast %21 : vector<1x1x64xf32> to vector<1x64xf32>
    %23 = vector.broadcast %22 : vector<1x64xf32> to vector<8x64xf32>
    %24 = arith.addf %20, %23 : vector<8x64xf32>
    %cst_29 = arith.constant 0.000000e+00 : f32
    %25 = vector.broadcast %cst_29 : f32 to vector<8x64xf32>
    %26 = arith.maximumf %24, %25 : vector<8x64xf32>
    %27 = arith.truncf %26 : vector<8x64xf32> to vector<8x64xbf16>
    %c0_30 = arith.constant 0 : index
    %c0_31 = arith.constant 0 : index
    %c0_32 = arith.constant 0 : index
    %c0_33 = arith.constant 0 : index
    %28 = vector.load %arg5[%c0_30, %c0_31, %c0_32, %c0_33] : memref<2x8x64x32xbf16, #tpu.memory_space<vmem>>, vector<1x1x64x32xbf16>
    %29 = vector.shape_cast %28 : vector<1x1x64x32xbf16> to vector<64x32xbf16>
    %cst_34 = arith.constant dense<0.000000e+00> : vector<8x32xf32>
    %30 = tpu.matmul %27, %29, %cst_34 {dimension_numbers = #tpu.dot_dimension_numbers<[1], [0], [0], [1], [0, 0, 1, 1], [], []>} : vector<8x64xbf16>, vector<64x32xbf16>, vector<8x32xf32> -> vector<8x32xf32>
    %31 = arith.addf %0, %30 : vector<8x32xf32>
    %cst_35 = arith.constant 0.000000e+00 : f32
    %32 = vector.broadcast %cst_35 : f32 to vector<8x64xf32>
    %c1_36 = arith.constant 1 : index
    %c0_37 = arith.constant 0 : index
    %c0_38 = arith.constant 0 : index
    %c0_39 = arith.constant 0 : index
    %33 = vector.load %arg1[%c1_36, %c0_37, %c0_38, %c0_39] : memref<2x18x8x72xbf16, #tpu.memory_space<vmem>>, vector<1x1x8x72xbf16>
    %34 = vector.shape_cast %33 : vector<1x1x8x72xbf16> to vector<8x72xbf16>
    %c1_40 = arith.constant 1 : index
    %c0_41 = arith.constant 0 : index
    %c0_42 = arith.constant 0 : index
    %c0_43 = arith.constant 0 : index
    %35 = vector.load %arg3[%c1_40, %c0_41, %c0_42, %c0_43] : memref<2x3x72x64xbf16, #tpu.memory_space<vmem>>, vector<1x1x72x64xbf16>
    %36 = vector.shape_cast %35 : vector<1x1x72x64xbf16> to vector<72x64xbf16>
    %cst_44 = arith.constant dense<0.000000e+00> : vector<8x64xf32>
    %37 = tpu.matmul %34, %36, %cst_44 {dimension_numbers = #tpu.dot_dimension_numbers<[1], [0], [0], [1], [0, 0, 1, 1], [], []>} : vector<8x72xbf16>, vector<72x64xbf16>, vector<8x64xf32> -> vector<8x64xf32>
    %38 = arith.addf %32, %37 : vector<8x64xf32>
    %c1_45 = arith.constant 1 : index
    %c1_46 = arith.constant 1 : index
    %c0_47 = arith.constant 0 : index
    %c0_48 = arith.constant 0 : index
    %39 = vector.load %arg1[%c1_45, %c1_46, %c0_47, %c0_48] : memref<2x18x8x72xbf16, #tpu.memory_space<vmem>>, vector<1x1x8x72xbf16>
    %40 = vector.shape_cast %39 : vector<1x1x8x72xbf16> to vector<8x72xbf16>
    %c1_49 = arith.constant 1 : index
    %c1_50 = arith.constant 1 : index
    %c0_51 = arith.constant 0 : index
    %c0_52 = arith.constant 0 : index
    %41 = vector.load %arg3[%c1_49, %c1_50, %c0_51, %c0_52] : memref<2x3x72x64xbf16, #tpu.memory_space<vmem>>, vector<1x1x72x64xbf16>
    %42 = vector.shape_cast %41 : vector<1x1x72x64xbf16> to vector<72x64xbf16>
    %cst_53 = arith.constant dense<0.000000e+00> : vector<8x64xf32>
    %43 = tpu.matmul %40, %42, %cst_53 {dimension_numbers = #tpu.dot_dimension_numbers<[1], [0], [0], [1], [0, 0, 1, 1], [], []>} : vector<8x72xbf16>, vector<72x64xbf16>, vector<8x64xf32> -> vector<8x64xf32>
    %44 = arith.addf %38, %43 : vector<8x64xf32>
    %c1_54 = arith.constant 1 : index
    %c2_55 = arith.constant 2 : index
    %c0_56 = arith.constant 0 : index
    %c0_57 = arith.constant 0 : index
    %45 = vector.load %arg1[%c1_54, %c2_55, %c0_56, %c0_57] : memref<2x18x8x72xbf16, #tpu.memory_space<vmem>>, vector<1x1x8x72xbf16>
    %46 = vector.shape_cast %45 : vector<1x1x8x72xbf16> to vector<8x72xbf16>
    %c1_58 = arith.constant 1 : index
    %c2_59 = arith.constant 2 : index
    %c0_60 = arith.constant 0 : index
    %c0_61 = arith.constant 0 : index
    %47 = vector.load %arg3[%c1_58, %c2_59, %c0_60, %c0_61] : memref<2x3x72x64xbf16, #tpu.memory_space<vmem>>, vector<1x1x72x64xbf16>
    %48 = vector.shape_cast %47 : vector<1x1x72x64xbf16> to vector<72x64xbf16>
    %cst_62 = arith.constant dense<0.000000e+00> : vector<8x64xf32>
    %49 = tpu.matmul %46, %48, %cst_62 {dimension_numbers = #tpu.dot_dimension_numbers<[1], [0], [0], [1], [0, 0, 1, 1], [], []>} : vector<8x72xbf16>, vector<72x64xbf16>, vector<8x64xf32> -> vector<8x64xf32>
    %50 = arith.addf %44, %49 : vector<8x64xf32>
    %c1_63 = arith.constant 1 : index
    %c0_64 = arith.constant 0 : index
    %c0_65 = arith.constant 0 : index
    %51 = vector.load %arg4[%c1_63, %c0_64, %c0_65] : memref<2x1x64xf32, #tpu.memory_space<vmem>>, vector<1x1x64xf32>
    %52 = vector.shape_cast %51 : vector<1x1x64xf32> to vector<1x64xf32>
    %53 = vector.broadcast %52 : vector<1x64xf32> to vector<8x64xf32>
    %54 = arith.addf %50, %53 : vector<8x64xf32>
    %cst_66 = arith.constant 0.000000e+00 : f32
    %55 = vector.broadcast %cst_66 : f32 to vector<8x64xf32>
    %56 = arith.maximumf %54, %55 : vector<8x64xf32>
    %57 = arith.truncf %56 : vector<8x64xf32> to vector<8x64xbf16>
    %c1_67 = arith.constant 1 : index
    %c0_68 = arith.constant 0 : index
    %c0_69 = arith.constant 0 : index
    %c0_70 = arith.constant 0 : index
    %58 = vector.load %arg5[%c1_67, %c0_68, %c0_69, %c0_70] : memref<2x8x64x32xbf16, #tpu.memory_space<vmem>>, vector<1x1x64x32xbf16>
    %59 = vector.shape_cast %58 : vector<1x1x64x32xbf16> to vector<64x32xbf16>
    %cst_71 = arith.constant dense<0.000000e+00> : vector<8x32xf32>
    %60 = tpu.matmul %57, %59, %cst_71 {dimension_numbers = #tpu.dot_dimension_numbers<[1], [0], [0], [1], [0, 0, 1, 1], [], []>} : vector<8x64xbf16>, vector<64x32xbf16>, vector<8x32xf32> -> vector<8x32xf32>
    %61 = arith.addf %1, %60 : vector<8x32xf32>
    %cst_72 = arith.constant 0.000000e+00 : f32
    %62 = vector.broadcast %cst_72 : f32 to vector<8x64xf32>
    %c0_73 = arith.constant 0 : index
    %c2_74 = arith.constant 2 : index
    %c0_75 = arith.constant 0 : index
    %c0_76 = arith.constant 0 : index
    %63 = vector.load %arg1[%c0_73, %c2_74, %c0_75, %c0_76] : memref<2x18x8x72xbf16, #tpu.memory_space<vmem>>, vector<1x1x8x72xbf16>
    %64 = vector.shape_cast %63 : vector<1x1x8x72xbf16> to vector<8x72xbf16>
    %c0_77 = arith.constant 0 : index
    %c0_78 = arith.constant 0 : index
    %c0_79 = arith.constant 0 : index
    %c0_80 = arith.constant 0 : index
    %65 = vector.load %arg3[%c0_77, %c0_78, %c0_79, %c0_80] : memref<2x3x72x64xbf16, #tpu.memory_space<vmem>>, vector<1x1x72x64xbf16>
    %66 = vector.shape_cast %65 : vector<1x1x72x64xbf16> to vector<72x64xbf16>
    %cst_81 = arith.constant dense<0.000000e+00> : vector<8x64xf32>
    %67 = tpu.matmul %64, %66, %cst_81 {dimension_numbers = #tpu.dot_dimension_numbers<[1], [0], [0], [1], [0, 0, 1, 1], [], []>} : vector<8x72xbf16>, vector<72x64xbf16>, vector<8x64xf32> -> vector<8x64xf32>
    %68 = arith.addf %62, %67 : vector<8x64xf32>
    %c0_82 = arith.constant 0 : index
    %c3 = arith.constant 3 : index
    %c0_83 = arith.constant 0 : index
    %c0_84 = arith.constant 0 : index
    %69 = vector.load %arg1[%c0_82, %c3, %c0_83, %c0_84] : memref<2x18x8x72xbf16, #tpu.memory_space<vmem>>, vector<1x1x8x72xbf16>
    %70 = vector.shape_cast %69 : vector<1x1x8x72xbf16> to vector<8x72xbf16>
    %c0_85 = arith.constant 0 : index
    %c1_86 = arith.constant 1 : index
    %c0_87 = arith.constant 0 : index
    %c0_88 = arith.constant 0 : index
    %71 = vector.load %arg3[%c0_85, %c1_86, %c0_87, %c0_88] : memref<2x3x72x64xbf16, #tpu.memory_space<vmem>>, vector<1x1x72x64xbf16>
    %72 = vector.shape_cast %71 : vector<1x1x72x64xbf16> to vector<72x64xbf16>
    %cst_89 = arith.constant dense<0.000000e+00> : vector<8x64xf32>
    %73 = tpu.matmul %70, %72, %cst_89 {dimension_numbers = #tpu.dot_dimension_numbers<[1], [0], [0], [1], [0, 0, 1, 1], [], []>} : vector<8x72xbf16>, vector<72x64xbf16>, vector<8x64xf32> -> vector<8x64xf32>
    %74 = arith.addf %68, %73 : vector<8x64xf32>
    %c0_90 = arith.constant 0 : index
    %c4 = arith.constant 4 : index
    %c0_91 = arith.constant 0 : index
    %c0_92 = arith.constant 0 : index
    %75 = vector.load %arg1[%c0_90, %c4, %c0_91, %c0_92] : memref<2x18x8x72xbf16, #tpu.memory_space<vmem>>, vector<1x1x8x72xbf16>
    %76 = vector.shape_cast %75 : vector<1x1x8x72xbf16> to vector<8x72xbf16>
    %c0_93 = arith.constant 0 : index
    %c2_94 = arith.constant 2 : index
    %c0_95 = arith.constant 0 : index
    %c0_96 = arith.constant 0 : index
    %77 = vector.load %arg3[%c0_93, %c2_94, %c0_95, %c0_96] : memref<2x3x72x64xbf16, #tpu.memory_space<vmem>>, vector<1x1x72x64xbf16>
    %78 = vector.shape_cast %77 : vector<1x1x72x64xbf16> to vector<72x64xbf16>
    %cst_97 = arith.constant dense<0.000000e+00> : vector<8x64xf32>
    %79 = tpu.matmul %76, %78, %cst_97 {dimension_numbers = #tpu.dot_dimension_numbers<[1], [0], [0], [1], [0, 0, 1, 1], [], []>} : vector<8x72xbf16>, vector<72x64xbf16>, vector<8x64xf32> -> vector<8x64xf32>
    %80 = arith.addf %74, %79 : vector<8x64xf32>
    %c0_98 = arith.constant 0 : index
    %c0_99 = arith.constant 0 : index
    %c0_100 = arith.constant 0 : index
    %81 = vector.load %arg4[%c0_98, %c0_99, %c0_100] : memref<2x1x64xf32, #tpu.memory_space<vmem>>, vector<1x1x64xf32>
    %82 = vector.shape_cast %81 : vector<1x1x64xf32> to vector<1x64xf32>
    %83 = vector.broadcast %82 : vector<1x64xf32> to vector<8x64xf32>
    %84 = arith.addf %80, %83 : vector<8x64xf32>
    %cst_101 = arith.constant 0.000000e+00 : f32
    %85 = vector.broadcast %cst_101 : f32 to vector<8x64xf32>
    %86 = arith.maximumf %84, %85 : vector<8x64xf32>
    %87 = arith.truncf %86 : vector<8x64xf32> to vector<8x64xbf16>
    %c0_102 = arith.constant 0 : index
    %c1_103 = arith.constant 1 : index
    %c0_104 = arith.constant 0 : index
    %c0_105 = arith.constant 0 : index
    %88 = vector.load %arg5[%c0_102, %c1_103, %c0_104, %c0_105] : memref<2x8x64x32xbf16, #tpu.memory_space<vmem>>, vector<1x1x64x32xbf16>
    %89 = vector.shape_cast %88 : vector<1x1x64x32xbf16> to vector<64x32xbf16>
    %cst_106 = arith.constant dense<0.000000e+00> : vector<8x32xf32>
    %90 = tpu.matmul %87, %89, %cst_106 {dimension_numbers = #tpu.dot_dimension_numbers<[1], [0], [0], [1], [0, 0, 1, 1], [], []>} : vector<8x64xbf16>, vector<64x32xbf16>, vector<8x32xf32> -> vector<8x32xf32>
    %91 = arith.addf %31, %90 : vector<8x32xf32>
    %cst_107 = arith.constant 0.000000e+00 : f32
    %92 = vector.broadcast %cst_107 : f32 to vector<8x64xf32>
    %c1_108 = arith.constant 1 : index
    %c2_109 = arith.constant 2 : index
    %c0_110 = arith.constant 0 : index
    %c0_111 = arith.constant 0 : index
    %93 = vector.load %arg1[%c1_108, %c2_109, %c0_110, %c0_111] : memref<2x18x8x72xbf16, #tpu.memory_space<vmem>>, vector<1x1x8x72xbf16>
    %94 = vector.shape_cast %93 : vector<1x1x8x72xbf16> to vector<8x72xbf16>
    %c1_112 = arith.constant 1 : index
    %c0_113 = arith.constant 0 : index
    %c0_114 = arith.constant 0 : index
    %c0_115 = arith.constant 0 : index
    %95 = vector.load %arg3[%c1_112, %c0_113, %c0_114, %c0_115] : memref<2x3x72x64xbf16, #tpu.memory_space<vmem>>, vector<1x1x72x64xbf16>
    %96 = vector.shape_cast %95 : vector<1x1x72x64xbf16> to vector<72x64xbf16>
    %cst_116 = arith.constant dense<0.000000e+00> : vector<8x64xf32>
    %97 = tpu.matmul %94, %96, %cst_116 {dimension_numbers = #tpu.dot_dimension_numbers<[1], [0], [0], [1], [0, 0, 1, 1], [], []>} : vector<8x72xbf16>, vector<72x64xbf16>, vector<8x64xf32> -> vector<8x64xf32>
    %98 = arith.addf %92, %97 : vector<8x64xf32>
    %c1_117 = arith.constant 1 : index
    %c3_118 = arith.constant 3 : index
    %c0_119 = arith.constant 0 : index
    %c0_120 = arith.constant 0 : index
    %99 = vector.load %arg1[%c1_117, %c3_118, %c0_119, %c0_120] : memref<2x18x8x72xbf16, #tpu.memory_space<vmem>>, vector<1x1x8x72xbf16>
    %100 = vector.shape_cast %99 : vector<1x1x8x72xbf16> to vector<8x72xbf16>
    %c1_121 = arith.constant 1 : index
    %c1_122 = arith.constant 1 : index
    %c0_123 = arith.constant 0 : index
    %c0_124 = arith.constant 0 : index
    %101 = vector.load %arg3[%c1_121, %c1_122, %c0_123, %c0_124] : memref<2x3x72x64xbf16, #tpu.memory_space<vmem>>, vector<1x1x72x64xbf16>
    %102 = vector.shape_cast %101 : vector<1x1x72x64xbf16> to vector<72x64xbf16>
    %cst_125 = arith.constant dense<0.000000e+00> : vector<8x64xf32>
    %103 = tpu.matmul %100, %102, %cst_125 {dimension_numbers = #tpu.dot_dimension_numbers<[1], [0], [0], [1], [0, 0, 1, 1], [], []>} : vector<8x72xbf16>, vector<72x64xbf16>, vector<8x64xf32> -> vector<8x64xf32>
    %104 = arith.addf %98, %103 : vector<8x64xf32>
    %c1_126 = arith.constant 1 : index
    %c4_127 = arith.constant 4 : index
    %c0_128 = arith.constant 0 : index
    %c0_129 = arith.constant 0 : index
    %105 = vector.load %arg1[%c1_126, %c4_127, %c0_128, %c0_129] : memref<2x18x8x72xbf16, #tpu.memory_space<vmem>>, vector<1x1x8x72xbf16>
    %106 = vector.shape_cast %105 : vector<1x1x8x72xbf16> to vector<8x72xbf16>
    %c1_130 = arith.constant 1 : index
    %c2_131 = arith.constant 2 : index
    %c0_132 = arith.constant 0 : index
    %c0_133 = arith.constant 0 : index
    %107 = vector.load %arg3[%c1_130, %c2_131, %c0_132, %c0_133] : memref<2x3x72x64xbf16, #tpu.memory_space<vmem>>, vector<1x1x72x64xbf16>
    %108 = vector.shape_cast %107 : vector<1x1x72x64xbf16> to vector<72x64xbf16>
    %cst_134 = arith.constant dense<0.000000e+00> : vector<8x64xf32>
    %109 = tpu.matmul %106, %108, %cst_134 {dimension_numbers = #tpu.dot_dimension_numbers<[1], [0], [0], [1], [0, 0, 1, 1], [], []>} : vector<8x72xbf16>, vector<72x64xbf16>, vector<8x64xf32> -> vector<8x64xf32>
    %110 = arith.addf %104, %109 : vector<8x64xf32>
    %c1_135 = arith.constant 1 : index
    %c0_136 = arith.constant 0 : index
    %c0_137 = arith.constant 0 : index
    %111 = vector.load %arg4[%c1_135, %c0_136, %c0_137] : memref<2x1x64xf32, #tpu.memory_space<vmem>>, vector<1x1x64xf32>
    %112 = vector.shape_cast %111 : vector<1x1x64xf32> to vector<1x64xf32>
    %113 = vector.broadcast %112 : vector<1x64xf32> to vector<8x64xf32>
    %114 = arith.addf %110, %113 : vector<8x64xf32>
    %cst_138 = arith.constant 0.000000e+00 : f32
    %115 = vector.broadcast %cst_138 : f32 to vector<8x64xf32>
    %116 = arith.maximumf %114, %115 : vector<8x64xf32>
    %117 = arith.truncf %116 : vector<8x64xf32> to vector<8x64xbf16>
    %c1_139 = arith.constant 1 : index
    %c1_140 = arith.constant 1 : index
    %c0_141 = arith.constant 0 : index
    %c0_142 = arith.constant 0 : index
    %118 = vector.load %arg5[%c1_139, %c1_140, %c0_141, %c0_142] : memref<2x8x64x32xbf16, #tpu.memory_space<vmem>>, vector<1x1x64x32xbf16>
    %119 = vector.shape_cast %118 : vector<1x1x64x32xbf16> to vector<64x32xbf16>
    %cst_143 = arith.constant dense<0.000000e+00> : vector<8x32xf32>
    %120 = tpu.matmul %117, %119, %cst_143 {dimension_numbers = #tpu.dot_dimension_numbers<[1], [0], [0], [1], [0, 0, 1, 1], [], []>} : vector<8x64xbf16>, vector<64x32xbf16>, vector<8x32xf32> -> vector<8x32xf32>
    %121 = arith.addf %61, %120 : vector<8x32xf32>
    %cst_144 = arith.constant 0.000000e+00 : f32
    %122 = vector.broadcast %cst_144 : f32 to vector<8x64xf32>
    %c0_145 = arith.constant 0 : index
    %c4_146 = arith.constant 4 : index
    %c0_147 = arith.constant 0 : index
    %c0_148 = arith.constant 0 : index
    %123 = vector.load %arg1[%c0_145, %c4_146, %c0_147, %c0_148] : memref<2x18x8x72xbf16, #tpu.memory_space<vmem>>, vector<1x1x8x72xbf16>
    %124 = vector.shape_cast %123 : vector<1x1x8x72xbf16> to vector<8x72xbf16>
    %c0_149 = arith.constant 0 : index
    %c0_150 = arith.constant 0 : index
    %c0_151 = arith.constant 0 : index
    %c0_152 = arith.constant 0 : index
    %125 = vector.load %arg3[%c0_149, %c0_150, %c0_151, %c0_152] : memref<2x3x72x64xbf16, #tpu.memory_space<vmem>>, vector<1x1x72x64xbf16>
    %126 = vector.shape_cast %125 : vector<1x1x72x64xbf16> to vector<72x64xbf16>
    %cst_153 = arith.constant dense<0.000000e+00> : vector<8x64xf32>
    %127 = tpu.matmul %124, %126, %cst_153 {dimension_numbers = #tpu.dot_dimension_numbers<[1], [0], [0], [1], [0, 0, 1, 1], [], []>} : vector<8x72xbf16>, vector<72x64xbf16>, vector<8x64xf32> -> vector<8x64xf32>
    %128 = arith.addf %122, %127 : vector<8x64xf32>
    %c0_154 = arith.constant 0 : index
    %c5 = arith.constant 5 : index
    %c0_155 = arith.constant 0 : index
    %c0_156 = arith.constant 0 : index
    %129 = vector.load %arg1[%c0_154, %c5, %c0_155, %c0_156] : memref<2x18x8x72xbf16, #tpu.memory_space<vmem>>, vector<1x1x8x72xbf16>
    %130 = vector.shape_cast %129 : vector<1x1x8x72xbf16> to vector<8x72xbf16>
    %c0_157 = arith.constant 0 : index
    %c1_158 = arith.constant 1 : index
    %c0_159 = arith.constant 0 : index
    %c0_160 = arith.constant 0 : index
    %131 = vector.load %arg3[%c0_157, %c1_158, %c0_159, %c0_160] : memref<2x3x72x64xbf16, #tpu.memory_space<vmem>>, vector<1x1x72x64xbf16>
    %132 = vector.shape_cast %131 : vector<1x1x72x64xbf16> to vector<72x64xbf16>
    %cst_161 = arith.constant dense<0.000000e+00> : vector<8x64xf32>
    %133 = tpu.matmul %130, %132, %cst_161 {dimension_numbers = #tpu.dot_dimension_numbers<[1], [0], [0], [1], [0, 0, 1, 1], [], []>} : vector<8x72xbf16>, vector<72x64xbf16>, vector<8x64xf32> -> vector<8x64xf32>
    %134 = arith.addf %128, %133 : vector<8x64xf32>
    %c0_162 = arith.constant 0 : index
    %c6 = arith.constant 6 : index
    %c0_163 = arith.constant 0 : index
    %c0_164 = arith.constant 0 : index
    %135 = vector.load %arg1[%c0_162, %c6, %c0_163, %c0_164] : memref<2x18x8x72xbf16, #tpu.memory_space<vmem>>, vector<1x1x8x72xbf16>
    %136 = vector.shape_cast %135 : vector<1x1x8x72xbf16> to vector<8x72xbf16>
    %c0_165 = arith.constant 0 : index
    %c2_166 = arith.constant 2 : index
    %c0_167 = arith.constant 0 : index
    %c0_168 = arith.constant 0 : index
    %137 = vector.load %arg3[%c0_165, %c2_166, %c0_167, %c0_168] : memref<2x3x72x64xbf16, #tpu.memory_space<vmem>>, vector<1x1x72x64xbf16>
    %138 = vector.shape_cast %137 : vector<1x1x72x64xbf16> to vector<72x64xbf16>
    %cst_169 = arith.constant dense<0.000000e+00> : vector<8x64xf32>
    %139 = tpu.matmul %136, %138, %cst_169 {dimension_numbers = #tpu.dot_dimension_numbers<[1], [0], [0], [1], [0, 0, 1, 1], [], []>} : vector<8x72xbf16>, vector<72x64xbf16>, vector<8x64xf32> -> vector<8x64xf32>
    %140 = arith.addf %134, %139 : vector<8x64xf32>
    %c0_170 = arith.constant 0 : index
    %c0_171 = arith.constant 0 : index
    %c0_172 = arith.constant 0 : index
    %141 = vector.load %arg4[%c0_170, %c0_171, %c0_172] : memref<2x1x64xf32, #tpu.memory_space<vmem>>, vector<1x1x64xf32>
    %142 = vector.shape_cast %141 : vector<1x1x64xf32> to vector<1x64xf32>
    %143 = vector.broadcast %142 : vector<1x64xf32> to vector<8x64xf32>
    %144 = arith.addf %140, %143 : vector<8x64xf32>
    %cst_173 = arith.constant 0.000000e+00 : f32
    %145 = vector.broadcast %cst_173 : f32 to vector<8x64xf32>
    %146 = arith.maximumf %144, %145 : vector<8x64xf32>
    %147 = arith.truncf %146 : vector<8x64xf32> to vector<8x64xbf16>
    %c0_174 = arith.constant 0 : index
    %c2_175 = arith.constant 2 : index
    %c0_176 = arith.constant 0 : index
    %c0_177 = arith.constant 0 : index
    %148 = vector.load %arg5[%c0_174, %c2_175, %c0_176, %c0_177] : memref<2x8x64x32xbf16, #tpu.memory_space<vmem>>, vector<1x1x64x32xbf16>
    %149 = vector.shape_cast %148 : vector<1x1x64x32xbf16> to vector<64x32xbf16>
    %cst_178 = arith.constant dense<0.000000e+00> : vector<8x32xf32>
    %150 = tpu.matmul %147, %149, %cst_178 {dimension_numbers = #tpu.dot_dimension_numbers<[1], [0], [0], [1], [0, 0, 1, 1], [], []>} : vector<8x64xbf16>, vector<64x32xbf16>, vector<8x32xf32> -> vector<8x32xf32>
    %151 = arith.addf %91, %150 : vector<8x32xf32>
    %cst_179 = arith.constant 0.000000e+00 : f32
    %152 = vector.broadcast %cst_179 : f32 to vector<8x64xf32>
    %c1_180 = arith.constant 1 : index
    %c4_181 = arith.constant 4 : index
    %c0_182 = arith.constant 0 : index
    %c0_183 = arith.constant 0 : index
    %153 = vector.load %arg1[%c1_180, %c4_181, %c0_182, %c0_183] : memref<2x18x8x72xbf16, #tpu.memory_space<vmem>>, vector<1x1x8x72xbf16>
    %154 = vector.shape_cast %153 : vector<1x1x8x72xbf16> to vector<8x72xbf16>
    %c1_184 = arith.constant 1 : index
    %c0_185 = arith.constant 0 : index
    %c0_186 = arith.constant 0 : index
    %c0_187 = arith.constant 0 : index
    %155 = vector.load %arg3[%c1_184, %c0_185, %c0_186, %c0_187] : memref<2x3x72x64xbf16, #tpu.memory_space<vmem>>, vector<1x1x72x64xbf16>
    %156 = vector.shape_cast %155 : vector<1x1x72x64xbf16> to vector<72x64xbf16>
    %cst_188 = arith.constant dense<0.000000e+00> : vector<8x64xf32>
    %157 = tpu.matmul %154, %156, %cst_188 {dimension_numbers = #tpu.dot_dimension_numbers<[1], [0], [0], [1], [0, 0, 1, 1], [], []>} : vector<8x72xbf16>, vector<72x64xbf16>, vector<8x64xf32> -> vector<8x64xf32>
    %158 = arith.addf %152, %157 : vector<8x64xf32>
    %c1_189 = arith.constant 1 : index
    %c5_190 = arith.constant 5 : index
    %c0_191 = arith.constant 0 : index
    %c0_192 = arith.constant 0 : index
    %159 = vector.load %arg1[%c1_189, %c5_190, %c0_191, %c0_192] : memref<2x18x8x72xbf16, #tpu.memory_space<vmem>>, vector<1x1x8x72xbf16>
    %160 = vector.shape_cast %159 : vector<1x1x8x72xbf16> to vector<8x72xbf16>
    %c1_193 = arith.constant 1 : index
    %c1_194 = arith.constant 1 : index
    %c0_195 = arith.constant 0 : index
    %c0_196 = arith.constant 0 : index
    %161 = vector.load %arg3[%c1_193, %c1_194, %c0_195, %c0_196] : memref<2x3x72x64xbf16, #tpu.memory_space<vmem>>, vector<1x1x72x64xbf16>
    %162 = vector.shape_cast %161 : vector<1x1x72x64xbf16> to vector<72x64xbf16>
    %cst_197 = arith.constant dense<0.000000e+00> : vector<8x64xf32>
    %163 = tpu.matmul %160, %162, %cst_197 {dimension_numbers = #tpu.dot_dimension_numbers<[1], [0], [0], [1], [0, 0, 1, 1], [], []>} : vector<8x72xbf16>, vector<72x64xbf16>, vector<8x64xf32> -> vector<8x64xf32>
    %164 = arith.addf %158, %163 : vector<8x64xf32>
    %c1_198 = arith.constant 1 : index
    %c6_199 = arith.constant 6 : index
    %c0_200 = arith.constant 0 : index
    %c0_201 = arith.constant 0 : index
    %165 = vector.load %arg1[%c1_198, %c6_199, %c0_200, %c0_201] : memref<2x18x8x72xbf16, #tpu.memory_space<vmem>>, vector<1x1x8x72xbf16>
    %166 = vector.shape_cast %165 : vector<1x1x8x72xbf16> to vector<8x72xbf16>
    %c1_202 = arith.constant 1 : index
    %c2_203 = arith.constant 2 : index
    %c0_204 = arith.constant 0 : index
    %c0_205 = arith.constant 0 : index
    %167 = vector.load %arg3[%c1_202, %c2_203, %c0_204, %c0_205] : memref<2x3x72x64xbf16, #tpu.memory_space<vmem>>, vector<1x1x72x64xbf16>
    %168 = vector.shape_cast %167 : vector<1x1x72x64xbf16> to vector<72x64xbf16>
    %cst_206 = arith.constant dense<0.000000e+00> : vector<8x64xf32>
    %169 = tpu.matmul %166, %168, %cst_206 {dimension_numbers = #tpu.dot_dimension_numbers<[1], [0], [0], [1], [0, 0, 1, 1], [], []>} : vector<8x72xbf16>, vector<72x64xbf16>, vector<8x64xf32> -> vector<8x64xf32>
    %170 = arith.addf %164, %169 : vector<8x64xf32>
    %c1_207 = arith.constant 1 : index
    %c0_208 = arith.constant 0 : index
    %c0_209 = arith.constant 0 : index
    %171 = vector.load %arg4[%c1_207, %c0_208, %c0_209] : memref<2x1x64xf32, #tpu.memory_space<vmem>>, vector<1x1x64xf32>
    %172 = vector.shape_cast %171 : vector<1x1x64xf32> to vector<1x64xf32>
    %173 = vector.broadcast %172 : vector<1x64xf32> to vector<8x64xf32>
    %174 = arith.addf %170, %173 : vector<8x64xf32>
    %cst_210 = arith.constant 0.000000e+00 : f32
    %175 = vector.broadcast %cst_210 : f32 to vector<8x64xf32>
    %176 = arith.maximumf %174, %175 : vector<8x64xf32>
    %177 = arith.truncf %176 : vector<8x64xf32> to vector<8x64xbf16>
    %c1_211 = arith.constant 1 : index
    %c2_212 = arith.constant 2 : index
    %c0_213 = arith.constant 0 : index
    %c0_214 = arith.constant 0 : index
    %178 = vector.load %arg5[%c1_211, %c2_212, %c0_213, %c0_214] : memref<2x8x64x32xbf16, #tpu.memory_space<vmem>>, vector<1x1x64x32xbf16>
    %179 = vector.shape_cast %178 : vector<1x1x64x32xbf16> to vector<64x32xbf16>
    %cst_215 = arith.constant dense<0.000000e+00> : vector<8x32xf32>
    %180 = tpu.matmul %177, %179, %cst_215 {dimension_numbers = #tpu.dot_dimension_numbers<[1], [0], [0], [1], [0, 0, 1, 1], [], []>} : vector<8x64xbf16>, vector<64x32xbf16>, vector<8x32xf32> -> vector<8x32xf32>
    %181 = arith.addf %121, %180 : vector<8x32xf32>
    %cst_216 = arith.constant 0.000000e+00 : f32
    %182 = vector.broadcast %cst_216 : f32 to vector<8x64xf32>
    %c0_217 = arith.constant 0 : index
    %c6_218 = arith.constant 6 : index
    %c0_219 = arith.constant 0 : index
    %c0_220 = arith.constant 0 : index
    %183 = vector.load %arg1[%c0_217, %c6_218, %c0_219, %c0_220] : memref<2x18x8x72xbf16, #tpu.memory_space<vmem>>, vector<1x1x8x72xbf16>
    %184 = vector.shape_cast %183 : vector<1x1x8x72xbf16> to vector<8x72xbf16>
    %c0_221 = arith.constant 0 : index
    %c0_222 = arith.constant 0 : index
    %c0_223 = arith.constant 0 : index
    %c0_224 = arith.constant 0 : index
    %185 = vector.load %arg3[%c0_221, %c0_222, %c0_223, %c0_224] : memref<2x3x72x64xbf16, #tpu.memory_space<vmem>>, vector<1x1x72x64xbf16>
    %186 = vector.shape_cast %185 : vector<1x1x72x64xbf16> to vector<72x64xbf16>
    %cst_225 = arith.constant dense<0.000000e+00> : vector<8x64xf32>
    %187 = tpu.matmul %184, %186, %cst_225 {dimension_numbers = #tpu.dot_dimension_numbers<[1], [0], [0], [1], [0, 0, 1, 1], [], []>} : vector<8x72xbf16>, vector<72x64xbf16>, vector<8x64xf32> -> vector<8x64xf32>
    %188 = arith.addf %182, %187 : vector<8x64xf32>
    %c0_226 = arith.constant 0 : index
    %c7 = arith.constant 7 : index
    %c0_227 = arith.constant 0 : index
    %c0_228 = arith.constant 0 : index
    %189 = vector.load %arg1[%c0_226, %c7, %c0_227, %c0_228] : memref<2x18x8x72xbf16, #tpu.memory_space<vmem>>, vector<1x1x8x72xbf16>
    %190 = vector.shape_cast %189 : vector<1x1x8x72xbf16> to vector<8x72xbf16>
    %c0_229 = arith.constant 0 : index
    %c1_230 = arith.constant 1 : index
    %c0_231 = arith.constant 0 : index
    %c0_232 = arith.constant 0 : index
    %191 = vector.load %arg3[%c0_229, %c1_230, %c0_231, %c0_232] : memref<2x3x72x64xbf16, #tpu.memory_space<vmem>>, vector<1x1x72x64xbf16>
    %192 = vector.shape_cast %191 : vector<1x1x72x64xbf16> to vector<72x64xbf16>
    %cst_233 = arith.constant dense<0.000000e+00> : vector<8x64xf32>
    %193 = tpu.matmul %190, %192, %cst_233 {dimension_numbers = #tpu.dot_dimension_numbers<[1], [0], [0], [1], [0, 0, 1, 1], [], []>} : vector<8x72xbf16>, vector<72x64xbf16>, vector<8x64xf32> -> vector<8x64xf32>
    %194 = arith.addf %188, %193 : vector<8x64xf32>
    %c0_234 = arith.constant 0 : index
    %c8 = arith.constant 8 : index
    %c0_235 = arith.constant 0 : index
    %c0_236 = arith.constant 0 : index
    %195 = vector.load %arg1[%c0_234, %c8, %c0_235, %c0_236] : memref<2x18x8x72xbf16, #tpu.memory_space<vmem>>, vector<1x1x8x72xbf16>
    %196 = vector.shape_cast %195 : vector<1x1x8x72xbf16> to vector<8x72xbf16>
    %c0_237 = arith.constant 0 : index
    %c2_238 = arith.constant 2 : index
    %c0_239 = arith.constant 0 : index
    %c0_240 = arith.constant 0 : index
    %197 = vector.load %arg3[%c0_237, %c2_238, %c0_239, %c0_240] : memref<2x3x72x64xbf16, #tpu.memory_space<vmem>>, vector<1x1x72x64xbf16>
    %198 = vector.shape_cast %197 : vector<1x1x72x64xbf16> to vector<72x64xbf16>
    %cst_241 = arith.constant dense<0.000000e+00> : vector<8x64xf32>
    %199 = tpu.matmul %196, %198, %cst_241 {dimension_numbers = #tpu.dot_dimension_numbers<[1], [0], [0], [1], [0, 0, 1, 1], [], []>} : vector<8x72xbf16>, vector<72x64xbf16>, vector<8x64xf32> -> vector<8x64xf32>
    %200 = arith.addf %194, %199 : vector<8x64xf32>
    %c0_242 = arith.constant 0 : index
    %c0_243 = arith.constant 0 : index
    %c0_244 = arith.constant 0 : index
    %201 = vector.load %arg4[%c0_242, %c0_243, %c0_244] : memref<2x1x64xf32, #tpu.memory_space<vmem>>, vector<1x1x64xf32>
    %202 = vector.shape_cast %201 : vector<1x1x64xf32> to vector<1x64xf32>
    %203 = vector.broadcast %202 : vector<1x64xf32> to vector<8x64xf32>
    %204 = arith.addf %200, %203 : vector<8x64xf32>
    %cst_245 = arith.constant 0.000000e+00 : f32
    %205 = vector.broadcast %cst_245 : f32 to vector<8x64xf32>
    %206 = arith.maximumf %204, %205 : vector<8x64xf32>
    %207 = arith.truncf %206 : vector<8x64xf32> to vector<8x64xbf16>
    %c0_246 = arith.constant 0 : index
    %c3_247 = arith.constant 3 : index
    %c0_248 = arith.constant 0 : index
    %c0_249 = arith.constant 0 : index
    %208 = vector.load %arg5[%c0_246, %c3_247, %c0_248, %c0_249] : memref<2x8x64x32xbf16, #tpu.memory_space<vmem>>, vector<1x1x64x32xbf16>
    %209 = vector.shape_cast %208 : vector<1x1x64x32xbf16> to vector<64x32xbf16>
    %cst_250 = arith.constant dense<0.000000e+00> : vector<8x32xf32>
    %210 = tpu.matmul %207, %209, %cst_250 {dimension_numbers = #tpu.dot_dimension_numbers<[1], [0], [0], [1], [0, 0, 1, 1], [], []>} : vector<8x64xbf16>, vector<64x32xbf16>, vector<8x32xf32> -> vector<8x32xf32>
    %211 = arith.addf %151, %210 : vector<8x32xf32>
    %cst_251 = arith.constant 0.000000e+00 : f32
    %212 = vector.broadcast %cst_251 : f32 to vector<8x64xf32>
    %c1_252 = arith.constant 1 : index
    %c6_253 = arith.constant 6 : index
    %c0_254 = arith.constant 0 : index
    %c0_255 = arith.constant 0 : index
    %213 = vector.load %arg1[%c1_252, %c6_253, %c0_254, %c0_255] : memref<2x18x8x72xbf16, #tpu.memory_space<vmem>>, vector<1x1x8x72xbf16>
    %214 = vector.shape_cast %213 : vector<1x1x8x72xbf16> to vector<8x72xbf16>
    %c1_256 = arith.constant 1 : index
    %c0_257 = arith.constant 0 : index
    %c0_258 = arith.constant 0 : index
    %c0_259 = arith.constant 0 : index
    %215 = vector.load %arg3[%c1_256, %c0_257, %c0_258, %c0_259] : memref<2x3x72x64xbf16, #tpu.memory_space<vmem>>, vector<1x1x72x64xbf16>
    %216 = vector.shape_cast %215 : vector<1x1x72x64xbf16> to vector<72x64xbf16>
    %cst_260 = arith.constant dense<0.000000e+00> : vector<8x64xf32>
    %217 = tpu.matmul %214, %216, %cst_260 {dimension_numbers = #tpu.dot_dimension_numbers<[1], [0], [0], [1], [0, 0, 1, 1], [], []>} : vector<8x72xbf16>, vector<72x64xbf16>, vector<8x64xf32> -> vector<8x64xf32>
    %218 = arith.addf %212, %217 : vector<8x64xf32>
    %c1_261 = arith.constant 1 : index
    %c7_262 = arith.constant 7 : index
    %c0_263 = arith.constant 0 : index
    %c0_264 = arith.constant 0 : index
    %219 = vector.load %arg1[%c1_261, %c7_262, %c0_263, %c0_264] : memref<2x18x8x72xbf16, #tpu.memory_space<vmem>>, vector<1x1x8x72xbf16>
    %220 = vector.shape_cast %219 : vector<1x1x8x72xbf16> to vector<8x72xbf16>
    %c1_265 = arith.constant 1 : index
    %c1_266 = arith.constant 1 : index
    %c0_267 = arith.constant 0 : index
    %c0_268 = arith.constant 0 : index
    %221 = vector.load %arg3[%c1_265, %c1_266, %c0_267, %c0_268] : memref<2x3x72x64xbf16, #tpu.memory_space<vmem>>, vector<1x1x72x64xbf16>
    %222 = vector.shape_cast %221 : vector<1x1x72x64xbf16> to vector<72x64xbf16>
    %cst_269 = arith.constant dense<0.000000e+00> : vector<8x64xf32>
    %223 = tpu.matmul %220, %222, %cst_269 {dimension_numbers = #tpu.dot_dimension_numbers<[1], [0], [0], [1], [0, 0, 1, 1], [], []>} : vector<8x72xbf16>, vector<72x64xbf16>, vector<8x64xf32> -> vector<8x64xf32>
    %224 = arith.addf %218, %223 : vector<8x64xf32>
    %c1_270 = arith.constant 1 : index
    %c8_271 = arith.constant 8 : index
    %c0_272 = arith.constant 0 : index
    %c0_273 = arith.constant 0 : index
    %225 = vector.load %arg1[%c1_270, %c8_271, %c0_272, %c0_273] : memref<2x18x8x72xbf16, #tpu.memory_space<vmem>>, vector<1x1x8x72xbf16>
    %226 = vector.shape_cast %225 : vector<1x1x8x72xbf16> to vector<8x72xbf16>
    %c1_274 = arith.constant 1 : index
    %c2_275 = arith.constant 2 : index
    %c0_276 = arith.constant 0 : index
    %c0_277 = arith.constant 0 : index
    %227 = vector.load %arg3[%c1_274, %c2_275, %c0_276, %c0_277] : memref<2x3x72x64xbf16, #tpu.memory_space<vmem>>, vector<1x1x72x64xbf16>
    %228 = vector.shape_cast %227 : vector<1x1x72x64xbf16> to vector<72x64xbf16>
    %cst_278 = arith.constant dense<0.000000e+00> : vector<8x64xf32>
    %229 = tpu.matmul %226, %228, %cst_278 {dimension_numbers = #tpu.dot_dimension_numbers<[1], [0], [0], [1], [0, 0, 1, 1], [], []>} : vector<8x72xbf16>, vector<72x64xbf16>, vector<8x64xf32> -> vector<8x64xf32>
    %230 = arith.addf %224, %229 : vector<8x64xf32>
    %c1_279 = arith.constant 1 : index
    %c0_280 = arith.constant 0 : index
    %c0_281 = arith.constant 0 : index
    %231 = vector.load %arg4[%c1_279, %c0_280, %c0_281] : memref<2x1x64xf32, #tpu.memory_space<vmem>>, vector<1x1x64xf32>
    %232 = vector.shape_cast %231 : vector<1x1x64xf32> to vector<1x64xf32>
    %233 = vector.broadcast %232 : vector<1x64xf32> to vector<8x64xf32>
    %234 = arith.addf %230, %233 : vector<8x64xf32>
    %cst_282 = arith.constant 0.000000e+00 : f32
    %235 = vector.broadcast %cst_282 : f32 to vector<8x64xf32>
    %236 = arith.maximumf %234, %235 : vector<8x64xf32>
    %237 = arith.truncf %236 : vector<8x64xf32> to vector<8x64xbf16>
    %c1_283 = arith.constant 1 : index
    %c3_284 = arith.constant 3 : index
    %c0_285 = arith.constant 0 : index
    %c0_286 = arith.constant 0 : index
    %238 = vector.load %arg5[%c1_283, %c3_284, %c0_285, %c0_286] : memref<2x8x64x32xbf16, #tpu.memory_space<vmem>>, vector<1x1x64x32xbf16>
    %239 = vector.shape_cast %238 : vector<1x1x64x32xbf16> to vector<64x32xbf16>
    %cst_287 = arith.constant dense<0.000000e+00> : vector<8x32xf32>
    %240 = tpu.matmul %237, %239, %cst_287 {dimension_numbers = #tpu.dot_dimension_numbers<[1], [0], [0], [1], [0, 0, 1, 1], [], []>} : vector<8x64xbf16>, vector<64x32xbf16>, vector<8x32xf32> -> vector<8x32xf32>
    %241 = arith.addf %181, %240 : vector<8x32xf32>
    %cst_288 = arith.constant 0.000000e+00 : f32
    %242 = vector.broadcast %cst_288 : f32 to vector<8x64xf32>
    %c0_289 = arith.constant 0 : index
    %c8_290 = arith.constant 8 : index
    %c0_291 = arith.constant 0 : index
    %c0_292 = arith.constant 0 : index
    %243 = vector.load %arg1[%c0_289, %c8_290, %c0_291, %c0_292] : memref<2x18x8x72xbf16, #tpu.memory_space<vmem>>, vector<1x1x8x72xbf16>
    %244 = vector.shape_cast %243 : vector<1x1x8x72xbf16> to vector<8x72xbf16>
    %c0_293 = arith.constant 0 : index
    %c0_294 = arith.constant 0 : index
    %c0_295 = arith.constant 0 : index
    %c0_296 = arith.constant 0 : index
    %245 = vector.load %arg3[%c0_293, %c0_294, %c0_295, %c0_296] : memref<2x3x72x64xbf16, #tpu.memory_space<vmem>>, vector<1x1x72x64xbf16>
    %246 = vector.shape_cast %245 : vector<1x1x72x64xbf16> to vector<72x64xbf16>
    %cst_297 = arith.constant dense<0.000000e+00> : vector<8x64xf32>
    %247 = tpu.matmul %244, %246, %cst_297 {dimension_numbers = #tpu.dot_dimension_numbers<[1], [0], [0], [1], [0, 0, 1, 1], [], []>} : vector<8x72xbf16>, vector<72x64xbf16>, vector<8x64xf32> -> vector<8x64xf32>
    %248 = arith.addf %242, %247 : vector<8x64xf32>
    %c0_298 = arith.constant 0 : index
    %c9 = arith.constant 9 : index
    %c0_299 = arith.constant 0 : index
    %c0_300 = arith.constant 0 : index
    %249 = vector.load %arg1[%c0_298, %c9, %c0_299, %c0_300] : memref<2x18x8x72xbf16, #tpu.memory_space<vmem>>, vector<1x1x8x72xbf16>
    %250 = vector.shape_cast %249 : vector<1x1x8x72xbf16> to vector<8x72xbf16>
    %c0_301 = arith.constant 0 : index
    %c1_302 = arith.constant 1 : index
    %c0_303 = arith.constant 0 : index
    %c0_304 = arith.constant 0 : index
    %251 = vector.load %arg3[%c0_301, %c1_302, %c0_303, %c0_304] : memref<2x3x72x64xbf16, #tpu.memory_space<vmem>>, vector<1x1x72x64xbf16>
    %252 = vector.shape_cast %251 : vector<1x1x72x64xbf16> to vector<72x64xbf16>
    %cst_305 = arith.constant dense<0.000000e+00> : vector<8x64xf32>
    %253 = tpu.matmul %250, %252, %cst_305 {dimension_numbers = #tpu.dot_dimension_numbers<[1], [0], [0], [1], [0, 0, 1, 1], [], []>} : vector<8x72xbf16>, vector<72x64xbf16>, vector<8x64xf32> -> vector<8x64xf32>
    %254 = arith.addf %248, %253 : vector<8x64xf32>
    %c0_306 = arith.constant 0 : index
    %c10 = arith.constant 10 : index
    %c0_307 = arith.constant 0 : index
    %c0_308 = arith.constant 0 : index
    %255 = vector.load %arg1[%c0_306, %c10, %c0_307, %c0_308] : memref<2x18x8x72xbf16, #tpu.memory_space<vmem>>, vector<1x1x8x72xbf16>
    %256 = vector.shape_cast %255 : vector<1x1x8x72xbf16> to vector<8x72xbf16>
    %c0_309 = arith.constant 0 : index
    %c2_310 = arith.constant 2 : index
    %c0_311 = arith.constant 0 : index
    %c0_312 = arith.constant 0 : index
    %257 = vector.load %arg3[%c0_309, %c2_310, %c0_311, %c0_312] : memref<2x3x72x64xbf16, #tpu.memory_space<vmem>>, vector<1x1x72x64xbf16>
    %258 = vector.shape_cast %257 : vector<1x1x72x64xbf16> to vector<72x64xbf16>
    %cst_313 = arith.constant dense<0.000000e+00> : vector<8x64xf32>
    %259 = tpu.matmul %256, %258, %cst_313 {dimension_numbers = #tpu.dot_dimension_numbers<[1], [0], [0], [1], [0, 0, 1, 1], [], []>} : vector<8x72xbf16>, vector<72x64xbf16>, vector<8x64xf32> -> vector<8x64xf32>
    %260 = arith.addf %254, %259 : vector<8x64xf32>
    %c0_314 = arith.constant 0 : index
    %c0_315 = arith.constant 0 : index
    %c0_316 = arith.constant 0 : index
    %261 = vector.load %arg4[%c0_314, %c0_315, %c0_316] : memref<2x1x64xf32, #tpu.memory_space<vmem>>, vector<1x1x64xf32>
    %262 = vector.shape_cast %261 : vector<1x1x64xf32> to vector<1x64xf32>
    %263 = vector.broadcast %262 : vector<1x64xf32> to vector<8x64xf32>
    %264 = arith.addf %260, %263 : vector<8x64xf32>
    %cst_317 = arith.constant 0.000000e+00 : f32
    %265 = vector.broadcast %cst_317 : f32 to vector<8x64xf32>
    %266 = arith.maximumf %264, %265 : vector<8x64xf32>
    %267 = arith.truncf %266 : vector<8x64xf32> to vector<8x64xbf16>
    %c0_318 = arith.constant 0 : index
    %c4_319 = arith.constant 4 : index
    %c0_320 = arith.constant 0 : index
    %c0_321 = arith.constant 0 : index
    %268 = vector.load %arg5[%c0_318, %c4_319, %c0_320, %c0_321] : memref<2x8x64x32xbf16, #tpu.memory_space<vmem>>, vector<1x1x64x32xbf16>
    %269 = vector.shape_cast %268 : vector<1x1x64x32xbf16> to vector<64x32xbf16>
    %cst_322 = arith.constant dense<0.000000e+00> : vector<8x32xf32>
    %270 = tpu.matmul %267, %269, %cst_322 {dimension_numbers = #tpu.dot_dimension_numbers<[1], [0], [0], [1], [0, 0, 1, 1], [], []>} : vector<8x64xbf16>, vector<64x32xbf16>, vector<8x32xf32> -> vector<8x32xf32>
    %271 = arith.addf %211, %270 : vector<8x32xf32>
    %cst_323 = arith.constant 0.000000e+00 : f32
    %272 = vector.broadcast %cst_323 : f32 to vector<8x64xf32>
    %c1_324 = arith.constant 1 : index
    %c8_325 = arith.constant 8 : index
    %c0_326 = arith.constant 0 : index
    %c0_327 = arith.constant 0 : index
    %273 = vector.load %arg1[%c1_324, %c8_325, %c0_326, %c0_327] : memref<2x18x8x72xbf16, #tpu.memory_space<vmem>>, vector<1x1x8x72xbf16>
    %274 = vector.shape_cast %273 : vector<1x1x8x72xbf16> to vector<8x72xbf16>
    %c1_328 = arith.constant 1 : index
    %c0_329 = arith.constant 0 : index
    %c0_330 = arith.constant 0 : index
    %c0_331 = arith.constant 0 : index
    %275 = vector.load %arg3[%c1_328, %c0_329, %c0_330, %c0_331] : memref<2x3x72x64xbf16, #tpu.memory_space<vmem>>, vector<1x1x72x64xbf16>
    %276 = vector.shape_cast %275 : vector<1x1x72x64xbf16> to vector<72x64xbf16>
    %cst_332 = arith.constant dense<0.000000e+00> : vector<8x64xf32>
    %277 = tpu.matmul %274, %276, %cst_332 {dimension_numbers = #tpu.dot_dimension_numbers<[1], [0], [0], [1], [0, 0, 1, 1], [], []>} : vector<8x72xbf16>, vector<72x64xbf16>, vector<8x64xf32> -> vector<8x64xf32>
    %278 = arith.addf %272, %277 : vector<8x64xf32>
    %c1_333 = arith.constant 1 : index
    %c9_334 = arith.constant 9 : index
    %c0_335 = arith.constant 0 : index
    %c0_336 = arith.constant 0 : index
    %279 = vector.load %arg1[%c1_333, %c9_334, %c0_335, %c0_336] : memref<2x18x8x72xbf16, #tpu.memory_space<vmem>>, vector<1x1x8x72xbf16>
    %280 = vector.shape_cast %279 : vector<1x1x8x72xbf16> to vector<8x72xbf16>
    %c1_337 = arith.constant 1 : index
    %c1_338 = arith.constant 1 : index
    %c0_339 = arith.constant 0 : index
    %c0_340 = arith.constant 0 : index
    %281 = vector.load %arg3[%c1_337, %c1_338, %c0_339, %c0_340] : memref<2x3x72x64xbf16, #tpu.memory_space<vmem>>, vector<1x1x72x64xbf16>
    %282 = vector.shape_cast %281 : vector<1x1x72x64xbf16> to vector<72x64xbf16>
    %cst_341 = arith.constant dense<0.000000e+00> : vector<8x64xf32>
    %283 = tpu.matmul %280, %282, %cst_341 {dimension_numbers = #tpu.dot_dimension_numbers<[1], [0], [0], [1], [0, 0, 1, 1], [], []>} : vector<8x72xbf16>, vector<72x64xbf16>, vector<8x64xf32> -> vector<8x64xf32>
    %284 = arith.addf %278, %283 : vector<8x64xf32>
    %c1_342 = arith.constant 1 : index
    %c10_343 = arith.constant 10 : index
    %c0_344 = arith.constant 0 : index
    %c0_345 = arith.constant 0 : index
    %285 = vector.load %arg1[%c1_342, %c10_343, %c0_344, %c0_345] : memref<2x18x8x72xbf16, #tpu.memory_space<vmem>>, vector<1x1x8x72xbf16>
    %286 = vector.shape_cast %285 : vector<1x1x8x72xbf16> to vector<8x72xbf16>
    %c1_346 = arith.constant 1 : index
    %c2_347 = arith.constant 2 : index
    %c0_348 = arith.constant 0 : index
    %c0_349 = arith.constant 0 : index
    %287 = vector.load %arg3[%c1_346, %c2_347, %c0_348, %c0_349] : memref<2x3x72x64xbf16, #tpu.memory_space<vmem>>, vector<1x1x72x64xbf16>
    %288 = vector.shape_cast %287 : vector<1x1x72x64xbf16> to vector<72x64xbf16>
    %cst_350 = arith.constant dense<0.000000e+00> : vector<8x64xf32>
    %289 = tpu.matmul %286, %288, %cst_350 {dimension_numbers = #tpu.dot_dimension_numbers<[1], [0], [0], [1], [0, 0, 1, 1], [], []>} : vector<8x72xbf16>, vector<72x64xbf16>, vector<8x64xf32> -> vector<8x64xf32>
    %290 = arith.addf %284, %289 : vector<8x64xf32>
    %c1_351 = arith.constant 1 : index
    %c0_352 = arith.constant 0 : index
    %c0_353 = arith.constant 0 : index
    %291 = vector.load %arg4[%c1_351, %c0_352, %c0_353] : memref<2x1x64xf32, #tpu.memory_space<vmem>>, vector<1x1x64xf32>
    %292 = vector.shape_cast %291 : vector<1x1x64xf32> to vector<1x64xf32>
    %293 = vector.broadcast %292 : vector<1x64xf32> to vector<8x64xf32>
    %294 = arith.addf %290, %293 : vector<8x64xf32>
    %cst_354 = arith.constant 0.000000e+00 : f32
    %295 = vector.broadcast %cst_354 : f32 to vector<8x64xf32>
    %296 = arith.maximumf %294, %295 : vector<8x64xf32>
    %297 = arith.truncf %296 : vector<8x64xf32> to vector<8x64xbf16>
    %c1_355 = arith.constant 1 : index
    %c4_356 = arith.constant 4 : index
    %c0_357 = arith.constant 0 : index
    %c0_358 = arith.constant 0 : index
    %298 = vector.load %arg5[%c1_355, %c4_356, %c0_357, %c0_358] : memref<2x8x64x32xbf16, #tpu.memory_space<vmem>>, vector<1x1x64x32xbf16>
    %299 = vector.shape_cast %298 : vector<1x1x64x32xbf16> to vector<64x32xbf16>
    %cst_359 = arith.constant dense<0.000000e+00> : vector<8x32xf32>
    %300 = tpu.matmul %297, %299, %cst_359 {dimension_numbers = #tpu.dot_dimension_numbers<[1], [0], [0], [1], [0, 0, 1, 1], [], []>} : vector<8x64xbf16>, vector<64x32xbf16>, vector<8x32xf32> -> vector<8x32xf32>
    %301 = arith.addf %241, %300 : vector<8x32xf32>
    %cst_360 = arith.constant 0.000000e+00 : f32
    %302 = vector.broadcast %cst_360 : f32 to vector<8x64xf32>
    %c0_361 = arith.constant 0 : index
    %c10_362 = arith.constant 10 : index
    %c0_363 = arith.constant 0 : index
    %c0_364 = arith.constant 0 : index
    %303 = vector.load %arg1[%c0_361, %c10_362, %c0_363, %c0_364] : memref<2x18x8x72xbf16, #tpu.memory_space<vmem>>, vector<1x1x8x72xbf16>
    %304 = vector.shape_cast %303 : vector<1x1x8x72xbf16> to vector<8x72xbf16>
    %c0_365 = arith.constant 0 : index
    %c0_366 = arith.constant 0 : index
    %c0_367 = arith.constant 0 : index
    %c0_368 = arith.constant 0 : index
    %305 = vector.load %arg3[%c0_365, %c0_366, %c0_367, %c0_368] : memref<2x3x72x64xbf16, #tpu.memory_space<vmem>>, vector<1x1x72x64xbf16>
    %306 = vector.shape_cast %305 : vector<1x1x72x64xbf16> to vector<72x64xbf16>
    %cst_369 = arith.constant dense<0.000000e+00> : vector<8x64xf32>
    %307 = tpu.matmul %304, %306, %cst_369 {dimension_numbers = #tpu.dot_dimension_numbers<[1], [0], [0], [1], [0, 0, 1, 1], [], []>} : vector<8x72xbf16>, vector<72x64xbf16>, vector<8x64xf32> -> vector<8x64xf32>
    %308 = arith.addf %302, %307 : vector<8x64xf32>
    %c0_370 = arith.constant 0 : index
    %c11 = arith.constant 11 : index
    %c0_371 = arith.constant 0 : index
    %c0_372 = arith.constant 0 : index
    %309 = vector.load %arg1[%c0_370, %c11, %c0_371, %c0_372] : memref<2x18x8x72xbf16, #tpu.memory_space<vmem>>, vector<1x1x8x72xbf16>
    %310 = vector.shape_cast %309 : vector<1x1x8x72xbf16> to vector<8x72xbf16>
    %c0_373 = arith.constant 0 : index
    %c1_374 = arith.constant 1 : index
    %c0_375 = arith.constant 0 : index
    %c0_376 = arith.constant 0 : index
    %311 = vector.load %arg3[%c0_373, %c1_374, %c0_375, %c0_376] : memref<2x3x72x64xbf16, #tpu.memory_space<vmem>>, vector<1x1x72x64xbf16>
    %312 = vector.shape_cast %311 : vector<1x1x72x64xbf16> to vector<72x64xbf16>
    %cst_377 = arith.constant dense<0.000000e+00> : vector<8x64xf32>
    %313 = tpu.matmul %310, %312, %cst_377 {dimension_numbers = #tpu.dot_dimension_numbers<[1], [0], [0], [1], [0, 0, 1, 1], [], []>} : vector<8x72xbf16>, vector<72x64xbf16>, vector<8x64xf32> -> vector<8x64xf32>
    %314 = arith.addf %308, %313 : vector<8x64xf32>
    %c0_378 = arith.constant 0 : index
    %c12 = arith.constant 12 : index
    %c0_379 = arith.constant 0 : index
    %c0_380 = arith.constant 0 : index
    %315 = vector.load %arg1[%c0_378, %c12, %c0_379, %c0_380] : memref<2x18x8x72xbf16, #tpu.memory_space<vmem>>, vector<1x1x8x72xbf16>
    %316 = vector.shape_cast %315 : vector<1x1x8x72xbf16> to vector<8x72xbf16>
    %c0_381 = arith.constant 0 : index
    %c2_382 = arith.constant 2 : index
    %c0_383 = arith.constant 0 : index
    %c0_384 = arith.constant 0 : index
    %317 = vector.load %arg3[%c0_381, %c2_382, %c0_383, %c0_384] : memref<2x3x72x64xbf16, #tpu.memory_space<vmem>>, vector<1x1x72x64xbf16>
    %318 = vector.shape_cast %317 : vector<1x1x72x64xbf16> to vector<72x64xbf16>
    %cst_385 = arith.constant dense<0.000000e+00> : vector<8x64xf32>
    %319 = tpu.matmul %316, %318, %cst_385 {dimension_numbers = #tpu.dot_dimension_numbers<[1], [0], [0], [1], [0, 0, 1, 1], [], []>} : vector<8x72xbf16>, vector<72x64xbf16>, vector<8x64xf32> -> vector<8x64xf32>
    %320 = arith.addf %314, %319 : vector<8x64xf32>
    %c0_386 = arith.constant 0 : index
    %c0_387 = arith.constant 0 : index
    %c0_388 = arith.constant 0 : index
    %321 = vector.load %arg4[%c0_386, %c0_387, %c0_388] : memref<2x1x64xf32, #tpu.memory_space<vmem>>, vector<1x1x64xf32>
    %322 = vector.shape_cast %321 : vector<1x1x64xf32> to vector<1x64xf32>
    %323 = vector.broadcast %322 : vector<1x64xf32> to vector<8x64xf32>
    %324 = arith.addf %320, %323 : vector<8x64xf32>
    %cst_389 = arith.constant 0.000000e+00 : f32
    %325 = vector.broadcast %cst_389 : f32 to vector<8x64xf32>
    %326 = arith.maximumf %324, %325 : vector<8x64xf32>
    %327 = arith.truncf %326 : vector<8x64xf32> to vector<8x64xbf16>
    %c0_390 = arith.constant 0 : index
    %c5_391 = arith.constant 5 : index
    %c0_392 = arith.constant 0 : index
    %c0_393 = arith.constant 0 : index
    %328 = vector.load %arg5[%c0_390, %c5_391, %c0_392, %c0_393] : memref<2x8x64x32xbf16, #tpu.memory_space<vmem>>, vector<1x1x64x32xbf16>
    %329 = vector.shape_cast %328 : vector<1x1x64x32xbf16> to vector<64x32xbf16>
    %cst_394 = arith.constant dense<0.000000e+00> : vector<8x32xf32>
    %330 = tpu.matmul %327, %329, %cst_394 {dimension_numbers = #tpu.dot_dimension_numbers<[1], [0], [0], [1], [0, 0, 1, 1], [], []>} : vector<8x64xbf16>, vector<64x32xbf16>, vector<8x32xf32> -> vector<8x32xf32>
    %331 = arith.addf %271, %330 : vector<8x32xf32>
    %cst_395 = arith.constant 0.000000e+00 : f32
    %332 = vector.broadcast %cst_395 : f32 to vector<8x64xf32>
    %c1_396 = arith.constant 1 : index
    %c10_397 = arith.constant 10 : index
    %c0_398 = arith.constant 0 : index
    %c0_399 = arith.constant 0 : index
    %333 = vector.load %arg1[%c1_396, %c10_397, %c0_398, %c0_399] : memref<2x18x8x72xbf16, #tpu.memory_space<vmem>>, vector<1x1x8x72xbf16>
    %334 = vector.shape_cast %333 : vector<1x1x8x72xbf16> to vector<8x72xbf16>
    %c1_400 = arith.constant 1 : index
    %c0_401 = arith.constant 0 : index
    %c0_402 = arith.constant 0 : index
    %c0_403 = arith.constant 0 : index
    %335 = vector.load %arg3[%c1_400, %c0_401, %c0_402, %c0_403] : memref<2x3x72x64xbf16, #tpu.memory_space<vmem>>, vector<1x1x72x64xbf16>
    %336 = vector.shape_cast %335 : vector<1x1x72x64xbf16> to vector<72x64xbf16>
    %cst_404 = arith.constant dense<0.000000e+00> : vector<8x64xf32>
    %337 = tpu.matmul %334, %336, %cst_404 {dimension_numbers = #tpu.dot_dimension_numbers<[1], [0], [0], [1], [0, 0, 1, 1], [], []>} : vector<8x72xbf16>, vector<72x64xbf16>, vector<8x64xf32> -> vector<8x64xf32>
    %338 = arith.addf %332, %337 : vector<8x64xf32>
    %c1_405 = arith.constant 1 : index
    %c11_406 = arith.constant 11 : index
    %c0_407 = arith.constant 0 : index
    %c0_408 = arith.constant 0 : index
    %339 = vector.load %arg1[%c1_405, %c11_406, %c0_407, %c0_408] : memref<2x18x8x72xbf16, #tpu.memory_space<vmem>>, vector<1x1x8x72xbf16>
    %340 = vector.shape_cast %339 : vector<1x1x8x72xbf16> to vector<8x72xbf16>
    %c1_409 = arith.constant 1 : index
    %c1_410 = arith.constant 1 : index
    %c0_411 = arith.constant 0 : index
    %c0_412 = arith.constant 0 : index
    %341 = vector.load %arg3[%c1_409, %c1_410, %c0_411, %c0_412] : memref<2x3x72x64xbf16, #tpu.memory_space<vmem>>, vector<1x1x72x64xbf16>
    %342 = vector.shape_cast %341 : vector<1x1x72x64xbf16> to vector<72x64xbf16>
    %cst_413 = arith.constant dense<0.000000e+00> : vector<8x64xf32>
    %343 = tpu.matmul %340, %342, %cst_413 {dimension_numbers = #tpu.dot_dimension_numbers<[1], [0], [0], [1], [0, 0, 1, 1], [], []>} : vector<8x72xbf16>, vector<72x64xbf16>, vector<8x64xf32> -> vector<8x64xf32>
    %344 = arith.addf %338, %343 : vector<8x64xf32>
    %c1_414 = arith.constant 1 : index
    %c12_415 = arith.constant 12 : index
    %c0_416 = arith.constant 0 : index
    %c0_417 = arith.constant 0 : index
    %345 = vector.load %arg1[%c1_414, %c12_415, %c0_416, %c0_417] : memref<2x18x8x72xbf16, #tpu.memory_space<vmem>>, vector<1x1x8x72xbf16>
    %346 = vector.shape_cast %345 : vector<1x1x8x72xbf16> to vector<8x72xbf16>
    %c1_418 = arith.constant 1 : index
    %c2_419 = arith.constant 2 : index
    %c0_420 = arith.constant 0 : index
    %c0_421 = arith.constant 0 : index
    %347 = vector.load %arg3[%c1_418, %c2_419, %c0_420, %c0_421] : memref<2x3x72x64xbf16, #tpu.memory_space<vmem>>, vector<1x1x72x64xbf16>
    %348 = vector.shape_cast %347 : vector<1x1x72x64xbf16> to vector<72x64xbf16>
    %cst_422 = arith.constant dense<0.000000e+00> : vector<8x64xf32>
    %349 = tpu.matmul %346, %348, %cst_422 {dimension_numbers = #tpu.dot_dimension_numbers<[1], [0], [0], [1], [0, 0, 1, 1], [], []>} : vector<8x72xbf16>, vector<72x64xbf16>, vector<8x64xf32> -> vector<8x64xf32>
    %350 = arith.addf %344, %349 : vector<8x64xf32>
    %c1_423 = arith.constant 1 : index
    %c0_424 = arith.constant 0 : index
    %c0_425 = arith.constant 0 : index
    %351 = vector.load %arg4[%c1_423, %c0_424, %c0_425] : memref<2x1x64xf32, #tpu.memory_space<vmem>>, vector<1x1x64xf32>
    %352 = vector.shape_cast %351 : vector<1x1x64xf32> to vector<1x64xf32>
    %353 = vector.broadcast %352 : vector<1x64xf32> to vector<8x64xf32>
    %354 = arith.addf %350, %353 : vector<8x64xf32>
    %cst_426 = arith.constant 0.000000e+00 : f32
    %355 = vector.broadcast %cst_426 : f32 to vector<8x64xf32>
    %356 = arith.maximumf %354, %355 : vector<8x64xf32>
    %357 = arith.truncf %356 : vector<8x64xf32> to vector<8x64xbf16>
    %c1_427 = arith.constant 1 : index
    %c5_428 = arith.constant 5 : index
    %c0_429 = arith.constant 0 : index
    %c0_430 = arith.constant 0 : index
    %358 = vector.load %arg5[%c1_427, %c5_428, %c0_429, %c0_430] : memref<2x8x64x32xbf16, #tpu.memory_space<vmem>>, vector<1x1x64x32xbf16>
    %359 = vector.shape_cast %358 : vector<1x1x64x32xbf16> to vector<64x32xbf16>
    %cst_431 = arith.constant dense<0.000000e+00> : vector<8x32xf32>
    %360 = tpu.matmul %357, %359, %cst_431 {dimension_numbers = #tpu.dot_dimension_numbers<[1], [0], [0], [1], [0, 0, 1, 1], [], []>} : vector<8x64xbf16>, vector<64x32xbf16>, vector<8x32xf32> -> vector<8x32xf32>
    %361 = arith.addf %301, %360 : vector<8x32xf32>
    %cst_432 = arith.constant 0.000000e+00 : f32
    %362 = vector.broadcast %cst_432 : f32 to vector<8x64xf32>
    %c0_433 = arith.constant 0 : index
    %c12_434 = arith.constant 12 : index
    %c0_435 = arith.constant 0 : index
    %c0_436 = arith.constant 0 : index
    %363 = vector.load %arg1[%c0_433, %c12_434, %c0_435, %c0_436] : memref<2x18x8x72xbf16, #tpu.memory_space<vmem>>, vector<1x1x8x72xbf16>
    %364 = vector.shape_cast %363 : vector<1x1x8x72xbf16> to vector<8x72xbf16>
    %c0_437 = arith.constant 0 : index
    %c0_438 = arith.constant 0 : index
    %c0_439 = arith.constant 0 : index
    %c0_440 = arith.constant 0 : index
    %365 = vector.load %arg3[%c0_437, %c0_438, %c0_439, %c0_440] : memref<2x3x72x64xbf16, #tpu.memory_space<vmem>>, vector<1x1x72x64xbf16>
    %366 = vector.shape_cast %365 : vector<1x1x72x64xbf16> to vector<72x64xbf16>
    %cst_441 = arith.constant dense<0.000000e+00> : vector<8x64xf32>
    %367 = tpu.matmul %364, %366, %cst_441 {dimension_numbers = #tpu.dot_dimension_numbers<[1], [0], [0], [1], [0, 0, 1, 1], [], []>} : vector<8x72xbf16>, vector<72x64xbf16>, vector<8x64xf32> -> vector<8x64xf32>
    %368 = arith.addf %362, %367 : vector<8x64xf32>
    %c0_442 = arith.constant 0 : index
    %c13 = arith.constant 13 : index
    %c0_443 = arith.constant 0 : index
    %c0_444 = arith.constant 0 : index
    %369 = vector.load %arg1[%c0_442, %c13, %c0_443, %c0_444] : memref<2x18x8x72xbf16, #tpu.memory_space<vmem>>, vector<1x1x8x72xbf16>
    %370 = vector.shape_cast %369 : vector<1x1x8x72xbf16> to vector<8x72xbf16>
    %c0_445 = arith.constant 0 : index
    %c1_446 = arith.constant 1 : index
    %c0_447 = arith.constant 0 : index
    %c0_448 = arith.constant 0 : index
    %371 = vector.load %arg3[%c0_445, %c1_446, %c0_447, %c0_448] : memref<2x3x72x64xbf16, #tpu.memory_space<vmem>>, vector<1x1x72x64xbf16>
    %372 = vector.shape_cast %371 : vector<1x1x72x64xbf16> to vector<72x64xbf16>
    %cst_449 = arith.constant dense<0.000000e+00> : vector<8x64xf32>
    %373 = tpu.matmul %370, %372, %cst_449 {dimension_numbers = #tpu.dot_dimension_numbers<[1], [0], [0], [1], [0, 0, 1, 1], [], []>} : vector<8x72xbf16>, vector<72x64xbf16>, vector<8x64xf32> -> vector<8x64xf32>
    %374 = arith.addf %368, %373 : vector<8x64xf32>
    %c0_450 = arith.constant 0 : index
    %c14 = arith.constant 14 : index
    %c0_451 = arith.constant 0 : index
    %c0_452 = arith.constant 0 : index
    %375 = vector.load %arg1[%c0_450, %c14, %c0_451, %c0_452] : memref<2x18x8x72xbf16, #tpu.memory_space<vmem>>, vector<1x1x8x72xbf16>
    %376 = vector.shape_cast %375 : vector<1x1x8x72xbf16> to vector<8x72xbf16>
    %c0_453 = arith.constant 0 : index
    %c2_454 = arith.constant 2 : index
    %c0_455 = arith.constant 0 : index
    %c0_456 = arith.constant 0 : index
    %377 = vector.load %arg3[%c0_453, %c2_454, %c0_455, %c0_456] : memref<2x3x72x64xbf16, #tpu.memory_space<vmem>>, vector<1x1x72x64xbf16>
    %378 = vector.shape_cast %377 : vector<1x1x72x64xbf16> to vector<72x64xbf16>
    %cst_457 = arith.constant dense<0.000000e+00> : vector<8x64xf32>
    %379 = tpu.matmul %376, %378, %cst_457 {dimension_numbers = #tpu.dot_dimension_numbers<[1], [0], [0], [1], [0, 0, 1, 1], [], []>} : vector<8x72xbf16>, vector<72x64xbf16>, vector<8x64xf32> -> vector<8x64xf32>
    %380 = arith.addf %374, %379 : vector<8x64xf32>
    %c0_458 = arith.constant 0 : index
    %c0_459 = arith.constant 0 : index
    %c0_460 = arith.constant 0 : index
    %381 = vector.load %arg4[%c0_458, %c0_459, %c0_460] : memref<2x1x64xf32, #tpu.memory_space<vmem>>, vector<1x1x64xf32>
    %382 = vector.shape_cast %381 : vector<1x1x64xf32> to vector<1x64xf32>
    %383 = vector.broadcast %382 : vector<1x64xf32> to vector<8x64xf32>
    %384 = arith.addf %380, %383 : vector<8x64xf32>
    %cst_461 = arith.constant 0.000000e+00 : f32
    %385 = vector.broadcast %cst_461 : f32 to vector<8x64xf32>
    %386 = arith.maximumf %384, %385 : vector<8x64xf32>
    %387 = arith.truncf %386 : vector<8x64xf32> to vector<8x64xbf16>
    %c0_462 = arith.constant 0 : index
    %c6_463 = arith.constant 6 : index
    %c0_464 = arith.constant 0 : index
    %c0_465 = arith.constant 0 : index
    %388 = vector.load %arg5[%c0_462, %c6_463, %c0_464, %c0_465] : memref<2x8x64x32xbf16, #tpu.memory_space<vmem>>, vector<1x1x64x32xbf16>
    %389 = vector.shape_cast %388 : vector<1x1x64x32xbf16> to vector<64x32xbf16>
    %cst_466 = arith.constant dense<0.000000e+00> : vector<8x32xf32>
    %390 = tpu.matmul %387, %389, %cst_466 {dimension_numbers = #tpu.dot_dimension_numbers<[1], [0], [0], [1], [0, 0, 1, 1], [], []>} : vector<8x64xbf16>, vector<64x32xbf16>, vector<8x32xf32> -> vector<8x32xf32>
    %391 = arith.addf %331, %390 : vector<8x32xf32>
    %cst_467 = arith.constant 0.000000e+00 : f32
    %392 = vector.broadcast %cst_467 : f32 to vector<8x64xf32>
    %c1_468 = arith.constant 1 : index
    %c12_469 = arith.constant 12 : index
    %c0_470 = arith.constant 0 : index
    %c0_471 = arith.constant 0 : index
    %393 = vector.load %arg1[%c1_468, %c12_469, %c0_470, %c0_471] : memref<2x18x8x72xbf16, #tpu.memory_space<vmem>>, vector<1x1x8x72xbf16>
    %394 = vector.shape_cast %393 : vector<1x1x8x72xbf16> to vector<8x72xbf16>
    %c1_472 = arith.constant 1 : index
    %c0_473 = arith.constant 0 : index
    %c0_474 = arith.constant 0 : index
    %c0_475 = arith.constant 0 : index
    %395 = vector.load %arg3[%c1_472, %c0_473, %c0_474, %c0_475] : memref<2x3x72x64xbf16, #tpu.memory_space<vmem>>, vector<1x1x72x64xbf16>
    %396 = vector.shape_cast %395 : vector<1x1x72x64xbf16> to vector<72x64xbf16>
    %cst_476 = arith.constant dense<0.000000e+00> : vector<8x64xf32>
    %397 = tpu.matmul %394, %396, %cst_476 {dimension_numbers = #tpu.dot_dimension_numbers<[1], [0], [0], [1], [0, 0, 1, 1], [], []>} : vector<8x72xbf16>, vector<72x64xbf16>, vector<8x64xf32> -> vector<8x64xf32>
    %398 = arith.addf %392, %397 : vector<8x64xf32>
    %c1_477 = arith.constant 1 : index
    %c13_478 = arith.constant 13 : index
    %c0_479 = arith.constant 0 : index
    %c0_480 = arith.constant 0 : index
    %399 = vector.load %arg1[%c1_477, %c13_478, %c0_479, %c0_480] : memref<2x18x8x72xbf16, #tpu.memory_space<vmem>>, vector<1x1x8x72xbf16>
    %400 = vector.shape_cast %399 : vector<1x1x8x72xbf16> to vector<8x72xbf16>
    %c1_481 = arith.constant 1 : index
    %c1_482 = arith.constant 1 : index
    %c0_483 = arith.constant 0 : index
    %c0_484 = arith.constant 0 : index
    %401 = vector.load %arg3[%c1_481, %c1_482, %c0_483, %c0_484] : memref<2x3x72x64xbf16, #tpu.memory_space<vmem>>, vector<1x1x72x64xbf16>
    %402 = vector.shape_cast %401 : vector<1x1x72x64xbf16> to vector<72x64xbf16>
    %cst_485 = arith.constant dense<0.000000e+00> : vector<8x64xf32>
    %403 = tpu.matmul %400, %402, %cst_485 {dimension_numbers = #tpu.dot_dimension_numbers<[1], [0], [0], [1], [0, 0, 1, 1], [], []>} : vector<8x72xbf16>, vector<72x64xbf16>, vector<8x64xf32> -> vector<8x64xf32>
    %404 = arith.addf %398, %403 : vector<8x64xf32>
    %c1_486 = arith.constant 1 : index
    %c14_487 = arith.constant 14 : index
    %c0_488 = arith.constant 0 : index
    %c0_489 = arith.constant 0 : index
    %405 = vector.load %arg1[%c1_486, %c14_487, %c0_488, %c0_489] : memref<2x18x8x72xbf16, #tpu.memory_space<vmem>>, vector<1x1x8x72xbf16>
    %406 = vector.shape_cast %405 : vector<1x1x8x72xbf16> to vector<8x72xbf16>
    %c1_490 = arith.constant 1 : index
    %c2_491 = arith.constant 2 : index
    %c0_492 = arith.constant 0 : index
    %c0_493 = arith.constant 0 : index
    %407 = vector.load %arg3[%c1_490, %c2_491, %c0_492, %c0_493] : memref<2x3x72x64xbf16, #tpu.memory_space<vmem>>, vector<1x1x72x64xbf16>
    %408 = vector.shape_cast %407 : vector<1x1x72x64xbf16> to vector<72x64xbf16>
    %cst_494 = arith.constant dense<0.000000e+00> : vector<8x64xf32>
    %409 = tpu.matmul %406, %408, %cst_494 {dimension_numbers = #tpu.dot_dimension_numbers<[1], [0], [0], [1], [0, 0, 1, 1], [], []>} : vector<8x72xbf16>, vector<72x64xbf16>, vector<8x64xf32> -> vector<8x64xf32>
    %410 = arith.addf %404, %409 : vector<8x64xf32>
    %c1_495 = arith.constant 1 : index
    %c0_496 = arith.constant 0 : index
    %c0_497 = arith.constant 0 : index
    %411 = vector.load %arg4[%c1_495, %c0_496, %c0_497] : memref<2x1x64xf32, #tpu.memory_space<vmem>>, vector<1x1x64xf32>
    %412 = vector.shape_cast %411 : vector<1x1x64xf32> to vector<1x64xf32>
    %413 = vector.broadcast %412 : vector<1x64xf32> to vector<8x64xf32>
    %414 = arith.addf %410, %413 : vector<8x64xf32>
    %cst_498 = arith.constant 0.000000e+00 : f32
    %415 = vector.broadcast %cst_498 : f32 to vector<8x64xf32>
    %416 = arith.maximumf %414, %415 : vector<8x64xf32>
    %417 = arith.truncf %416 : vector<8x64xf32> to vector<8x64xbf16>
    %c1_499 = arith.constant 1 : index
    %c6_500 = arith.constant 6 : index
    %c0_501 = arith.constant 0 : index
    %c0_502 = arith.constant 0 : index
    %418 = vector.load %arg5[%c1_499, %c6_500, %c0_501, %c0_502] : memref<2x8x64x32xbf16, #tpu.memory_space<vmem>>, vector<1x1x64x32xbf16>
    %419 = vector.shape_cast %418 : vector<1x1x64x32xbf16> to vector<64x32xbf16>
    %cst_503 = arith.constant dense<0.000000e+00> : vector<8x32xf32>
    %420 = tpu.matmul %417, %419, %cst_503 {dimension_numbers = #tpu.dot_dimension_numbers<[1], [0], [0], [1], [0, 0, 1, 1], [], []>} : vector<8x64xbf16>, vector<64x32xbf16>, vector<8x32xf32> -> vector<8x32xf32>
    %421 = arith.addf %361, %420 : vector<8x32xf32>
    %cst_504 = arith.constant 0.000000e+00 : f32
    %422 = vector.broadcast %cst_504 : f32 to vector<8x64xf32>
    %c0_505 = arith.constant 0 : index
    %c14_506 = arith.constant 14 : index
    %c0_507 = arith.constant 0 : index
    %c0_508 = arith.constant 0 : index
    %423 = vector.load %arg1[%c0_505, %c14_506, %c0_507, %c0_508] : memref<2x18x8x72xbf16, #tpu.memory_space<vmem>>, vector<1x1x8x72xbf16>
    %424 = vector.shape_cast %423 : vector<1x1x8x72xbf16> to vector<8x72xbf16>
    %c0_509 = arith.constant 0 : index
    %c0_510 = arith.constant 0 : index
    %c0_511 = arith.constant 0 : index
    %c0_512 = arith.constant 0 : index
    %425 = vector.load %arg3[%c0_509, %c0_510, %c0_511, %c0_512] : memref<2x3x72x64xbf16, #tpu.memory_space<vmem>>, vector<1x1x72x64xbf16>
    %426 = vector.shape_cast %425 : vector<1x1x72x64xbf16> to vector<72x64xbf16>
    %cst_513 = arith.constant dense<0.000000e+00> : vector<8x64xf32>
    %427 = tpu.matmul %424, %426, %cst_513 {dimension_numbers = #tpu.dot_dimension_numbers<[1], [0], [0], [1], [0, 0, 1, 1], [], []>} : vector<8x72xbf16>, vector<72x64xbf16>, vector<8x64xf32> -> vector<8x64xf32>
    %428 = arith.addf %422, %427 : vector<8x64xf32>
    %c0_514 = arith.constant 0 : index
    %c15 = arith.constant 15 : index
    %c0_515 = arith.constant 0 : index
    %c0_516 = arith.constant 0 : index
    %429 = vector.load %arg1[%c0_514, %c15, %c0_515, %c0_516] : memref<2x18x8x72xbf16, #tpu.memory_space<vmem>>, vector<1x1x8x72xbf16>
    %430 = vector.shape_cast %429 : vector<1x1x8x72xbf16> to vector<8x72xbf16>
    %c0_517 = arith.constant 0 : index
    %c1_518 = arith.constant 1 : index
    %c0_519 = arith.constant 0 : index
    %c0_520 = arith.constant 0 : index
    %431 = vector.load %arg3[%c0_517, %c1_518, %c0_519, %c0_520] : memref<2x3x72x64xbf16, #tpu.memory_space<vmem>>, vector<1x1x72x64xbf16>
    %432 = vector.shape_cast %431 : vector<1x1x72x64xbf16> to vector<72x64xbf16>
    %cst_521 = arith.constant dense<0.000000e+00> : vector<8x64xf32>
    %433 = tpu.matmul %430, %432, %cst_521 {dimension_numbers = #tpu.dot_dimension_numbers<[1], [0], [0], [1], [0, 0, 1, 1], [], []>} : vector<8x72xbf16>, vector<72x64xbf16>, vector<8x64xf32> -> vector<8x64xf32>
    %434 = arith.addf %428, %433 : vector<8x64xf32>
    %c0_522 = arith.constant 0 : index
    %c16 = arith.constant 16 : index
    %c0_523 = arith.constant 0 : index
    %c0_524 = arith.constant 0 : index
    %435 = vector.load %arg1[%c0_522, %c16, %c0_523, %c0_524] : memref<2x18x8x72xbf16, #tpu.memory_space<vmem>>, vector<1x1x8x72xbf16>
    %436 = vector.shape_cast %435 : vector<1x1x8x72xbf16> to vector<8x72xbf16>
    %c0_525 = arith.constant 0 : index
    %c2_526 = arith.constant 2 : index
    %c0_527 = arith.constant 0 : index
    %c0_528 = arith.constant 0 : index
    %437 = vector.load %arg3[%c0_525, %c2_526, %c0_527, %c0_528] : memref<2x3x72x64xbf16, #tpu.memory_space<vmem>>, vector<1x1x72x64xbf16>
    %438 = vector.shape_cast %437 : vector<1x1x72x64xbf16> to vector<72x64xbf16>
    %cst_529 = arith.constant dense<0.000000e+00> : vector<8x64xf32>
    %439 = tpu.matmul %436, %438, %cst_529 {dimension_numbers = #tpu.dot_dimension_numbers<[1], [0], [0], [1], [0, 0, 1, 1], [], []>} : vector<8x72xbf16>, vector<72x64xbf16>, vector<8x64xf32> -> vector<8x64xf32>
    %440 = arith.addf %434, %439 : vector<8x64xf32>
    %c0_530 = arith.constant 0 : index
    %c0_531 = arith.constant 0 : index
    %c0_532 = arith.constant 0 : index
    %441 = vector.load %arg4[%c0_530, %c0_531, %c0_532] : memref<2x1x64xf32, #tpu.memory_space<vmem>>, vector<1x1x64xf32>
    %442 = vector.shape_cast %441 : vector<1x1x64xf32> to vector<1x64xf32>
    %443 = vector.broadcast %442 : vector<1x64xf32> to vector<8x64xf32>
    %444 = arith.addf %440, %443 : vector<8x64xf32>
    %cst_533 = arith.constant 0.000000e+00 : f32
    %445 = vector.broadcast %cst_533 : f32 to vector<8x64xf32>
    %446 = arith.maximumf %444, %445 : vector<8x64xf32>
    %447 = arith.truncf %446 : vector<8x64xf32> to vector<8x64xbf16>
    %c0_534 = arith.constant 0 : index
    %c7_535 = arith.constant 7 : index
    %c0_536 = arith.constant 0 : index
    %c0_537 = arith.constant 0 : index
    %448 = vector.load %arg5[%c0_534, %c7_535, %c0_536, %c0_537] : memref<2x8x64x32xbf16, #tpu.memory_space<vmem>>, vector<1x1x64x32xbf16>
    %449 = vector.shape_cast %448 : vector<1x1x64x32xbf16> to vector<64x32xbf16>
    %cst_538 = arith.constant dense<0.000000e+00> : vector<8x32xf32>
    %450 = tpu.matmul %447, %449, %cst_538 {dimension_numbers = #tpu.dot_dimension_numbers<[1], [0], [0], [1], [0, 0, 1, 1], [], []>} : vector<8x64xbf16>, vector<64x32xbf16>, vector<8x32xf32> -> vector<8x32xf32>
    %451 = arith.addf %391, %450 : vector<8x32xf32>
    %cst_539 = arith.constant 0.000000e+00 : f32
    %452 = vector.broadcast %cst_539 : f32 to vector<8x64xf32>
    %c1_540 = arith.constant 1 : index
    %c14_541 = arith.constant 14 : index
    %c0_542 = arith.constant 0 : index
    %c0_543 = arith.constant 0 : index
    %453 = vector.load %arg1[%c1_540, %c14_541, %c0_542, %c0_543] : memref<2x18x8x72xbf16, #tpu.memory_space<vmem>>, vector<1x1x8x72xbf16>
    %454 = vector.shape_cast %453 : vector<1x1x8x72xbf16> to vector<8x72xbf16>
    %c1_544 = arith.constant 1 : index
    %c0_545 = arith.constant 0 : index
    %c0_546 = arith.constant 0 : index
    %c0_547 = arith.constant 0 : index
    %455 = vector.load %arg3[%c1_544, %c0_545, %c0_546, %c0_547] : memref<2x3x72x64xbf16, #tpu.memory_space<vmem>>, vector<1x1x72x64xbf16>
    %456 = vector.shape_cast %455 : vector<1x1x72x64xbf16> to vector<72x64xbf16>
    %cst_548 = arith.constant dense<0.000000e+00> : vector<8x64xf32>
    %457 = tpu.matmul %454, %456, %cst_548 {dimension_numbers = #tpu.dot_dimension_numbers<[1], [0], [0], [1], [0, 0, 1, 1], [], []>} : vector<8x72xbf16>, vector<72x64xbf16>, vector<8x64xf32> -> vector<8x64xf32>
    %458 = arith.addf %452, %457 : vector<8x64xf32>
    %c1_549 = arith.constant 1 : index
    %c15_550 = arith.constant 15 : index
    %c0_551 = arith.constant 0 : index
    %c0_552 = arith.constant 0 : index
    %459 = vector.load %arg1[%c1_549, %c15_550, %c0_551, %c0_552] : memref<2x18x8x72xbf16, #tpu.memory_space<vmem>>, vector<1x1x8x72xbf16>
    %460 = vector.shape_cast %459 : vector<1x1x8x72xbf16> to vector<8x72xbf16>
    %c1_553 = arith.constant 1 : index
    %c1_554 = arith.constant 1 : index
    %c0_555 = arith.constant 0 : index
    %c0_556 = arith.constant 0 : index
    %461 = vector.load %arg3[%c1_553, %c1_554, %c0_555, %c0_556] : memref<2x3x72x64xbf16, #tpu.memory_space<vmem>>, vector<1x1x72x64xbf16>
    %462 = vector.shape_cast %461 : vector<1x1x72x64xbf16> to vector<72x64xbf16>
    %cst_557 = arith.constant dense<0.000000e+00> : vector<8x64xf32>
    %463 = tpu.matmul %460, %462, %cst_557 {dimension_numbers = #tpu.dot_dimension_numbers<[1], [0], [0], [1], [0, 0, 1, 1], [], []>} : vector<8x72xbf16>, vector<72x64xbf16>, vector<8x64xf32> -> vector<8x64xf32>
    %464 = arith.addf %458, %463 : vector<8x64xf32>
    %c1_558 = arith.constant 1 : index
    %c16_559 = arith.constant 16 : index
    %c0_560 = arith.constant 0 : index
    %c0_561 = arith.constant 0 : index
    %465 = vector.load %arg1[%c1_558, %c16_559, %c0_560, %c0_561] : memref<2x18x8x72xbf16, #tpu.memory_space<vmem>>, vector<1x1x8x72xbf16>
    %466 = vector.shape_cast %465 : vector<1x1x8x72xbf16> to vector<8x72xbf16>
    %c1_562 = arith.constant 1 : index
    %c2_563 = arith.constant 2 : index
    %c0_564 = arith.constant 0 : index
    %c0_565 = arith.constant 0 : index
    %467 = vector.load %arg3[%c1_562, %c2_563, %c0_564, %c0_565] : memref<2x3x72x64xbf16, #tpu.memory_space<vmem>>, vector<1x1x72x64xbf16>
    %468 = vector.shape_cast %467 : vector<1x1x72x64xbf16> to vector<72x64xbf16>
    %cst_566 = arith.constant dense<0.000000e+00> : vector<8x64xf32>
    %469 = tpu.matmul %466, %468, %cst_566 {dimension_numbers = #tpu.dot_dimension_numbers<[1], [0], [0], [1], [0, 0, 1, 1], [], []>} : vector<8x72xbf16>, vector<72x64xbf16>, vector<8x64xf32> -> vector<8x64xf32>
    %470 = arith.addf %464, %469 : vector<8x64xf32>
    %c1_567 = arith.constant 1 : index
    %c0_568 = arith.constant 0 : index
    %c0_569 = arith.constant 0 : index
    %471 = vector.load %arg4[%c1_567, %c0_568, %c0_569] : memref<2x1x64xf32, #tpu.memory_space<vmem>>, vector<1x1x64xf32>
    %472 = vector.shape_cast %471 : vector<1x1x64xf32> to vector<1x64xf32>
    %473 = vector.broadcast %472 : vector<1x64xf32> to vector<8x64xf32>
    %474 = arith.addf %470, %473 : vector<8x64xf32>
    %cst_570 = arith.constant 0.000000e+00 : f32
    %475 = vector.broadcast %cst_570 : f32 to vector<8x64xf32>
    %476 = arith.maximumf %474, %475 : vector<8x64xf32>
    %477 = arith.truncf %476 : vector<8x64xf32> to vector<8x64xbf16>
    %c1_571 = arith.constant 1 : index
    %c7_572 = arith.constant 7 : index
    %c0_573 = arith.constant 0 : index
    %c0_574 = arith.constant 0 : index
    %478 = vector.load %arg5[%c1_571, %c7_572, %c0_573, %c0_574] : memref<2x8x64x32xbf16, #tpu.memory_space<vmem>>, vector<1x1x64x32xbf16>
    %479 = vector.shape_cast %478 : vector<1x1x64x32xbf16> to vector<64x32xbf16>
    %cst_575 = arith.constant dense<0.000000e+00> : vector<8x32xf32>
    %480 = tpu.matmul %477, %479, %cst_575 {dimension_numbers = #tpu.dot_dimension_numbers<[1], [0], [0], [1], [0, 0, 1, 1], [], []>} : vector<8x64xbf16>, vector<64x32xbf16>, vector<8x32xf32> -> vector<8x32xf32>
    %481 = arith.addf %421, %480 : vector<8x32xf32>
    %c0_576 = arith.constant 0 : index
    %c0_577 = arith.constant 0 : index
    %482 = vector.load %arg2[%c0_576, %c0_577] : memref<8x8xbf16, #tpu.memory_space<vmem>>, vector<8x8xbf16>
    %c0_578 = arith.constant 0 : index
    %c0_579 = arith.constant 0 : index
    %483 = vector.load %arg6[%c0_578, %c0_579] : memref<8x16xbf16, #tpu.memory_space<vmem>>, vector<8x16xbf16>
    %cst_580 = arith.constant dense<0.000000e+00> : vector<8x16xf32>
    %484 = tpu.matmul %482, %483, %cst_580 {dimension_numbers = #tpu.dot_dimension_numbers<[1], [0], [0], [1], [0, 0, 1, 1], [], []>} : vector<8x8xbf16>, vector<8x16xbf16>, vector<8x16xf32> -> vector<8x16xf32>
    %c0_581 = arith.constant 0 : index
    %c0_582 = arith.constant 0 : index
    %485 = vector.load %arg7[%c0_581, %c0_582] : memref<1x80xf32, #tpu.memory_space<vmem>>, vector<1x80xf32>
    %486 = vector.extract_strided_slice %485 {offsets = [0, 0], sizes = [1, 32], strides = [1, 1]} : vector<1x80xf32> to vector<1x32xf32>
    %487 = vector.broadcast %486 : vector<1x32xf32> to vector<8x32xf32>
    %488 = arith.addf %451, %487 : vector<8x32xf32>
    %c0_583 = arith.constant 0 : index
    %c0_584 = arith.constant 0 : index
    %489 = vector.load %arg8[%c0_583, %c0_584] : memref<8x80xf32, #tpu.memory_space<vmem>>, vector<8x32xf32>
    tpu.vector_store %arg8[%c0_583, %c0_584], %488 {strides = array<i32>} : memref<8x80xf32, #tpu.memory_space<vmem>>, vector<8x32xf32>,
    %490 = vector.extract_strided_slice %485 {offsets = [0, 32], sizes = [1, 32], strides = [1, 1]} : vector<1x80xf32> to vector<1x32xf32>
    %491 = vector.broadcast %490 : vector<1x32xf32> to vector<8x32xf32>
    %492 = arith.addf %481, %491 : vector<8x32xf32>
    %c0_585 = arith.constant 0 : index
    %c32 = arith.constant 32 : index
    %493 = vector.load %arg8[%c0_585, %c32] : memref<8x80xf32, #tpu.memory_space<vmem>>, vector<8x32xf32>
    tpu.vector_store %arg8[%c0_585, %c32], %492 {strides = array<i32>} : memref<8x80xf32, #tpu.memory_space<vmem>>, vector<8x32xf32>,
    %494 = vector.extract_strided_slice %485 {offsets = [0, 64], sizes = [1, 16], strides = [1, 1]} : vector<1x80xf32> to vector<1x16xf32>
    %495 = vector.broadcast %494 : vector<1x16xf32> to vector<8x16xf32>
    %496 = arith.addf %484, %495 : vector<8x16xf32>
    %c0_586 = arith.constant 0 : index
    %c64 = arith.constant 64 : index
    %497 = vector.load %arg8[%c0_586, %c64] : memref<8x80xf32, #tpu.memory_space<vmem>>, vector<8x16xf32>
    tpu.vector_store %arg8[%c0_586, %c64], %496 {strides = array<i32>} : memref<8x80xf32, #tpu.memory_space<vmem>>, vector<8x16xf32>,
    return
  }
  func.func @transform_0(%arg0: i32) -> (i32, i32, i32, i32) {
    %c0_i32 = arith.constant 0 : i32
    %c0_i32_0 = arith.constant 0 : i32
    %c0_i32_1 = arith.constant 0 : i32
    %c0_i32_2 = arith.constant 0 : i32
    return %c0_i32, %c0_i32_0, %arg0, %c0_i32_1 : i32, i32, i32, i32
  }
  func.func @transform_1(%arg0: i32) -> (i32, i32) {
    %c0_i32 = arith.constant 0 : i32
    %c0_i32_0 = arith.constant 0 : i32
    return %arg0, %c0_i32 : i32, i32
  }
  func.func @transform_2(%arg0: i32) -> (i32, i32, i32, i32) {
    %c0_i32 = arith.constant 0 : i32
    %c0_i32_0 = arith.constant 0 : i32
    %c0_i32_1 = arith.constant 0 : i32
    %c0_i32_2 = arith.constant 0 : i32
    %c0_i32_3 = arith.constant 0 : i32
    return %c0_i32, %c0_i32_0, %c0_i32_1, %c0_i32_2 : i32, i32, i32, i32
  }
  func.func @transform_3(%arg0: i32) -> (i32, i32, i32) {
    %c0_i32 = arith.constant 0 : i32
    %c0_i32_0 = arith.constant 0 : i32
    %c0_i32_1 = arith.constant 0 : i32
    %c0_i32_2 = arith.constant 0 : i32
    return %c0_i32, %c0_i32_0, %c0_i32_1 : i32, i32, i32
  }
  func.func @transform_4(%arg0: i32) -> (i32, i32, i32, i32) {
    %c0_i32 = arith.constant 0 : i32
    %c0_i32_0 = arith.constant 0 : i32
    %c0_i32_1 = arith.constant 0 : i32
    %c0_i32_2 = arith.constant 0 : i32
    %c0_i32_3 = arith.constant 0 : i32
    return %c0_i32, %c0_i32_0, %c0_i32_1, %c0_i32_2 : i32, i32, i32, i32
  }
  func.func @transform_5(%arg0: i32) -> (i32, i32) {
    %c0_i32 = arith.constant 0 : i32
    %c0_i32_0 = arith.constant 0 : i32
    %c0_i32_1 = arith.constant 0 : i32
    return %c0_i32, %c0_i32_0 : i32, i32
  }
  func.func @transform_6(%arg0: i32) -> (i32, i32) {
    %c0_i32 = arith.constant 0 : i32
    %c0_i32_0 = arith.constant 0 : i32
    %c0_i32_1 = arith.constant 0 : i32
    return %c0_i32, %c0_i32_0 : i32, i32
  }
  func.func @transform_7(%arg0: i32) -> (i32, i32) {
    %c0_i32 = arith.constant 0 : i32
    %c0_i32_0 = arith.constant 0 : i32
    return %arg0, %c0_i32 : i32, i32
  }
}

</mosaic_0001>

<llo_original>
// kernel: concat_encoders_forward.1
$region0: #{concat_encoders_forward.1}
  #allocation0 [shape = 'u32[]', space=smem, size = 0x4, offset = 0x4, fixed_abs, tag = 'smem constant byte address 0x4 - core index']
  #allocation1 [shape = 'u32[144,128]{1,0:T(1,128)}', space=vmem, size = 0x12000, scoped, tag = 'internal scratch']
  %s0 = inlined_call_operand.vmem [shape: bf16[2,18,16,72], index: 0, kind: input, shape index: {}]
  %s1 = inlined_call_operand.vmem [shape: bf16[16,8], index: 1, kind: input, shape index: {}]
  %s2 = inlined_call_operand.vmem [shape: bf16[2,3,72,64], index: 2, kind: input, shape index: {}]
  %s3 = inlined_call_operand.vmem [shape: f32[2,1,64], index: 3, kind: input, shape index: {}]
  %s4 = inlined_call_operand.vmem [shape: bf16[2,8,64,32], index: 4, kind: input, shape index: {}]
  %s5 = inlined_call_operand.vmem [shape: bf16[8,16], index: 5, kind: input, shape index: {}]
  %s6 = inlined_call_operand.vmem [shape: f32[1,80], index: 6, kind: input, shape index: {}]
  %s7 = inlined_call_operand.hbm [shape: f32[16,80], index: 7, kind: output, shape index: {}]
  %s8 = sld [smem:[#allocation0]]
  $region102: #{concat_encoders_forward.1} parent=0
    _
  %s10 = ssub.s32 1, %s8
  %s11 = scalar_select 0, %s10, %s8
  $region1: #{concat_encoders_forward.1} parent=0
    #allocation2 [shape = 'u8[147456]{0}', space=vmem, size = 0x24000, scoped, tag = 'input window, operand 0']
    #allocation3 [shape = 'u8[8192]{0}', space=vmem, size = 0x2000, scoped, tag = 'output window, operand 0']
    #allocation4 [shape = 's32[2]{0}', space=sflag, size = 0x8, scoped, tag = 'scoped memory for concat_encoders_forward.1']
    %12 = vsyncpa [#allocation4], 0
    %s13 = scalar_lea.sflag [#allocation4], 1
    %14 = vsyncpa %s13, 0
    loop: start=0, step=1, limit=4
    $region2: #{concat_encoders_forward.1} parent=1 // loop_pre_header
      _
    $region3: #{concat_encoders_forward.1} parent=1 // loop_header
      %s16 = sphi 0, %s20
      %p17 = scmp.ge.s32.totalorder %s16, 4
      %s26 = sphi 0, %s28
      %s29 = sphi 0, %s26
      %s30 = sphi 0, %s29
      %s46 = sphi 0, %s30
      %s52 = sphi 0, %s54
      %s55 = sphi 0, %s52
      %s56 = sphi 0, %s55
      %s72 = sphi 0, %s56
      %s76 = sphi 0, %s76
      %s78 = sphi 0, %s76
      %s79 = sphi 0, %s78
      %s93 = sphi 0, %s79
      %s97 = sphi 0, %s97
      %s99 = sphi 0, %s97
      %s100 = sphi 0, %s99
      %s114 = sphi 0, %s100
      %s118 = sphi 0, %s118
      %s120 = sphi 0, %s118
      %s121 = sphi 0, %s120
      %s135 = sphi 0, %s121
      %s139 = sphi 0, %s139
      %s141 = sphi 0, %s139
      %s142 = sphi 0, %s141
      %s156 = sphi 0, %s142
      %s160 = sphi 0, %s160
      %s162 = sphi 0, %s160
      %s163 = sphi 0, %s162
      %s177 = sphi 0, %s163
      %s183 = sphi 0, %s185
      %s186 = sphi 0, %s183
      %s187 = sphi 0, %s186
      %s203 = sphi 0, %s187
    $region4: #{concat_encoders_forward.1} parent=1 // loop_header_branch
      %19 = sbr.rel (%p17) target = $region8
    $region5: #{concat_encoders_forward.1} parent=1 // loop_body
      %s21 = ssub.s32 %s16, 1
      %s22 = ssub.s32 %s16, 2
      %s23 = sadd.s32 %s16, 1
      %s24 = ssub.s32 %s16, %s23
      %p25 = scmp.eq.s32.totalorder %s24, 0
      %s27 = sadd.s32 %s26, 1
      %s28 = scalar_select %p25, %s26, %s27
      %p31 = pneg %p25
      %p32 = scmp.eq.s32.totalorder %s16, 1
      %p33 = por %p31, %p32
      %p34 = scmp.ne.s32.totalorder %s26, %s29
      %p35 = scmp.eq.s32.totalorder %s16, 0
      %p36 = por %p34, %p35
      %p37 = scmp.ne.s32.totalorder %s26, %s29
      %p38 = scmp.eq.s32.totalorder %s21, 1
      %p39 = por %p37, %p38
      %p40 = scmp.ne.s32.totalorder %s29, %s30
      %p41 = scmp.eq.s32.totalorder %s21, 0
      %p42 = por %p40, %p41
      %p43 = scmp.ne.s32.totalorder %s29, %s30
      %p44 = scmp.eq.s32.totalorder %s22, 1
      %p45 = por %p43, %p44
      %p47 = scmp.ne.s32.totalorder %s30, %s46
      %p48 = scmp.eq.s32.totalorder %s22, 0
      %p49 = por %p47, %p48
      %s50 = ssub.s32 %s16, %s23
      %p51 = scmp.eq.s32.totalorder %s50, 0
      %s53 = sadd.s32 %s52, 1
      %s54 = scalar_select %p51, %s52, %s53
      %p57 = pneg %p51
      %p58 = scmp.eq.s32.totalorder %s16, 1
      %p59 = por %p57, %p58
      %p60 = scmp.ne.s32.totalorder %s52, %s55
      %p61 = scmp.eq.s32.totalorder %s16, 0
      %p62 = por %p60, %p61
      %p63 = scmp.ne.s32.totalorder %s52, %s55
      %p64 = scmp.eq.s32.totalorder %s21, 1
      %p65 = por %p63, %p64
      %p66 = scmp.ne.s32.totalorder %s55, %s56
      %p67 = scmp.eq.s32.totalorder %s21, 0
      %p68 = por %p66, %p67
      %p69 = scmp.ne.s32.totalorder %s55, %s56
      %p70 = scmp.eq.s32.totalorder %s22, 1
      %p71 = por %p69, %p70
      %p73 = scmp.ne.s32.totalorder %s56, %s72
      %p74 = scmp.eq.s32.totalorder %s22, 0
      %p75 = por %p73, %p74
      %s77 = sadd.s32 %s76, 1
      %p80 = scmp.eq.s32.totalorder %s16, 1
      %p81 = scmp.ne.s32.totalorder %s76, %s78
      %p82 = scmp.eq.s32.totalorder %s16, 0
      %p83 = por %p81, %p82
      %p84 = scmp.ne.s32.totalorder %s76, %s78
      %p85 = scmp.eq.s32.totalorder %s21, 1
      %p86 = por %p84, %p85
      %p87 = scmp.ne.s32.totalorder %s78, %s79
      %p88 = scmp.eq.s32.totalorder %s21, 0
      %p89 = por %p87, %p88
      %p90 = scmp.ne.s32.totalorder %s78, %s79
      %p91 = scmp.eq.s32.totalorder %s22, 1
      %p92 = por %p90, %p91
      %p94 = scmp.ne.s32.totalorder %s79, %s93
      %p95 = scmp.eq.s32.totalorder %s22, 0
      %p96 = por %p94, %p95
      %s98 = sadd.s32 %s97, 1
      %p101 = scmp.eq.s32.totalorder %s16, 1
      %p102 = scmp.ne.s32.totalorder %s97, %s99
      %p103 = scmp.eq.s32.totalorder %s16, 0
      %p104 = por %p102, %p103
      %p105 = scmp.ne.s32.totalorder %s97, %s99
      %p106 = scmp.eq.s32.totalorder %s21, 1
      %p107 = por %p105, %p106
      %p108 = scmp.ne.s32.totalorder %s99, %s100
      %p109 = scmp.eq.s32.totalorder %s21, 0
      %p110 = por %p108, %p109
      %p111 = scmp.ne.s32.totalorder %s99, %s100
      %p112 = scmp.eq.s32.totalorder %s22, 1
      %p113 = por %p111, %p112
      %p115 = scmp.ne.s32.totalorder %s100, %s114
      %p116 = scmp.eq.s32.totalorder %s22, 0
      %p117 = por %p115, %p116
      %s119 = sadd.s32 %s118, 1
      %p122 = scmp.eq.s32.totalorder %s16, 1
      %p123 = scmp.ne.s32.totalorder %s118, %s120
      %p124 = scmp.eq.s32.totalorder %s16, 0
      %p125 = por %p123, %p124
      %p126 = scmp.ne.s32.totalorder %s118, %s120
      %p127 = scmp.eq.s32.totalorder %s21, 1
      %p128 = por %p126, %p127
      %p129 = scmp.ne.s32.totalorder %s120, %s121
      %p130 = scmp.eq.s32.totalorder %s21, 0
      %p131 = por %p129, %p130
      %p132 = scmp.ne.s32.totalorder %s120, %s121
      %p133 = scmp.eq.s32.totalorder %s22, 1
      %p134 = por %p132, %p133
      %p136 = scmp.ne.s32.totalorder %s121, %s135
      %p137 = scmp.eq.s32.totalorder %s22, 0
      %p138 = por %p136, %p137
      %s140 = sadd.s32 %s139, 1
      %p143 = scmp.eq.s32.totalorder %s16, 1
      %p144 = scmp.ne.s32.totalorder %s139, %s141
      %p145 = scmp.eq.s32.totalorder %s16, 0
      %p146 = por %p144, %p145
      %p147 = scmp.ne.s32.totalorder %s139, %s141
      %p148 = scmp.eq.s32.totalorder %s21, 1
      %p149 = por %p147, %p148
      %p150 = scmp.ne.s32.totalorder %s141, %s142
      %p151 = scmp.eq.s32.totalorder %s21, 0
      %p152 = por %p150, %p151
      %p153 = scmp.ne.s32.totalorder %s141, %s142
      %p154 = scmp.eq.s32.totalorder %s22, 1
      %p155 = por %p153, %p154
      %p157 = scmp.ne.s32.totalorder %s142, %s156
      %p158 = scmp.eq.s32.totalorder %s22, 0
      %p159 = por %p157, %p158
      %s161 = sadd.s32 %s160, 1
      %p164 = scmp.eq.s32.totalorder %s16, 1
      %p165 = scmp.ne.s32.totalorder %s160, %s162
      %p166 = scmp.eq.s32.totalorder %s16, 0
      %p167 = por %p165, %p166
      %p168 = scmp.ne.s32.totalorder %s160, %s162
      %p169 = scmp.eq.s32.totalorder %s21, 1
      %p170 = por %p168, %p169
      %p171 = scmp.ne.s32.totalorder %s162, %s163
      %p172 = scmp.eq.s32.totalorder %s21, 0
      %p173 = por %p171, %p172
      %p174 = scmp.ne.s32.totalorder %s162, %s163
      %p175 = scmp.eq.s32.totalorder %s22, 1
      %p176 = por %p174, %p175
      %p178 = scmp.ne.s32.totalorder %s163, %s177
      %p179 = scmp.eq.s32.totalorder %s22, 0
      %p180 = por %p178, %p179
      %s181 = ssub.s32 %s16, %s23
      %p182 = scmp.eq.s32.totalorder %s181, 0
      %s184 = sadd.s32 %s183, 1
      %s185 = scalar_select %p182, %s183, %s184
      %p188 = pneg %p182
      %p189 = scmp.eq.s32.totalorder %s16, 1
      %p190 = por %p188, %p189
      %p191 = scmp.ne.s32.totalorder %s183, %s186
      %p192 = scmp.eq.s32.totalorder %s16, 0
      %p193 = por %p191, %p192
      %p194 = scmp.ne.s32.totalorder %s183, %s186
      %p195 = scmp.eq.s32.totalorder %s21, 1
      %p196 = por %p194, %p195
      %p197 = scmp.ne.s32.totalorder %s186, %s187
      %p198 = scmp.eq.s32.totalorder %s21, 0
      %p199 = por %p197, %p198
      %p200 = scmp.ne.s32.totalorder %s186, %s187
      %p201 = scmp.eq.s32.totalorder %s22, 1
      %p202 = por %p200, %p201
      %p204 = scmp.ne.s32.totalorder %s187, %s203
      %p205 = scmp.eq.s32.totalorder %s22, 0
      %p206 = por %p204, %p205
      %p207 = scmp.le.s32.totalorder 1, %s16
      %p208 = scmp.lt.s32.totalorder %s16, 3
      %p209 = pnand %p207, %p208
      %p210 = pneg %p209
      // Predicated region
      $region9: #{concat_encoders_forward.1} parent=5 // pred_check
        _
      $region10: #{concat_encoders_forward.1} parent=5 // pred_check_branch
        %212 = sbr.rel (%p209) target = $region12
      $region11: #{concat_encoders_forward.1} parent=5 // pred_region
        %s213 = ssub.s32 %s16, 1
        // Predicated region
        $region13: #{concat_encoders_forward.1} parent=11 // pred_check
          %p214 = pneg %p89
        $region14: #{concat_encoders_forward.1} parent=11 // pred_check_branch
          %216 = sbr.rel (%p214) target = $region16
        $region15: #{concat_encoders_forward.1} parent=11 // pred_region
          _
        $region16: #{concat_encoders_forward.1} parent=11 // pred_fallthru
          _
        // Predicated region
        $region17: #{concat_encoders_forward.1} parent=11 // pred_check
          %p217 = pneg %p110
        $region18: #{concat_encoders_forward.1} parent=11 // pred_check_branch
          %219 = sbr.rel (%p217) target = $region20
        $region19: #{concat_encoders_forward.1} parent=11 // pred_region
          _
        $region20: #{concat_encoders_forward.1} parent=11 // pred_fallthru
          _
        // Predicated region
        $region21: #{concat_encoders_forward.1} parent=11 // pred_check
          %p220 = pneg %p131
        $region22: #{concat_encoders_forward.1} parent=11 // pred_check_branch
          %222 = sbr.rel (%p220) target = $region24
        $region23: #{concat_encoders_forward.1} parent=11 // pred_region
          _
        $region24: #{concat_encoders_forward.1} parent=11 // pred_fallthru
          _
        // Predicated region
        $region25: #{concat_encoders_forward.1} parent=11 // pred_check
          %p223 = pneg %p152
        $region26: #{concat_encoders_forward.1} parent=11 // pred_check_branch
          %225 = sbr.rel (%p223) target = $region28
        $region27: #{concat_encoders_forward.1} parent=11 // pred_region
          _
        $region28: #{concat_encoders_forward.1} parent=11 // pred_fallthru
          _
        // Predicated region
        $region29: #{concat_encoders_forward.1} parent=11 // pred_check
          %p226 = pneg %p173
        $region30: #{concat_encoders_forward.1} parent=11 // pred_check_branch
          %228 = sbr.rel (%p226) target = $region32
        $region31: #{concat_encoders_forward.1} parent=11 // pred_region
          _
        $region32: #{concat_encoders_forward.1} parent=11 // pred_fallthru
          _
      $region12: #{concat_encoders_forward.1} parent=5 // pred_fallthru
        _
      %p229 = scmp.lt.s32.totalorder %s16, 2
      // Predicated region
      $region33: #{concat_encoders_forward.1} parent=5 // pred_check
        %p230 = pneg %p229
      $region34: #{concat_encoders_forward.1} parent=5 // pred_check_branch
        %232 = sbr.rel (%p230) target = $region36
      $region35: #{concat_encoders_forward.1} parent=5 // pred_region
        // Predicated region
        $region37: #{concat_encoders_forward.1} parent=35 // pred_check
          %p233 = pneg %p36
        $region38: #{concat_encoders_forward.1} parent=35 // pred_check_branch
          %235 = sbr.rel (%p233) target = $region40
        $region39: #{concat_encoders_forward.1} parent=35 // pred_region
          %s236 = sand.u32 %s26, 1
          %s237 = sand.u32 %s26, 1
          %s238 = smul.addr %s237, 144
          %s239 = scalar_lea.vmem [#allocation2], %s238
          %s240 = smul.addr %s16, 4
          %s241 = scalar_lea.vmem %s0, %s240
          // Predicated region
          $region41: #{concat_encoders_forward.1} parent=39 // pred_check
            _
          $region42: #{concat_encoders_forward.1} parent=39 // pred_check_branch
            %243 = sbr.rel (0) target = $region44
          $region43: #{concat_encoders_forward.1} parent=39 // pred_region
            // Predicated region
            $region45: #{concat_encoders_forward.1} parent=43 // pred_check
              _
            $region46: #{concat_encoders_forward.1} parent=43 // pred_check_branch
              %245 = sbr.rel target = $region48
            $region47: #{concat_encoders_forward.1} parent=43 // pred_region
              // Predicated region
              $region60: #{concat_encoders_forward.1} parent=47 // pred_check
                _
              $region61: #{concat_encoders_forward.1} parent=47 // pred_check_branch
                %330 = sbr.rel (0) target = $region63
              $region62: #{concat_encoders_forward.1} parent=47 // pred_region
                loop: start=0, step=1, limit=1
                $region64: #{concat_encoders_forward.1} parent=62 // loop_pre_header
                  _
                $region65: #{concat_encoders_forward.1} parent=62 // loop_header
                  %s332 = sphi 0, %s336
                  %p333 = scmp.ge.s32.totalorder %s332, 1
                  %s337 = sphi %s241, %s241
                  %s338 = sphi %s239, %s239
                $region66: #{concat_encoders_forward.1} parent=62 // loop_header_branch
                  %335 = sbr.rel (%p333) target = $region70
                $region67: #{concat_encoders_forward.1} parent=62 // loop_body
                  _
                $region68: #{concat_encoders_forward.1} parent=62 // loop_footer
                  %s336 = sadd.s32 1, %s332
                $region69: #{concat_encoders_forward.1} parent=62 // loop_footer_branch
                  %331 = sbr.rel target = $region65
                $region70: #{concat_encoders_forward.1} parent=62 // loop_exit
                  _
                loop: start=0, step=1, limit=1
                $region71: #{concat_encoders_forward.1} parent=62 // loop_pre_header
                  _
                $region72: #{concat_encoders_forward.1} parent=62 // loop_header
                  %s341 = sphi 0, %s345
                  %p342 = scmp.ge.s32.totalorder %s341, 1
                  %s346 = sphi %s241, %s241
                  %s347 = sphi %s239, %s239
                $region73: #{concat_encoders_forward.1} parent=62 // loop_header_branch
                  %344 = sbr.rel (%p342) target = $region77
                $region74: #{concat_encoders_forward.1} parent=62 // loop_body
                  %v348 = vld [vmem:[%s346] sm:$0xf]
                  %349 = vst [vmem:[%s347] sm:$0xf] %v348
                  %v350 = vld [vmem:[%s346 + $0x8] sm:$0xf]
                  %351 = vst [vmem:[%s347 + $0x4] sm:$0xf] %v350
                  %v352 = vld [vmem:[%s346 + $0x10] sm:$0xf]
                  %353 = vst [vmem:[%s347 + $0x8] sm:$0xf] %v352
                  %v354 = vld [vmem:[%s346 + $0x18] sm:$0xf]
                  %355 = vst [vmem:[%s347 + $0xc] sm:$0xf] %v354
                  %v356 = vld [vmem:[%s346 + $0x20] sm:$0xf]
                  %357 = vst [vmem:[%s347 + $0x10] sm:$0xf] %v356
                  %v358 = vld [vmem:[%s346 + $0x28] sm:$0xf]
                  %359 = vst [vmem:[%s347 + $0x14] sm:$0xf] %v358
                  %v360 = vld [vmem:[%s346 + $0x30] sm:$0xf]
                  %361 = vst [vmem:[%s347 + $0x18] sm:$0xf] %v360
                  %v362 = vld [vmem:[%s346 + $0x38] sm:$0xf]
                  %363 = vst [vmem:[%s347 + $0x1c] sm:$0xf] %v362
                  %v364 = vld [vmem:[%s346 + $0x40] sm:$0xf]
                  %365 = vst [vmem:[%s347 + $0x20] sm:$0xf] %v364
                  %v366 = vld [vmem:[%s346 + $0x48] sm:$0xf]
                  %367 = vst [vmem:[%s347 + $0x24] sm:$0xf] %v366
                  %v368 = vld [vmem:[%s346 + $0x50] sm:$0xf]
                  %369 = vst [vmem:[%s347 + $0x28] sm:$0xf] %v368
                  %v370 = vld [vmem:[%s346 + $0x58] sm:$0xf]
                  %371 = vst [vmem:[%s347 + $0x2c] sm:$0xf] %v370
                  %v372 = vld [vmem:[%s346 + $0x60] sm:$0xf]
                  %373 = vst [vmem:[%s347 + $0x30] sm:$0xf] %v372
                  %v374 = vld [vmem:[%s346 + $0x68] sm:$0xf]
                  %375 = vst [vmem:[%s347 + $0x34] sm:$0xf] %v374
                  %v376 = vld [vmem:[%s346 + $0x70] sm:$0xf]
                  %377 = vst [vmem:[%s347 + $0x38] sm:$0xf] %v376
                  %v378 = vld [vmem:[%s346 + $0x78] sm:$0xf]
                  %379 = vst [vmem:[%s347 + $0x3c] sm:$0xf] %v378
                  %v380 = vld [vmem:[%s346 + $0x80] sm:$0xf]
                  %381 = vst [vmem:[%s347 + $0x40] sm:$0xf] %v380
                  %v382 = vld [vmem:[%s346 + $0x88] sm:$0xf]
                  %383 = vst [vmem:[%s347 + $0x44] sm:$0xf] %v382
                  %v384 = vld [vmem:[%s346 + $0x90] sm:$0xf]
                  %385 = vst [vmem:[%s347 + $0x48] sm:$0xf] %v384
                  %v386 = vld [vmem:[%s346 + $0x98] sm:$0xf]
                  %387 = vst [vmem:[%s347 + $0x4c] sm:$0xf] %v386
                  %v388 = vld [vmem:[%s346 + $0xa0] sm:$0xf]
                  %389 = vst [vmem:[%s347 + $0x50] sm:$0xf] %v388
                  %v390 = vld [vmem:[%s346 + $0xa8] sm:$0xf]
                  %391 = vst [vmem:[%s347 + $0x54] sm:$0xf] %v390
                  %v392 = vld [vmem:[%s346 + $0xb0] sm:$0xf]
                  %393 = vst [vmem:[%s347 + $0x58] sm:$0xf] %v392
                  %v394 = vld [vmem:[%s346 + $0xb8] sm:$0xf]
                  %395 = vst [vmem:[%s347 + $0x5c] sm:$0xf] %v394
                  %v396 = vld [vmem:[%s346 + $0xc0] sm:$0xf]
                  %397 = vst [vmem:[%s347 + $0x60] sm:$0xf] %v396
                  %v398 = vld [vmem:[%s346 + $0xc8] sm:$0xf]
                  %399 = vst [vmem:[%s347 + $0x64] sm:$0xf] %v398
                  %v400 = vld [vmem:[%s346 + $0xd0] sm:$0xf]
                  %401 = vst [vmem:[%s347 + $0x68] sm:$0xf] %v400
                  %v402 = vld [vmem:[%s346 + $0xd8] sm:$0xf]
                  %403 = vst [vmem:[%s347 + $0x6c] sm:$0xf] %v402
                  %v404 = vld [vmem:[%s346 + $0xe0] sm:$0xf]
                  %405 = vst [vmem:[%s347 + $0x70] sm:$0xf] %v404
                  %v406 = vld [vmem:[%s346 + $0xe8] sm:$0xf]
                  %407 = vst [vmem:[%s347 + $0x74] sm:$0xf] %v406
                  %v408 = vld [vmem:[%s346 + $0xf0] sm:$0xf]
                  %409 = vst [vmem:[%s347 + $0x78] sm:$0xf] %v408
                  %v410 = vld [vmem:[%s346 + $0xf8] sm:$0xf]
                  %411 = vst [vmem:[%s347 + $0x7c] sm:$0xf] %v410
                  %v412 = vld [vmem:[%s346 + $0x100] sm:$0xf]
                  %413 = vst [vmem:[%s347 + $0x80] sm:$0xf] %v412
                  %v414 = vld [vmem:[%s346 + $0x108] sm:$0xf]
                  %415 = vst [vmem:[%s347 + $0x84] sm:$0xf] %v414
                  %v416 = vld [vmem:[%s346 + $0x110] sm:$0xf]
                  %417 = vst [vmem:[%s347 + $0x88] sm:$0xf] %v416
                  %v418 = vld [vmem:[%s346 + $0x118] sm:$0xf]
                  %419 = vst [vmem:[%s347 + $0x8c] sm:$0xf] %v418
                $region75: #{concat_encoders_forward.1} parent=62 // loop_footer
                  %s345 = sadd.s32 1, %s341
                $region76: #{concat_encoders_forward.1} parent=62 // loop_footer_branch
                  %340 = sbr.rel target = $region72
                $region77: #{concat_encoders_forward.1} parent=62 // loop_exit
                  _
              $region63: #{concat_encoders_forward.1} parent=47 // pred_fallthru
                _
            $region48: #{concat_encoders_forward.1} parent=43 // pred_fallthru
              _
            // Predicated region
            $region49: #{concat_encoders_forward.1} parent=43 // pred_check
              _
            $region50: #{concat_encoders_forward.1} parent=43 // pred_check_branch
              %247 = sbr.rel (0) target = $region52
            $region51: #{concat_encoders_forward.1} parent=43 // pred_region
              loop: start=0, step=1, limit=1
              $region53: #{concat_encoders_forward.1} parent=51 // loop_pre_header
                _
              $region54: #{concat_encoders_forward.1} parent=51 // loop_header
                %s250 = sphi 0, %s254
                %p251 = scmp.ge.s32.totalorder %s250, 1
                %s255 = sphi %s241, %s241
                %s256 = sphi %s239, %s239
              $region55: #{concat_encoders_forward.1} parent=51 // loop_header_branch
                %253 = sbr.rel (%p251) target = $region59
              $region56: #{concat_encoders_forward.1} parent=51 // loop_body
                %v257 = vld [vmem:[%s255] sm:$0xf]
                %258 = vst [vmem:[%s256] sm:$0xf] %v257
                %v259 = vld [vmem:[%s255 + $0x8] sm:$0xf]
                %260 = vst [vmem:[%s256 + $0x4] sm:$0xf] %v259
                %v261 = vld [vmem:[%s255 + $0x10] sm:$0xf]
                %262 = vst [vmem:[%s256 + $0x8] sm:$0xf] %v261
                %v263 = vld [vmem:[%s255 + $0x18] sm:$0xf]
                %264 = vst [vmem:[%s256 + $0xc] sm:$0xf] %v263
                %v265 = vld [vmem:[%s255 + $0x20] sm:$0xf]
                %266 = vst [vmem:[%s256 + $0x10] sm:$0xf] %v265
                %v267 = vld [vmem:[%s255 + $0x28] sm:$0xf]
                %268 = vst [vmem:[%s256 + $0x14] sm:$0xf] %v267
                %v269 = vld [vmem:[%s255 + $0x30] sm:$0xf]
                %270 = vst [vmem:[%s256 + $0x18] sm:$0xf] %v269
                %v271 = vld [vmem:[%s255 + $0x38] sm:$0xf]
                %272 = vst [vmem:[%s256 + $0x1c] sm:$0xf] %v271
                %v273 = vld [vmem:[%s255 + $0x40] sm:$0xf]
                %274 = vst [vmem:[%s256 + $0x20] sm:$0xf] %v273
                %v275 = vld [vmem:[%s255 + $0x48] sm:$0xf]
                %276 = vst [vmem:[%s256 + $0x24] sm:$0xf] %v275
                %v277 = vld [vmem:[%s255 + $0x50] sm:$0xf]
                %278 = vst [vmem:[%s256 + $0x28] sm:$0xf] %v277
                %v279 = vld [vmem:[%s255 + $0x58] sm:$0xf]
                %280 = vst [vmem:[%s256 + $0x2c] sm:$0xf] %v279
                %v281 = vld [vmem:[%s255 + $0x60] sm:$0xf]
                %282 = vst [vmem:[%s256 + $0x30] sm:$0xf] %v281
                %v283 = vld [vmem:[%s255 + $0x68] sm:$0xf]
                %284 = vst [vmem:[%s256 + $0x34] sm:$0xf] %v283
                %v285 = vld [vmem:[%s255 + $0x70] sm:$0xf]
                %286 = vst [vmem:[%s256 + $0x38] sm:$0xf] %v285
                %v287 = vld [vmem:[%s255 + $0x78] sm:$0xf]
                %288 = vst [vmem:[%s256 + $0x3c] sm:$0xf] %v287
                %v289 = vld [vmem:[%s255 + $0x80] sm:$0xf]
                %290 = vst [vmem:[%s256 + $0x40] sm:$0xf] %v289
                %v291 = vld [vmem:[%s255 + $0x88] sm:$0xf]
                %292 = vst [vmem:[%s256 + $0x44] sm:$0xf] %v291
                %v293 = vld [vmem:[%s255 + $0x90] sm:$0xf]
                %294 = vst [vmem:[%s256 + $0x48] sm:$0xf] %v293
                %v295 = vld [vmem:[%s255 + $0x98] sm:$0xf]
                %296 = vst [vmem:[%s256 + $0x4c] sm:$0xf] %v295
                %v297 = vld [vmem:[%s255 + $0xa0] sm:$0xf]
                %298 = vst [vmem:[%s256 + $0x50] sm:$0xf] %v297
                %v299 = vld [vmem:[%s255 + $0xa8] sm:$0xf]
                %300 = vst [vmem:[%s256 + $0x54] sm:$0xf] %v299
                %v301 = vld [vmem:[%s255 + $0xb0] sm:$0xf]
                %302 = vst [vmem:[%s256 + $0x58] sm:$0xf] %v301
                %v303 = vld [vmem:[%s255 + $0xb8] sm:$0xf]
                %304 = vst [vmem:[%s256 + $0x5c] sm:$0xf] %v303
                %v305 = vld [vmem:[%s255 + $0xc0] sm:$0xf]
                %306 = vst [vmem:[%s256 + $0x60] sm:$0xf] %v305
                %v307 = vld [vmem:[%s255 + $0xc8] sm:$0xf]
                %308 = vst [vmem:[%s256 + $0x64] sm:$0xf] %v307
                %v309 = vld [vmem:[%s255 + $0xd0] sm:$0xf]
                %310 = vst [vmem:[%s256 + $0x68] sm:$0xf] %v309
                %v311 = vld [vmem:[%s255 + $0xd8] sm:$0xf]
                %312 = vst [vmem:[%s256 + $0x6c] sm:$0xf] %v311
                %v313 = vld [vmem:[%s255 + $0xe0] sm:$0xf]
                %314 = vst [vmem:[%s256 + $0x70] sm:$0xf] %v313
                %v315 = vld [vmem:[%s255 + $0xe8] sm:$0xf]
                %316 = vst [vmem:[%s256 + $0x74] sm:$0xf] %v315
                %v317 = vld [vmem:[%s255 + $0xf0] sm:$0xf]
                %318 = vst [vmem:[%s256 + $0x78] sm:$0xf] %v317
                %v319 = vld [vmem:[%s255 + $0xf8] sm:$0xf]
                %320 = vst [vmem:[%s256 + $0x7c] sm:$0xf] %v319
                %v321 = vld [vmem:[%s255 + $0x100] sm:$0xf]
                %322 = vst [vmem:[%s256 + $0x80] sm:$0xf] %v321
                %v323 = vld [vmem:[%s255 + $0x108] sm:$0xf]
                %324 = vst [vmem:[%s256 + $0x84] sm:$0xf] %v323
                %v325 = vld [vmem:[%s255 + $0x110] sm:$0xf]
                %326 = vst [vmem:[%s256 + $0x88] sm:$0xf] %v325
                %v327 = vld [vmem:[%s255 + $0x118] sm:$0xf]
                %328 = vst [vmem:[%s256 + $0x8c] sm:$0xf] %v327
              $region57: #{concat_encoders_forward.1} parent=51 // loop_footer
                %s254 = sadd.s32 1, %s250
              $region58: #{concat_encoders_forward.1} parent=51 // loop_footer_branch
                %249 = sbr.rel target = $region54
              $region59: #{concat_encoders_forward.1} parent=51 // loop_exit
                _
            $region52: #{concat_encoders_forward.1} parent=43 // pred_fallthru
              _
          $region44: #{concat_encoders_forward.1} parent=39 // pred_fallthru
            _
          %420 = vnop
        $region40: #{concat_encoders_forward.1} parent=35 // pred_fallthru
          _
        // Predicated region
        $region78: #{concat_encoders_forward.1} parent=35 // pred_check
          %p421 = pneg %p62
        $region79: #{concat_encoders_forward.1} parent=35 // pred_check_branch
          %423 = sbr.rel (%p421) target = $region81
        $region80: #{concat_encoders_forward.1} parent=35 // pred_region
          %p424 = scmp.lt.s32.totalorder %s16, 1
          %s425 = scalar_select %p424, %s16, 1
          %s426 = smul.addr %s425, 4
          %s427 = scalar_lea.vmem %s1, %s426
        $region81: #{concat_encoders_forward.1} parent=35 // pred_fallthru
          _
      $region36: #{concat_encoders_forward.1} parent=5 // pred_fallthru
        _
      %p428 = scmp.le.s32.totalorder 1, %s16
      %p429 = scmp.lt.s32.totalorder %s16, 3
      %p430 = pnand %p428, %p429
      %p431 = pneg %p430
      // Predicated region
      $region82: #{concat_encoders_forward.1} parent=5 // pred_check
        _
      $region83: #{concat_encoders_forward.1} parent=5 // pred_check_branch
        %433 = sbr.rel (%p430) target = $region85
      $region84: #{concat_encoders_forward.1} parent=5 // pred_region
        %s434 = ssub.s32 %s16, 1
        %s435 = sand.u32 %s29, 1
        %s436 = sand.u32 %s29, 1
        %s437 = smul.addr %s436, 144
        %s438 = scalar_lea.vmem [#allocation2], %s437
        // Predicated region
        $region86: #{concat_encoders_forward.1} parent=84 // pred_check
          %p439 = pneg %p42
        $region87: #{concat_encoders_forward.1} parent=84 // pred_check_branch
          %441 = sbr.rel (%p439) target = $region89
        $region88: #{concat_encoders_forward.1} parent=84 // pred_region
          _
        $region89: #{concat_encoders_forward.1} parent=84 // pred_fallthru
          _
        %s442 = sand.u32 %s29, 1
        %s443 = sand.u32 %s29, 1
        %s444 = smul.addr %s443, 144
        %s445 = scalar_lea.vmem [#allocation2], %s444
        %p446 = pneg %p42
        %p447 = pneg %p39
        %p448 = scmp.lt.s32.totalorder %s21, 1
        %s449 = scalar_select %p448, %s21, 1
        %s450 = smul.addr %s449, 4
        %s451 = scalar_lea.vmem %s1, %s450
        %p452 = pneg %p68
        %p453 = pneg %p65
        %p454 = pneg %p89
        %p455 = pneg %p86
        %p456 = pneg %p110
        %p457 = pneg %p107
        %p458 = pneg %p131
        %p459 = pneg %p128
        %p460 = pneg %p152
        %p461 = pneg %p149
        %p462 = pneg %p173
        %p463 = pneg %p170
        %p464 = pneg %p199
        %p465 = pneg %p196
        %s466 = sand.u32 %s186, 1
        %s467 = scalar_lea.sflag [#allocation4], %s466
        %s468 = sand.u32 %s186, 1
        %s469 = smul.addr %s468, 8
        %s470 = scalar_lea.vmem [#allocation3], %s469
        %p471 = scmp.lt.s32.totalorder %s21, 1
        %s472 = scalar_select %p471, %s21, 1
        %s473 = smul.addr %s472, 4
        %s474 = scalar_lea.vmem %s1, %s473
        %v476 = vld [vmem:[%s438] sm:$0xf]
        %v477 = vld [vmem:[%s2] sm:$0xf]
        %v478 = vld [vmem:[%s2 + $0x4] sm:$0xf]
        %v479 = vld [vmem:[%s2 + $0x8] sm:$0xf]
        %v480 = vld [vmem:[%s2 + $0xc] sm:$0xf]
        %v481 = vld [vmem:[%s2 + $0x10] sm:$0xf]
        %v482 = vld [vmem:[%s2 + $0x14] sm:$0xf]
        %v483 = vld [vmem:[%s2 + $0x18] sm:$0xf]
        %v484 = vld [vmem:[%s2 + $0x1c] sm:$0xf]
        %v485 = vld [vmem:[%s2 + $0x20] sm:$0xf]
        %s486 = scalar_lea.vmem %s438, 4 [#allocation2]
        %v487 = vld [vmem:[%s486] sm:$0xf]
        %s488 = scalar_lea.vmem %s2, 36
        %v489 = vld [vmem:[%s488] sm:$0xf]
        %v490 = vld [vmem:[%s488 + $0x4] sm:$0xf]
        %v491 = vld [vmem:[%s488 + $0x8] sm:$0xf]
        %v492 = vld [vmem:[%s488 + $0xc] sm:$0xf]
        %v493 = vld [vmem:[%s488 + $0x10] sm:$0xf]
        %v494 = vld [vmem:[%s488 + $0x14] sm:$0xf]
        %v495 = vld [vmem:[%s488 + $0x18] sm:$0xf]
        %v496 = vld [vmem:[%s488 + $0x1c] sm:$0xf]
        %v497 = vld [vmem:[%s488 + $0x20] sm:$0xf]
        %v507 = vunpack.c.l.b16 %v489
        %v508 = vunpack.c.l.b16 %v490
        %v509 = vunpack.c.l.b16 %v491
        %v510 = vunpack.c.l.b16 %v492
        %v511 = vunpack.c.l.b16 %v493
        %v512 = vunpack.c.l.b16 %v494
        %v513 = vunpack.c.l.b16 %v495
        %v514 = vunpack.c.l.b16 %v496
        %v515 = vunpack.c.l.b16 %v497
        %v516 = vpack.c.b16 %v508, %v507
        %v517 = vpack.c.b16 %v510, %v509
        %v518 = vpack.c.b16 %v512, %v511
        %v519 = vpack.c.b16 %v514, %v513
        %v520 = vpack.c.b16 %v515, %v515
        %vm525 = vcmask 588800
        %v527 = vsel %vm525, %v487, 0
        %vm529 = vcmask 1043456
        %v531 = vsel %vm529, %v520, 0
        %533 = vmatprep.subr.bf16.mxu0 0
        %534 = vmatpush1.bf16.msra.mxu0 %v516
        %535 = vmatprep.subr.bf16.mxu0 0
        %536 = vmatpush1.bf16.msra.mxu0 %v517
        %537 = vmatprep.subr.bf16.mxu0 0
        %538 = vmatpush1.bf16.msra.mxu0 %v518
        %539 = vmatprep.subr.bf16.mxu0 0
        %540 = vmatpush1.bf16.msra.mxu0 %v519
        %541 = vmatprep.subr.bf16.mxu0 0
        %542 = vmatpush1.bf16.msra.mxu0 %v531
        %543 = vmatprep.subr.bf16.mxu0 0
        %544 = vmatpush1.bf16.msra.mxu0 0
        %545 = vmatprep.subr.bf16.mxu0 0
        %546 = vmatpush1.bf16.msra.mxu0 0
        %547 = vmatprep.subr.bf16.mxu0 0
        %548 = vmatpush1.bf16.msra.mxu0 0
        %549 = vmatprep.subr.bf16.mxu0 0
        %550 = vmatpush1.bf16.msra.mxu0 0
        %551 = vmatprep.subr.bf16.mxu0 0
        %552 = vmatpush1.bf16.msra.mxu0 0
        %553 = vmatprep.subr.bf16.mxu0 0
        %554 = vmatpush1.bf16.msra.mxu0 0
        %555 = vmatprep.subr.bf16.mxu0 0
        %556 = vmatpush1.bf16.msra.mxu0 0
        %557 = vmatprep.subr.bf16.mxu0 0
        %558 = vmatpush1.bf16.msra.mxu0 0
        %559 = vmatprep.subr.bf16.mxu0 0
        %560 = vmatpush1.bf16.msra.mxu0 0
        %561 = vmatprep.subr.bf16.mxu0 0
        %562 = vmatpush1.bf16.msra.mxu0 0
        %563 = vmatprep.subr.bf16.mxu0 0
        %564 = vmatpush1.bf16.msra.mxu0 0
        %565 = vmatprep.mubr.bf16.mxu0 0
        %566 = vmatmul.mubr.bf16.gmra.mrb[0].mxu0 %v527
        %v567 = vpop.f32.mrb[0].mxu0
        %v568 = vadd.f32 0.0, %v567
        %v569 = vpop.f32.mrb[0].mxu0
        %v570 = vpop.f32.mrb[0].mxu0
        %v571 = vpop.f32.mrb[0].mxu0
        %572 = vdwg.mxu0
        %v582 = vunpack.c.l.b16 %v477
        %v583 = vunpack.c.l.b16 %v478
        %v584 = vunpack.c.l.b16 %v479
        %v585 = vunpack.c.l.b16 %v480
        %v586 = vunpack.c.l.b16 %v481
        %v587 = vunpack.c.l.b16 %v482
        %v588 = vunpack.c.l.b16 %v483
        %v589 = vunpack.c.l.b16 %v484
        %v590 = vunpack.c.l.b16 %v485
        %v591 = vpack.c.b16 %v583, %v582
        %v592 = vpack.c.b16 %v585, %v584
        %v593 = vpack.c.b16 %v587, %v586
        %v594 = vpack.c.b16 %v589, %v588
        %v595 = vpack.c.b16 %v590, %v590
        %v601 = vsel %vm525, %v476, 0
        %v604 = vsel %vm529, %v595, 0
        %606 = vmatprep.subr.bf16.mxu0 0
        %607 = vmatpush1.bf16.msra.mxu0 %v591
        %608 = vmatprep.subr.bf16.mxu0 0
        %609 = vmatpush1.bf16.msra.mxu0 %v592
        %610 = vmatprep.subr.bf16.mxu0 0
        %611 = vmatpush1.bf16.msra.mxu0 %v593
        %612 = vmatprep.subr.bf16.mxu0 0
        %613 = vmatpush1.bf16.msra.mxu0 %v594
        %614 = vmatprep.subr.bf16.mxu0 0
        %615 = vmatpush1.bf16.msra.mxu0 %v604
        %616 = vmatprep.subr.bf16.mxu0 0
        %617 = vmatpush1.bf16.msra.mxu0 0
        %618 = vmatprep.subr.bf16.mxu0 0
        %619 = vmatpush1.bf16.msra.mxu0 0
        %620 = vmatprep.subr.bf16.mxu0 0
        %621 = vmatpush1.bf16.msra.mxu0 0
        %622 = vmatprep.subr.bf16.mxu0 0
        %623 = vmatpush1.bf16.msra.mxu0 0
        %624 = vmatprep.subr.bf16.mxu0 0
        %625 = vmatpush1.bf16.msra.mxu0 0
        %626 = vmatprep.subr.bf16.mxu0 0
        %627 = vmatpush1.bf16.msra.mxu0 0
        %628 = vmatprep.subr.bf16.mxu0 0
        %629 = vmatpush1.bf16.msra.mxu0 0
        %630 = vmatprep.subr.bf16.mxu0 0
        %631 = vmatpush1.bf16.msra.mxu0 0
        %632 = vmatprep.subr.bf16.mxu0 0
        %633 = vmatpush1.bf16.msra.mxu0 0
        %634 = vmatprep.subr.bf16.mxu0 0
        %635 = vmatpush1.bf16.msra.mxu0 0
        %636 = vmatprep.subr.bf16.mxu0 0
        %637 = vmatpush1.bf16.msra.mxu0 0
        %638 = vmatprep.mubr.bf16.mxu0 0
        %639 = vmatmul.mubr.bf16.gmra.mrb[0].mxu0 %v601
        %v640 = vpop.f32.mrb[0].mxu0
        %v641 = vadd.f32 %v568, %v640
        %v642 = vpop.f32.mrb[0].mxu0
        %v643 = vpop.f32.mrb[0].mxu0
        %v644 = vpop.f32.mrb[0].mxu0
        %645 = vdwg.mxu0
        %s646 = scalar_lea.vmem %s438, 8 [#allocation2]
        %v647 = vld [vmem:[%s646] sm:$0xf]
        %s648 = scalar_lea.vmem %s2, 72
        %v649 = vld [vmem:[%s648] sm:$0xf]
        %v650 = vld [vmem:[%s648 + $0x4] sm:$0xf]
        %v651 = vld [vmem:[%s648 + $0x8] sm:$0xf]
        %v652 = vld [vmem:[%s648 + $0xc] sm:$0xf]
        %v653 = vld [vmem:[%s648 + $0x10] sm:$0xf]
        %v654 = vld [vmem:[%s648 + $0x14] sm:$0xf]
        %v655 = vld [vmem:[%s648 + $0x18] sm:$0xf]
        %v656 = vld [vmem:[%s648 + $0x1c] sm:$0xf]
        %v657 = vld [vmem:[%s648 + $0x20] sm:$0xf]
        %v667 = vunpack.c.l.b16 %v649
        %v668 = vunpack.c.l.b16 %v650
        %v669 = vunpack.c.l.b16 %v651
        %v670 = vunpack.c.l.b16 %v652
        %v671 = vunpack.c.l.b16 %v653
        %v672 = vunpack.c.l.b16 %v654
        %v673 = vunpack.c.l.b16 %v655
        %v674 = vunpack.c.l.b16 %v656
        %v675 = vunpack.c.l.b16 %v657
        %v676 = vpack.c.b16 %v668, %v667
        %v677 = vpack.c.b16 %v670, %v669
        %v678 = vpack.c.b16 %v672, %v671
        %v679 = vpack.c.b16 %v674, %v673
        %v680 = vpack.c.b16 %v675, %v675
        %v686 = vsel %vm525, %v647, 0
        %v689 = vsel %vm529, %v680, 0
        %691 = vmatprep.subr.bf16.mxu0 0
        %692 = vmatpush1.bf16.msra.mxu0 %v676
        %693 = vmatprep.subr.bf16.mxu0 0
        %694 = vmatpush1.bf16.msra.mxu0 %v677
        %695 = vmatprep.subr.bf16.mxu0 0
        %696 = vmatpush1.bf16.msra.mxu0 %v678
        %697 = vmatprep.subr.bf16.mxu0 0
        %698 = vmatpush1.bf16.msra.mxu0 %v679
        %699 = vmatprep.subr.bf16.mxu0 0
        %700 = vmatpush1.bf16.msra.mxu0 %v689
        %701 = vmatprep.subr.bf16.mxu0 0
        %702 = vmatpush1.bf16.msra.mxu0 0
        %703 = vmatprep.subr.bf16.mxu0 0
        %704 = vmatpush1.bf16.msra.mxu0 0
        %705 = vmatprep.subr.bf16.mxu0 0
        %706 = vmatpush1.bf16.msra.mxu0 0
        %707 = vmatprep.subr.bf16.mxu0 0
        %708 = vmatpush1.bf16.msra.mxu0 0
        %709 = vmatprep.subr.bf16.mxu0 0
        %710 = vmatpush1.bf16.msra.mxu0 0
        %711 = vmatprep.subr.bf16.mxu0 0
        %712 = vmatpush1.bf16.msra.mxu0 0
        %713 = vmatprep.subr.bf16.mxu0 0
        %714 = vmatpush1.bf16.msra.mxu0 0
        %715 = vmatprep.subr.bf16.mxu0 0
        %716 = vmatpush1.bf16.msra.mxu0 0
        %717 = vmatprep.subr.bf16.mxu0 0
        %718 = vmatpush1.bf16.msra.mxu0 0
        %719 = vmatprep.subr.bf16.mxu0 0
        %720 = vmatpush1.bf16.msra.mxu0 0
        %721 = vmatprep.subr.bf16.mxu0 0
        %722 = vmatpush1.bf16.msra.mxu0 0
        %723 = vmatprep.mubr.bf16.mxu0 0
        %724 = vmatmul.mubr.bf16.gmra.mrb[0].mxu0 %v686
        %v725 = vpop.f32.mrb[0].mxu0
        %v726 = vadd.f32 0.0, %v725
        %v727 = vpop.f32.mrb[0].mxu0
        %v728 = vpop.f32.mrb[0].mxu0
        %v729 = vpop.f32.mrb[0].mxu0
        %730 = vdwg.mxu0
        %v731 = vadd.f32 %v641, %v726
        %v732 = vld [vmem:[%s3] sm:$0x1]
        %v734 = vlaneseq
        %v735 = vshrl.u32 %v734, 7
        %v736 = vsub.s32 0, %v735
        %v737 = vrot.slane %v732, %v736
        %v739 = vadd.f32 %v731, %v737
        %v740 = vmax.f32 %v739, 0.0
        %v741 = vpack.c.bf16 %v740, %v740
        %v742 = vld [vmem:[%s4] sm:$0xf]
        %v743 = vld [vmem:[%s4 + $0x4] sm:$0xf]
        %v744 = vld [vmem:[%s4 + $0x8] sm:$0xf]
        %v745 = vld [vmem:[%s4 + $0xc] sm:$0xf]
        %v746 = vld [vmem:[%s4 + $0x10] sm:$0xf]
        %v747 = vld [vmem:[%s4 + $0x14] sm:$0xf]
        %v748 = vld [vmem:[%s4 + $0x18] sm:$0xf]
        %v749 = vld [vmem:[%s4 + $0x1c] sm:$0xf]
        %s750 = scalar_lea.vmem %s438, 72 [#allocation2]
        %v751 = vld [vmem:[%s750] sm:$0xf]
        %s752 = scalar_lea.vmem %s2, 108
        %v753 = vld [vmem:[%s752] sm:$0xf]
        %v754 = vld [vmem:[%s752 + $0x4] sm:$0xf]
        %v755 = vld [vmem:[%s752 + $0x8] sm:$0xf]
        %v756 = vld [vmem:[%s752 + $0xc] sm:$0xf]
        %v757 = vld [vmem:[%s752 + $0x10] sm:$0xf]
        %v758 = vld [vmem:[%s752 + $0x14] sm:$0xf]
        %v759 = vld [vmem:[%s752 + $0x18] sm:$0xf]
        %v760 = vld [vmem:[%s752 + $0x1c] sm:$0xf]
        %v761 = vld [vmem:[%s752 + $0x20] sm:$0xf]
        %s762 = scalar_lea.vmem %s438, 76 [#allocation2]
        %v763 = vld [vmem:[%s762] sm:$0xf]
        %s764 = scalar_lea.vmem %s2, 144
        %v765 = vld [vmem:[%s764] sm:$0xf]
        %v766 = vld [vmem:[%s764 + $0x4] sm:$0xf]
        %v767 = vld [vmem:[%s764 + $0x8] sm:$0xf]
        %v768 = vld [vmem:[%s764 + $0xc] sm:$0xf]
        %v769 = vld [vmem:[%s764 + $0x10] sm:$0xf]
        %v770 = vld [vmem:[%s764 + $0x14] sm:$0xf]
        %v771 = vld [vmem:[%s764 + $0x18] sm:$0xf]
        %v772 = vld [vmem:[%s764 + $0x1c] sm:$0xf]
        %v773 = vld [vmem:[%s764 + $0x20] sm:$0xf]
        %v783 = vunpack.c.l.b16 %v765
        %v784 = vunpack.c.l.b16 %v766
        %v785 = vunpack.c.l.b16 %v767
        %v786 = vunpack.c.l.b16 %v768
        %v787 = vunpack.c.l.b16 %v769
        %v788 = vunpack.c.l.b16 %v770
        %v789 = vunpack.c.l.b16 %v771
        %v790 = vunpack.c.l.b16 %v772
        %v791 = vunpack.c.l.b16 %v773
        %v792 = vpack.c.b16 %v784, %v783
        %v793 = vpack.c.b16 %v786, %v785
        %v794 = vpack.c.b16 %v788, %v787
        %v795 = vpack.c.b16 %v790, %v789
        %v796 = vpack.c.b16 %v791, %v791
        %v802 = vsel %vm525, %v763, 0
        %v805 = vsel %vm529, %v796, 0
        %807 = vmatprep.subr.bf16.mxu0 0
        %808 = vmatpush1.bf16.msra.mxu0 %v792
        %809 = vmatprep.subr.bf16.mxu0 0
        %810 = vmatpush1.bf16.msra.mxu0 %v793
        %811 = vmatprep.subr.bf16.mxu0 0
        %812 = vmatpush1.bf16.msra.mxu0 %v794
        %813 = vmatprep.subr.bf16.mxu0 0
        %814 = vmatpush1.bf16.msra.mxu0 %v795
        %815 = vmatprep.subr.bf16.mxu0 0
        %816 = vmatpush1.bf16.msra.mxu0 %v805
        %817 = vmatprep.subr.bf16.mxu0 0
        %818 = vmatpush1.bf16.msra.mxu0 0
        %819 = vmatprep.subr.bf16.mxu0 0
        %820 = vmatpush1.bf16.msra.mxu0 0
        %821 = vmatprep.subr.bf16.mxu0 0
        %822 = vmatpush1.bf16.msra.mxu0 0
        %823 = vmatprep.subr.bf16.mxu0 0
        %824 = vmatpush1.bf16.msra.mxu0 0
        %825 = vmatprep.subr.bf16.mxu0 0
        %826 = vmatpush1.bf16.msra.mxu0 0
        %827 = vmatprep.subr.bf16.mxu0 0
        %828 = vmatpush1.bf16.msra.mxu0 0
        %829 = vmatprep.subr.bf16.mxu0 0
        %830 = vmatpush1.bf16.msra.mxu0 0
        %831 = vmatprep.subr.bf16.mxu0 0
        %832 = vmatpush1.bf16.msra.mxu0 0
        %833 = vmatprep.subr.bf16.mxu0 0
        %834 = vmatpush1.bf16.msra.mxu0 0
        %835 = vmatprep.subr.bf16.mxu0 0
        %836 = vmatpush1.bf16.msra.mxu0 0
        %837 = vmatprep.subr.bf16.mxu0 0
        %838 = vmatpush1.bf16.msra.mxu0 0
        %839 = vmatprep.mubr.bf16.mxu0 0
        %840 = vmatmul.mubr.bf16.gmra.mrb[0].mxu0 %v802
        %v841 = vpop.f32.mrb[0].mxu0
        %v842 = vadd.f32 0.0, %v841
        %v843 = vpop.f32.mrb[0].mxu0
        %v844 = vpop.f32.mrb[0].mxu0
        %v845 = vpop.f32.mrb[0].mxu0
        %846 = vdwg.mxu0
        %v856 = vunpack.c.l.b16 %v753
        %v857 = vunpack.c.l.b16 %v754
        %v858 = vunpack.c.l.b16 %v755
        %v859 = vunpack.c.l.b16 %v756
        %v860 = vunpack.c.l.b16 %v757
        %v861 = vunpack.c.l.b16 %v758
        %v862 = vunpack.c.l.b16 %v759
        %v863 = vunpack.c.l.b16 %v760
        %v864 = vunpack.c.l.b16 %v761
        %v865 = vpack.c.b16 %v857, %v856
        %v866 = vpack.c.b16 %v859, %v858
        %v867 = vpack.c.b16 %v861, %v860
        %v868 = vpack.c.b16 %v863, %v862
        %v869 = vpack.c.b16 %v864, %v864
        %v875 = vsel %vm525, %v751, 0
        %v878 = vsel %vm529, %v869, 0
        %880 = vmatprep.subr.bf16.mxu0 0
        %881 = vmatpush1.bf16.msra.mxu0 %v865
        %882 = vmatprep.subr.bf16.mxu0 0
        %883 = vmatpush1.bf16.msra.mxu0 %v866
        %884 = vmatprep.subr.bf16.mxu0 0
        %885 = vmatpush1.bf16.msra.mxu0 %v867
        %886 = vmatprep.subr.bf16.mxu0 0
        %887 = vmatpush1.bf16.msra.mxu0 %v868
        %888 = vmatprep.subr.bf16.mxu0 0
        %889 = vmatpush1.bf16.msra.mxu0 %v878
        %890 = vmatprep.subr.bf16.mxu0 0
        %891 = vmatpush1.bf16.msra.mxu0 0
        %892 = vmatprep.subr.bf16.mxu0 0
        %893 = vmatpush1.bf16.msra.mxu0 0
        %894 = vmatprep.subr.bf16.mxu0 0
        %895 = vmatpush1.bf16.msra.mxu0 0
        %896 = vmatprep.subr.bf16.mxu0 0
        %897 = vmatpush1.bf16.msra.mxu0 0
        %898 = vmatprep.subr.bf16.mxu0 0
        %899 = vmatpush1.bf16.msra.mxu0 0
        %900 = vmatprep.subr.bf16.mxu0 0
        %901 = vmatpush1.bf16.msra.mxu0 0
        %902 = vmatprep.subr.bf16.mxu0 0
        %903 = vmatpush1.bf16.msra.mxu0 0
        %904 = vmatprep.subr.bf16.mxu0 0
        %905 = vmatpush1.bf16.msra.mxu0 0
        %906 = vmatprep.subr.bf16.mxu0 0
        %907 = vmatpush1.bf16.msra.mxu0 0
        %908 = vmatprep.subr.bf16.mxu0 0
        %909 = vmatpush1.bf16.msra.mxu0 0
        %910 = vmatprep.subr.bf16.mxu0 0
        %911 = vmatpush1.bf16.msra.mxu0 0
        %912 = vmatprep.mubr.bf16.mxu0 0
        %913 = vmatmul.mubr.bf16.gmra.mrb[0].mxu0 %v875
        %v914 = vpop.f32.mrb[0].mxu0
        %v915 = vadd.f32 %v842, %v914
        %v916 = vpop.f32.mrb[0].mxu0
        %v917 = vpop.f32.mrb[0].mxu0
        %v918 = vpop.f32.mrb[0].mxu0
        %919 = vdwg.mxu0
        %s920 = scalar_lea.vmem %s438, 80 [#allocation2]
        %v921 = vld [vmem:[%s920] sm:$0xf]
        %s922 = scalar_lea.vmem %s2, 180
        %v923 = vld [vmem:[%s922] sm:$0xf]
        %v924 = vld [vmem:[%s922 + $0x4] sm:$0xf]
        %v925 = vld [vmem:[%s922 + $0x8] sm:$0xf]
        %v926 = vld [vmem:[%s922 + $0xc] sm:$0xf]
        %v927 = vld [vmem:[%s922 + $0x10] sm:$0xf]
        %v928 = vld [vmem:[%s922 + $0x14] sm:$0xf]
        %v929 = vld [vmem:[%s922 + $0x18] sm:$0xf]
        %v930 = vld [vmem:[%s922 + $0x1c] sm:$0xf]
        %v931 = vld [vmem:[%s922 + $0x20] sm:$0xf]
        %v941 = vunpack.c.l.b16 %v923
        %v942 = vunpack.c.l.b16 %v924
        %v943 = vunpack.c.l.b16 %v925
        %v944 = vunpack.c.l.b16 %v926
        %v945 = vunpack.c.l.b16 %v927
        %v946 = vunpack.c.l.b16 %v928
        %v947 = vunpack.c.l.b16 %v929
        %v948 = vunpack.c.l.b16 %v930
        %v949 = vunpack.c.l.b16 %v931
        %v950 = vpack.c.b16 %v942, %v941
        %v951 = vpack.c.b16 %v944, %v943
        %v952 = vpack.c.b16 %v946, %v945
        %v953 = vpack.c.b16 %v948, %v947
        %v954 = vpack.c.b16 %v949, %v949
        %v960 = vsel %vm525, %v921, 0
        %v963 = vsel %vm529, %v954, 0
        %965 = vmatprep.subr.bf16.mxu0 0
        %966 = vmatpush1.bf16.msra.mxu0 %v950
        %967 = vmatprep.subr.bf16.mxu0 0
        %968 = vmatpush1.bf16.msra.mxu0 %v951
        %969 = vmatprep.subr.bf16.mxu0 0
        %970 = vmatpush1.bf16.msra.mxu0 %v952
        %971 = vmatprep.subr.bf16.mxu0 0
        %972 = vmatpush1.bf16.msra.mxu0 %v953
        %973 = vmatprep.subr.bf16.mxu0 0
        %974 = vmatpush1.bf16.msra.mxu0 %v963
        %975 = vmatprep.subr.bf16.mxu0 0
        %976 = vmatpush1.bf16.msra.mxu0 0
        %977 = vmatprep.subr.bf16.mxu0 0
        %978 = vmatpush1.bf16.msra.mxu0 0
        %979 = vmatprep.subr.bf16.mxu0 0
        %980 = vmatpush1.bf16.msra.mxu0 0
        %981 = vmatprep.subr.bf16.mxu0 0
        %982 = vmatpush1.bf16.msra.mxu0 0
        %983 = vmatprep.subr.bf16.mxu0 0
        %984 = vmatpush1.bf16.msra.mxu0 0
        %985 = vmatprep.subr.bf16.mxu0 0
        %986 = vmatpush1.bf16.msra.mxu0 0
        %987 = vmatprep.subr.bf16.mxu0 0
        %988 = vmatpush1.bf16.msra.mxu0 0
        %989 = vmatprep.subr.bf16.mxu0 0
        %990 = vmatpush1.bf16.msra.mxu0 0
        %991 = vmatprep.subr.bf16.mxu0 0
        %992 = vmatpush1.bf16.msra.mxu0 0
        %993 = vmatprep.subr.bf16.mxu0 0
        %994 = vmatpush1.bf16.msra.mxu0 0
        %995 = vmatprep.subr.bf16.mxu0 0
        %996 = vmatpush1.bf16.msra.mxu0 0
        %997 = vmatprep.mubr.bf16.mxu0 0
        %998 = vmatmul.mubr.bf16.gmra.mrb[0].mxu0 %v960
        %v999 = vpop.f32.mrb[0].mxu0
        %v1000 = vadd.f32 0.0, %v999
        %v1001 = vpop.f32.mrb[0].mxu0
        %v1002 = vpop.f32.mrb[0].mxu0
        %v1003 = vpop.f32.mrb[0].mxu0
        %1004 = vdwg.mxu0
        %v1005 = vadd.f32 %v915, %v1000
        %s1006 = scalar_lea.vmem %s3, 1
        %v1007 = vld [vmem:[%s1006] sm:$0x1]
        %v1009 = vlaneseq
        %v1010 = vshrl.u32 %v1009, 7
        %v1011 = vsub.s32 0, %v1010
        %v1012 = vrot.slane %v1007, %v1011
        %v1014 = vadd.f32 %v1005, %v1012
        %v1015 = vmax.f32 %v1014, 0.0
        %v1016 = vpack.c.bf16 %v1015, %v1015
        %s1017 = scalar_lea.vmem %s4, 256
        %v1018 = vld [vmem:[%s1017] sm:$0xf]
        %v1019 = vld [vmem:[%s1017 + $0x4] sm:$0xf]
        %v1020 = vld [vmem:[%s1017 + $0x8] sm:$0xf]
        %v1021 = vld [vmem:[%s1017 + $0xc] sm:$0xf]
        %v1022 = vld [vmem:[%s1017 + $0x10] sm:$0xf]
        %v1023 = vld [vmem:[%s1017 + $0x14] sm:$0xf]
        %v1024 = vld [vmem:[%s1017 + $0x18] sm:$0xf]
        %v1025 = vld [vmem:[%s1017 + $0x1c] sm:$0xf]
        %s1026 = scalar_lea.vmem %s438, 12 [#allocation2]
        %v1027 = vld [vmem:[%s1026] sm:$0xf]
        %v1029 = vsel %vm525, %v1027, 0
        %1031 = vmatprep.subr.bf16.mxu0 0
        %1032 = vmatpush1.bf16.msra.mxu0 %v516
        %1033 = vmatprep.subr.bf16.mxu0 0
        %1034 = vmatpush1.bf16.msra.mxu0 %v517
        %1035 = vmatprep.subr.bf16.mxu0 0
        %1036 = vmatpush1.bf16.msra.mxu0 %v518
        %1037 = vmatprep.subr.bf16.mxu0 0
        %1038 = vmatpush1.bf16.msra.mxu0 %v519
        %1039 = vmatprep.subr.bf16.mxu0 0
        %1040 = vmatpush1.bf16.msra.mxu0 %v531
        %1041 = vmatprep.subr.bf16.mxu0 0
        %1042 = vmatpush1.bf16.msra.mxu0 0
        %1043 = vmatprep.subr.bf16.mxu0 0
        %1044 = vmatpush1.bf16.msra.mxu0 0
        %1045 = vmatprep.subr.bf16.mxu0 0
        %1046 = vmatpush1.bf16.msra.mxu0 0
        %1047 = vmatprep.subr.bf16.mxu0 0
        %1048 = vmatpush1.bf16.msra.mxu0 0
        %1049 = vmatprep.subr.bf16.mxu0 0
        %1050 = vmatpush1.bf16.msra.mxu0 0
        %1051 = vmatprep.subr.bf16.mxu0 0
        %1052 = vmatpush1.bf16.msra.mxu0 0
        %1053 = vmatprep.subr.bf16.mxu0 0
        %1054 = vmatpush1.bf16.msra.mxu0 0
        %1055 = vmatprep.subr.bf16.mxu0 0
        %1056 = vmatpush1.bf16.msra.mxu0 0
        %1057 = vmatprep.subr.bf16.mxu0 0
        %1058 = vmatpush1.bf16.msra.mxu0 0
        %1059 = vmatprep.subr.bf16.mxu0 0
        %1060 = vmatpush1.bf16.msra.mxu0 0
        %1061 = vmatprep.subr.bf16.mxu0 0
        %1062 = vmatpush1.bf16.msra.mxu0 0
        %1063 = vmatprep.mubr.bf16.mxu0 0
        %1064 = vmatmul.mubr.bf16.gmra.mrb[0].mxu0 %v1029
        %v1065 = vpop.f32.mrb[0].mxu0
        %v1066 = vadd.f32 0.0, %v1065
        %v1067 = vpop.f32.mrb[0].mxu0
        %v1068 = vpop.f32.mrb[0].mxu0
        %v1069 = vpop.f32.mrb[0].mxu0
        %1070 = vdwg.mxu0
        %1071 = vmatprep.subr.bf16.mxu0 0
        %1072 = vmatpush1.bf16.msra.mxu0 %v591
        %1073 = vmatprep.subr.bf16.mxu0 0
        %1074 = vmatpush1.bf16.msra.mxu0 %v592
        %1075 = vmatprep.subr.bf16.mxu0 0
        %1076 = vmatpush1.bf16.msra.mxu0 %v593
        %1077 = vmatprep.subr.bf16.mxu0 0
        %1078 = vmatpush1.bf16.msra.mxu0 %v594
        %1079 = vmatprep.subr.bf16.mxu0 0
        %1080 = vmatpush1.bf16.msra.mxu0 %v604
        %1081 = vmatprep.subr.bf16.mxu0 0
        %1082 = vmatpush1.bf16.msra.mxu0 0
        %1083 = vmatprep.subr.bf16.mxu0 0
        %1084 = vmatpush1.bf16.msra.mxu0 0
        %1085 = vmatprep.subr.bf16.mxu0 0
        %1086 = vmatpush1.bf16.msra.mxu0 0
        %1087 = vmatprep.subr.bf16.mxu0 0
        %1088 = vmatpush1.bf16.msra.mxu0 0
        %1089 = vmatprep.subr.bf16.mxu0 0
        %1090 = vmatpush1.bf16.msra.mxu0 0
        %1091 = vmatprep.subr.bf16.mxu0 0
        %1092 = vmatpush1.bf16.msra.mxu0 0
        %1093 = vmatprep.subr.bf16.mxu0 0
        %1094 = vmatpush1.bf16.msra.mxu0 0
        %1095 = vmatprep.subr.bf16.mxu0 0
        %1096 = vmatpush1.bf16.msra.mxu0 0
        %1097 = vmatprep.subr.bf16.mxu0 0
        %1098 = vmatpush1.bf16.msra.mxu0 0
        %1099 = vmatprep.subr.bf16.mxu0 0
        %1100 = vmatpush1.bf16.msra.mxu0 0
        %1101 = vmatprep.subr.bf16.mxu0 0
        %1102 = vmatpush1.bf16.msra.mxu0 0
        %1103 = vmatprep.mubr.bf16.mxu0 0
        %1104 = vmatmul.mubr.bf16.gmra.mrb[0].mxu0 %v686
        %v1105 = vpop.f32.mrb[0].mxu0
        %v1106 = vadd.f32 %v1066, %v1105
        %v1107 = vpop.f32.mrb[0].mxu0
        %v1108 = vpop.f32.mrb[0].mxu0
        %v1109 = vpop.f32.mrb[0].mxu0
        %1110 = vdwg.mxu0
        %s1111 = scalar_lea.vmem %s438, 16 [#allocation2]
        %v1112 = vld [vmem:[%s1111] sm:$0xf]
        %v1114 = vsel %vm525, %v1112, 0
        %1116 = vmatprep.subr.bf16.mxu0 0
        %1117 = vmatpush1.bf16.msra.mxu0 %v676
        %1118 = vmatprep.subr.bf16.mxu0 0
        %1119 = vmatpush1.bf16.msra.mxu0 %v677
        %1120 = vmatprep.subr.bf16.mxu0 0
        %1121 = vmatpush1.bf16.msra.mxu0 %v678
        %1122 = vmatprep.subr.bf16.mxu0 0
        %1123 = vmatpush1.bf16.msra.mxu0 %v679
        %1124 = vmatprep.subr.bf16.mxu0 0
        %1125 = vmatpush1.bf16.msra.mxu0 %v689
        %1126 = vmatprep.subr.bf16.mxu0 0
        %1127 = vmatpush1.bf16.msra.mxu0 0
        %1128 = vmatprep.subr.bf16.mxu0 0
        %1129 = vmatpush1.bf16.msra.mxu0 0
        %1130 = vmatprep.subr.bf16.mxu0 0
        %1131 = vmatpush1.bf16.msra.mxu0 0
        %1132 = vmatprep.subr.bf16.mxu0 0
        %1133 = vmatpush1.bf16.msra.mxu0 0
        %1134 = vmatprep.subr.bf16.mxu0 0
        %1135 = vmatpush1.bf16.msra.mxu0 0
        %1136 = vmatprep.subr.bf16.mxu0 0
        %1137 = vmatpush1.bf16.msra.mxu0 0
        %1138 = vmatprep.subr.bf16.mxu0 0
        %1139 = vmatpush1.bf16.msra.mxu0 0
        %1140 = vmatprep.subr.bf16.mxu0 0
        %1141 = vmatpush1.bf16.msra.mxu0 0
        %1142 = vmatprep.subr.bf16.mxu0 0
        %1143 = vmatpush1.bf16.msra.mxu0 0
        %1144 = vmatprep.subr.bf16.mxu0 0
        %1145 = vmatpush1.bf16.msra.mxu0 0
        %1146 = vmatprep.subr.bf16.mxu0 0
        %1147 = vmatpush1.bf16.msra.mxu0 0
        %1148 = vmatprep.mubr.bf16.mxu0 0
        %1149 = vmatmul.mubr.bf16.gmra.mrb[0].mxu0 %v1114
        %v1150 = vpop.f32.mrb[0].mxu0
        %v1151 = vadd.f32 0.0, %v1150
        %v1152 = vpop.f32.mrb[0].mxu0
        %v1153 = vpop.f32.mrb[0].mxu0
        %v1154 = vpop.f32.mrb[0].mxu0
        %1155 = vdwg.mxu0
        %v1156 = vadd.f32 %v1106, %v1151
        %v1157 = vadd.f32 %v1156, %v737
        %v1158 = vmax.f32 %v1157, 0.0
        %v1159 = vpack.c.bf16 %v1158, %v1158
        %s1160 = scalar_lea.vmem %s4, 32
        %v1161 = vld [vmem:[%s1160] sm:$0xf]
        %v1162 = vld [vmem:[%s1160 + $0x4] sm:$0xf]
        %v1163 = vld [vmem:[%s1160 + $0x8] sm:$0xf]
        %v1164 = vld [vmem:[%s1160 + $0xc] sm:$0xf]
        %v1165 = vld [vmem:[%s1160 + $0x10] sm:$0xf]
        %v1166 = vld [vmem:[%s1160 + $0x14] sm:$0xf]
        %v1167 = vld [vmem:[%s1160 + $0x18] sm:$0xf]
        %v1168 = vld [vmem:[%s1160 + $0x1c] sm:$0xf]
        %v1177 = vunpack.c.l.b16 %v1161
        %v1178 = vunpack.c.l.b16 %v1162
        %v1179 = vunpack.c.l.b16 %v1163
        %v1180 = vunpack.c.l.b16 %v1164
        %v1181 = vunpack.c.l.b16 %v1165
        %v1182 = vunpack.c.l.b16 %v1166
        %v1183 = vunpack.c.l.b16 %v1167
        %v1184 = vunpack.c.l.b16 %v1168
        %v1185 = vpack.c.b16 %v1178, %v1177
        %v1186 = vpack.c.b16 %v1180, %v1179
        %v1187 = vpack.c.b16 %v1182, %v1181
        %v1188 = vpack.c.b16 %v1184, %v1183
        %vm1193 = vcmask 523264
        %v1195 = vsel %vm1193, %v1159, 0
        %1197 = vmatprep.subr.bf16.mxu0 0
        %1198 = vmatpush1.bf16.msra.mxu0 %v1185
        %1199 = vmatprep.subr.bf16.mxu0 0
        %1200 = vmatpush1.bf16.msra.mxu0 %v1186
        %1201 = vmatprep.subr.bf16.mxu0 0
        %1202 = vmatpush1.bf16.msra.mxu0 %v1187
        %1203 = vmatprep.subr.bf16.mxu0 0
        %1204 = vmatpush1.bf16.msra.mxu0 %v1188
        %1205 = vmatprep.subr.bf16.mxu0 0
        %1206 = vmatpush1.bf16.msra.mxu0 0
        %1207 = vmatprep.subr.bf16.mxu0 0
        %1208 = vmatpush1.bf16.msra.mxu0 0
        %1209 = vmatprep.subr.bf16.mxu0 0
        %1210 = vmatpush1.bf16.msra.mxu0 0
        %1211 = vmatprep.subr.bf16.mxu0 0
        %1212 = vmatpush1.bf16.msra.mxu0 0
        %1213 = vmatprep.subr.bf16.mxu0 0
        %1214 = vmatpush1.bf16.msra.mxu0 0
        %1215 = vmatprep.subr.bf16.mxu0 0
        %1216 = vmatpush1.bf16.msra.mxu0 0
        %1217 = vmatprep.subr.bf16.mxu0 0
        %1218 = vmatpush1.bf16.msra.mxu0 0
        %1219 = vmatprep.subr.bf16.mxu0 0
        %1220 = vmatpush1.bf16.msra.mxu0 0
        %1221 = vmatprep.subr.bf16.mxu0 0
        %1222 = vmatpush1.bf16.msra.mxu0 0
        %1223 = vmatprep.subr.bf16.mxu0 0
        %1224 = vmatpush1.bf16.msra.mxu0 0
        %1225 = vmatprep.subr.bf16.mxu0 0
        %1226 = vmatpush1.bf16.msra.mxu0 0
        %1227 = vmatprep.subr.bf16.mxu0 0
        %1228 = vmatpush1.bf16.msra.mxu0 0
        %1229 = vmatprep.mubr.bf16.mxu0 0
        %1230 = vmatmul.mubr.bf16.gmra.mrb[0].mxu0 %v1195
        %v1231 = vpop.f32.mrb[0].mxu0
        %v1232 = vadd.f32 0.0, %v1231
        %v1233 = vpop.f32.mrb[0].mxu0
        %v1234 = vpop.f32.mrb[0].mxu0
        %v1235 = vpop.f32.mrb[0].mxu0
        %1236 = vdwg.mxu0
        %v1245 = vunpack.c.l.b16 %v742
        %v1246 = vunpack.c.l.b16 %v743
        %v1247 = vunpack.c.l.b16 %v744
        %v1248 = vunpack.c.l.b16 %v745
        %v1249 = vunpack.c.l.b16 %v746
        %v1250 = vunpack.c.l.b16 %v747
        %v1251 = vunpack.c.l.b16 %v748
        %v1252 = vunpack.c.l.b16 %v749
        %v1253 = vpack.c.b16 %v1246, %v1245
        %v1254 = vpack.c.b16 %v1248, %v1247
        %v1255 = vpack.c.b16 %v1250, %v1249
        %v1256 = vpack.c.b16 %v1252, %v1251
        %v1262 = vsel %vm1193, %v741, 0
        %1264 = vmatprep.subr.bf16.mxu0 0
        %1265 = vmatpush1.bf16.msra.mxu0 %v1253
        %1266 = vmatprep.subr.bf16.mxu0 0
        %1267 = vmatpush1.bf16.msra.mxu0 %v1254
        %1268 = vmatprep.subr.bf16.mxu0 0
        %1269 = vmatpush1.bf16.msra.mxu0 %v1255
        %1270 = vmatprep.subr.bf16.mxu0 0
        %1271 = vmatpush1.bf16.msra.mxu0 %v1256
        %1272 = vmatprep.subr.bf16.mxu0 0
        %1273 = vmatpush1.bf16.msra.mxu0 0
        %1274 = vmatprep.subr.bf16.mxu0 0
        %1275 = vmatpush1.bf16.msra.mxu0 0
        %1276 = vmatprep.subr.bf16.mxu0 0
        %1277 = vmatpush1.bf16.msra.mxu0 0
        %1278 = vmatprep.subr.bf16.mxu0 0
        %1279 = vmatpush1.bf16.msra.mxu0 0
        %1280 = vmatprep.subr.bf16.mxu0 0
        %1281 = vmatpush1.bf16.msra.mxu0 0
        %1282 = vmatprep.subr.bf16.mxu0 0
        %1283 = vmatpush1.bf16.msra.mxu0 0
        %1284 = vmatprep.subr.bf16.mxu0 0
        %1285 = vmatpush1.bf16.msra.mxu0 0
        %1286 = vmatprep.subr.bf16.mxu0 0
        %1287 = vmatpush1.bf16.msra.mxu0 0
        %1288 = vmatprep.subr.bf16.mxu0 0
        %1289 = vmatpush1.bf16.msra.mxu0 0
        %1290 = vmatprep.subr.bf16.mxu0 0
        %1291 = vmatpush1.bf16.msra.mxu0 0
        %1292 = vmatprep.subr.bf16.mxu0 0
        %1293 = vmatpush1.bf16.msra.mxu0 0
        %1294 = vmatprep.subr.bf16.mxu0 0
        %1295 = vmatpush1.bf16.msra.mxu0 0
        %1296 = vmatprep.mubr.bf16.mxu0 0
        %1297 = vmatmul.mubr.bf16.gmra.mrb[0].mxu0 %v1262
        %v1298 = vpop.f32.mrb[0].mxu0
        %v1299 = vadd.f32 %v1232, %v1298
        %v1300 = vpop.f32.mrb[0].mxu0
        %v1301 = vpop.f32.mrb[0].mxu0
        %v1302 = vpop.f32.mrb[0].mxu0
        %1303 = vdwg.mxu0
        %s1304 = scalar_lea.vmem %s438, 84 [#allocation2]
        %v1305 = vld [vmem:[%s1304] sm:$0xf]
        %v1307 = vsel %vm525, %v1305, 0
        %1309 = vmatprep.subr.bf16.mxu0 0
        %1310 = vmatpush1.bf16.msra.mxu0 %v792
        %1311 = vmatprep.subr.bf16.mxu0 0
        %1312 = vmatpush1.bf16.msra.mxu0 %v793
        %1313 = vmatprep.subr.bf16.mxu0 0
        %1314 = vmatpush1.bf16.msra.mxu0 %v794
        %1315 = vmatprep.subr.bf16.mxu0 0
        %1316 = vmatpush1.bf16.msra.mxu0 %v795
        %1317 = vmatprep.subr.bf16.mxu0 0
        %1318 = vmatpush1.bf16.msra.mxu0 %v805
        %1319 = vmatprep.subr.bf16.mxu0 0
        %1320 = vmatpush1.bf16.msra.mxu0 0
        %1321 = vmatprep.subr.bf16.mxu0 0
        %1322 = vmatpush1.bf16.msra.mxu0 0
        %1323 = vmatprep.subr.bf16.mxu0 0
        %1324 = vmatpush1.bf16.msra.mxu0 0
        %1325 = vmatprep.subr.bf16.mxu0 0
        %1326 = vmatpush1.bf16.msra.mxu0 0
        %1327 = vmatprep.subr.bf16.mxu0 0
        %1328 = vmatpush1.bf16.msra.mxu0 0
        %1329 = vmatprep.subr.bf16.mxu0 0
        %1330 = vmatpush1.bf16.msra.mxu0 0
        %1331 = vmatprep.subr.bf16.mxu0 0
        %1332 = vmatpush1.bf16.msra.mxu0 0
        %1333 = vmatprep.subr.bf16.mxu0 0
        %1334 = vmatpush1.bf16.msra.mxu0 0
        %1335 = vmatprep.subr.bf16.mxu0 0
        %1336 = vmatpush1.bf16.msra.mxu0 0
        %1337 = vmatprep.subr.bf16.mxu0 0
        %1338 = vmatpush1.bf16.msra.mxu0 0
        %1339 = vmatprep.subr.bf16.mxu0 0
        %1340 = vmatpush1.bf16.msra.mxu0 0
        %1341 = vmatprep.mubr.bf16.mxu0 0
        %1342 = vmatmul.mubr.bf16.gmra.mrb[0].mxu0 %v1307
        %v1343 = vpop.f32.mrb[0].mxu0
        %v1344 = vadd.f32 0.0, %v1343
        %v1345 = vpop.f32.mrb[0].mxu0
        %v1346 = vpop.f32.mrb[0].mxu0
        %v1347 = vpop.f32.mrb[0].mxu0
        %1348 = vdwg.mxu0
        %1349 = vmatprep.subr.bf16.mxu0 0
        %1350 = vmatpush1.bf16.msra.mxu0 %v865
        %1351 = vmatprep.subr.bf16.mxu0 0
        %1352 = vmatpush1.bf16.msra.mxu0 %v866
        %1353 = vmatprep.subr.bf16.mxu0 0
        %1354 = vmatpush1.bf16.msra.mxu0 %v867
        %1355 = vmatprep.subr.bf16.mxu0 0
        %1356 = vmatpush1.bf16.msra.mxu0 %v868
        %1357 = vmatprep.subr.bf16.mxu0 0
        %1358 = vmatpush1.bf16.msra.mxu0 %v878
        %1359 = vmatprep.subr.bf16.mxu0 0
        %1360 = vmatpush1.bf16.msra.mxu0 0
        %1361 = vmatprep.subr.bf16.mxu0 0
        %1362 = vmatpush1.bf16.msra.mxu0 0
        %1363 = vmatprep.subr.bf16.mxu0 0
        %1364 = vmatpush1.bf16.msra.mxu0 0
        %1365 = vmatprep.subr.bf16.mxu0 0
        %1366 = vmatpush1.bf16.msra.mxu0 0
        %1367 = vmatprep.subr.bf16.mxu0 0
        %1368 = vmatpush1.bf16.msra.mxu0 0
        %1369 = vmatprep.subr.bf16.mxu0 0
        %1370 = vmatpush1.bf16.msra.mxu0 0
        %1371 = vmatprep.subr.bf16.mxu0 0
        %1372 = vmatpush1.bf16.msra.mxu0 0
        %1373 = vmatprep.subr.bf16.mxu0 0
        %1374 = vmatpush1.bf16.msra.mxu0 0
        %1375 = vmatprep.subr.bf16.mxu0 0
        %1376 = vmatpush1.bf16.msra.mxu0 0
        %1377 = vmatprep.subr.bf16.mxu0 0
        %1378 = vmatpush1.bf16.msra.mxu0 0
        %1379 = vmatprep.subr.bf16.mxu0 0
        %1380 = vmatpush1.bf16.msra.mxu0 0
        %1381 = vmatprep.mubr.bf16.mxu0 0
        %1382 = vmatmul.mubr.bf16.gmra.mrb[0].mxu0 %v960
        %v1383 = vpop.f32.mrb[0].mxu0
        %v1384 = vadd.f32 %v1344, %v1383
        %v1385 = vpop.f32.mrb[0].mxu0
        %v1386 = vpop.f32.mrb[0].mxu0
        %v1387 = vpop.f32.mrb[0].mxu0
        %1388 = vdwg.mxu0
        %s1389 = scalar_lea.vmem %s438, 88 [#allocation2]
        %v1390 = vld [vmem:[%s1389] sm:$0xf]
        %v1392 = vsel %vm525, %v1390, 0
        %1394 = vmatprep.subr.bf16.mxu0 0
        %1395 = vmatpush1.bf16.msra.mxu0 %v950
        %1396 = vmatprep.subr.bf16.mxu0 0
        %1397 = vmatpush1.bf16.msra.mxu0 %v951
        %1398 = vmatprep.subr.bf16.mxu0 0
        %1399 = vmatpush1.bf16.msra.mxu0 %v952
        %1400 = vmatprep.subr.bf16.mxu0 0
        %1401 = vmatpush1.bf16.msra.mxu0 %v953
        %1402 = vmatprep.subr.bf16.mxu0 0
        %1403 = vmatpush1.bf16.msra.mxu0 %v963
        %1404 = vmatprep.subr.bf16.mxu0 0
        %1405 = vmatpush1.bf16.msra.mxu0 0
        %1406 = vmatprep.subr.bf16.mxu0 0
        %1407 = vmatpush1.bf16.msra.mxu0 0
        %1408 = vmatprep.subr.bf16.mxu0 0
        %1409 = vmatpush1.bf16.msra.mxu0 0
        %1410 = vmatprep.subr.bf16.mxu0 0
        %1411 = vmatpush1.bf16.msra.mxu0 0
        %1412 = vmatprep.subr.bf16.mxu0 0
        %1413 = vmatpush1.bf16.msra.mxu0 0
        %1414 = vmatprep.subr.bf16.mxu0 0
        %1415 = vmatpush1.bf16.msra.mxu0 0
        %1416 = vmatprep.subr.bf16.mxu0 0
        %1417 = vmatpush1.bf16.msra.mxu0 0
        %1418 = vmatprep.subr.bf16.mxu0 0
        %1419 = vmatpush1.bf16.msra.mxu0 0
        %1420 = vmatprep.subr.bf16.mxu0 0
        %1421 = vmatpush1.bf16.msra.mxu0 0
        %1422 = vmatprep.subr.bf16.mxu0 0
        %1423 = vmatpush1.bf16.msra.mxu0 0
        %1424 = vmatprep.subr.bf16.mxu0 0
        %1425 = vmatpush1.bf16.msra.mxu0 0
        %1426 = vmatprep.mubr.bf16.mxu0 0
        %1427 = vmatmul.mubr.bf16.gmra.mrb[0].mxu0 %v1392
        %v1428 = vpop.f32.mrb[0].mxu0
        %v1429 = vadd.f32 0.0, %v1428
        %v1430 = vpop.f32.mrb[0].mxu0
        %v1431 = vpop.f32.mrb[0].mxu0
        %v1432 = vpop.f32.mrb[0].mxu0
        %1433 = vdwg.mxu0
        %v1434 = vadd.f32 %v1384, %v1429
        %v1435 = vadd.f32 %v1434, %v1012
        %v1436 = vmax.f32 %v1435, 0.0
        %v1437 = vpack.c.bf16 %v1436, %v1436
        %s1438 = scalar_lea.vmem %s4, 288
        %v1439 = vld [vmem:[%s1438] sm:$0xf]
        %v1440 = vld [vmem:[%s1438 + $0x4] sm:$0xf]
        %v1441 = vld [vmem:[%s1438 + $0x8] sm:$0xf]
        %v1442 = vld [vmem:[%s1438 + $0xc] sm:$0xf]
        %v1443 = vld [vmem:[%s1438 + $0x10] sm:$0xf]
        %v1444 = vld [vmem:[%s1438 + $0x14] sm:$0xf]
        %v1445 = vld [vmem:[%s1438 + $0x18] sm:$0xf]
        %v1446 = vld [vmem:[%s1438 + $0x1c] sm:$0xf]
        %v1455 = vunpack.c.l.b16 %v1439
        %v1456 = vunpack.c.l.b16 %v1440
        %v1457 = vunpack.c.l.b16 %v1441
        %v1458 = vunpack.c.l.b16 %v1442
        %v1459 = vunpack.c.l.b16 %v1443
        %v1460 = vunpack.c.l.b16 %v1444
        %v1461 = vunpack.c.l.b16 %v1445
        %v1462 = vunpack.c.l.b16 %v1446
        %v1463 = vpack.c.b16 %v1456, %v1455
        %v1464 = vpack.c.b16 %v1458, %v1457
        %v1465 = vpack.c.b16 %v1460, %v1459
        %v1466 = vpack.c.b16 %v1462, %v1461
        %v1472 = vsel %vm1193, %v1437, 0
        %1474 = vmatprep.subr.bf16.mxu0 0
        %1475 = vmatpush1.bf16.msra.mxu0 %v1463
        %1476 = vmatprep.subr.bf16.mxu0 0
        %1477 = vmatpush1.bf16.msra.mxu0 %v1464
        %1478 = vmatprep.subr.bf16.mxu0 0
        %1479 = vmatpush1.bf16.msra.mxu0 %v1465
        %1480 = vmatprep.subr.bf16.mxu0 0
        %1481 = vmatpush1.bf16.msra.mxu0 %v1466
        %1482 = vmatprep.subr.bf16.mxu0 0
        %1483 = vmatpush1.bf16.msra.mxu0 0
        %1484 = vmatprep.subr.bf16.mxu0 0
        %1485 = vmatpush1.bf16.msra.mxu0 0
        %1486 = vmatprep.subr.bf16.mxu0 0
        %1487 = vmatpush1.bf16.msra.mxu0 0
        %1488 = vmatprep.subr.bf16.mxu0 0
        %1489 = vmatpush1.bf16.msra.mxu0 0
        %1490 = vmatprep.subr.bf16.mxu0 0
        %1491 = vmatpush1.bf16.msra.mxu0 0
        %1492 = vmatprep.subr.bf16.mxu0 0
        %1493 = vmatpush1.bf16.msra.mxu0 0
        %1494 = vmatprep.subr.bf16.mxu0 0
        %1495 = vmatpush1.bf16.msra.mxu0 0
        %1496 = vmatprep.subr.bf16.mxu0 0
        %1497 = vmatpush1.bf16.msra.mxu0 0
        %1498 = vmatprep.subr.bf16.mxu0 0
        %1499 = vmatpush1.bf16.msra.mxu0 0
        %1500 = vmatprep.subr.bf16.mxu0 0
        %1501 = vmatpush1.bf16.msra.mxu0 0
        %1502 = vmatprep.subr.bf16.mxu0 0
        %1503 = vmatpush1.bf16.msra.mxu0 0
        %1504 = vmatprep.subr.bf16.mxu0 0
        %1505 = vmatpush1.bf16.msra.mxu0 0
        %1506 = vmatprep.mubr.bf16.mxu0 0
        %1507 = vmatmul.mubr.bf16.gmra.mrb[0].mxu0 %v1472
        %v1508 = vpop.f32.mrb[0].mxu0
        %v1509 = vadd.f32 0.0, %v1508
        %v1510 = vpop.f32.mrb[0].mxu0
        %v1511 = vpop.f32.mrb[0].mxu0
        %v1512 = vpop.f32.mrb[0].mxu0
        %1513 = vdwg.mxu0
        %v1522 = vunpack.c.l.b16 %v1018
        %v1523 = vunpack.c.l.b16 %v1019
        %v1524 = vunpack.c.l.b16 %v1020
        %v1525 = vunpack.c.l.b16 %v1021
        %v1526 = vunpack.c.l.b16 %v1022
        %v1527 = vunpack.c.l.b16 %v1023
        %v1528 = vunpack.c.l.b16 %v1024
        %v1529 = vunpack.c.l.b16 %v1025
        %v1530 = vpack.c.b16 %v1523, %v1522
        %v1531 = vpack.c.b16 %v1525, %v1524
        %v1532 = vpack.c.b16 %v1527, %v1526
        %v1533 = vpack.c.b16 %v1529, %v1528
        %v1539 = vsel %vm1193, %v1016, 0
        %1541 = vmatprep.subr.bf16.mxu0 0
        %1542 = vmatpush1.bf16.msra.mxu0 %v1530
        %1543 = vmatprep.subr.bf16.mxu0 0
        %1544 = vmatpush1.bf16.msra.mxu0 %v1531
        %1545 = vmatprep.subr.bf16.mxu0 0
        %1546 = vmatpush1.bf16.msra.mxu0 %v1532
        %1547 = vmatprep.subr.bf16.mxu0 0
        %1548 = vmatpush1.bf16.msra.mxu0 %v1533
        %1549 = vmatprep.subr.bf16.mxu0 0
        %1550 = vmatpush1.bf16.msra.mxu0 0
        %1551 = vmatprep.subr.bf16.mxu0 0
        %1552 = vmatpush1.bf16.msra.mxu0 0
        %1553 = vmatprep.subr.bf16.mxu0 0
        %1554 = vmatpush1.bf16.msra.mxu0 0
        %1555 = vmatprep.subr.bf16.mxu0 0
        %1556 = vmatpush1.bf16.msra.mxu0 0
        %1557 = vmatprep.subr.bf16.mxu0 0
        %1558 = vmatpush1.bf16.msra.mxu0 0
        %1559 = vmatprep.subr.bf16.mxu0 0
        %1560 = vmatpush1.bf16.msra.mxu0 0
        %1561 = vmatprep.subr.bf16.mxu0 0
        %1562 = vmatpush1.bf16.msra.mxu0 0
        %1563 = vmatprep.subr.bf16.mxu0 0
        %1564 = vmatpush1.bf16.msra.mxu0 0
        %1565 = vmatprep.subr.bf16.mxu0 0
        %1566 = vmatpush1.bf16.msra.mxu0 0
        %1567 = vmatprep.subr.bf16.mxu0 0
        %1568 = vmatpush1.bf16.msra.mxu0 0
        %1569 = vmatprep.subr.bf16.mxu0 0
        %1570 = vmatpush1.bf16.msra.mxu0 0
        %1571 = vmatprep.subr.bf16.mxu0 0
        %1572 = vmatpush1.bf16.msra.mxu0 0
        %1573 = vmatprep.mubr.bf16.mxu0 0
        %1574 = vmatmul.mubr.bf16.gmra.mrb[0].mxu0 %v1539
        %v1575 = vpop.f32.mrb[0].mxu0
        %v1576 = vadd.f32 %v1509, %v1575
        %v1577 = vpop.f32.mrb[0].mxu0
        %v1578 = vpop.f32.mrb[0].mxu0
        %v1579 = vpop.f32.mrb[0].mxu0
        %1580 = vdwg.mxu0
        %s1581 = scalar_lea.vmem %s438, 20 [#allocation2]
        %v1582 = vld [vmem:[%s1581] sm:$0xf]
        %v1584 = vsel %vm525, %v1582, 0
        %1586 = vmatprep.subr.bf16.mxu0 0
        %1587 = vmatpush1.bf16.msra.mxu0 %v516
        %1588 = vmatprep.subr.bf16.mxu0 0
        %1589 = vmatpush1.bf16.msra.mxu0 %v517
        %1590 = vmatprep.subr.bf16.mxu0 0
        %1591 = vmatpush1.bf16.msra.mxu0 %v518
        %1592 = vmatprep.subr.bf16.mxu0 0
        %1593 = vmatpush1.bf16.msra.mxu0 %v519
        %1594 = vmatprep.subr.bf16.mxu0 0
        %1595 = vmatpush1.bf16.msra.mxu0 %v531
        %1596 = vmatprep.subr.bf16.mxu0 0
        %1597 = vmatpush1.bf16.msra.mxu0 0
        %1598 = vmatprep.subr.bf16.mxu0 0
        %1599 = vmatpush1.bf16.msra.mxu0 0
        %1600 = vmatprep.subr.bf16.mxu0 0
        %1601 = vmatpush1.bf16.msra.mxu0 0
        %1602 = vmatprep.subr.bf16.mxu0 0
        %1603 = vmatpush1.bf16.msra.mxu0 0
        %1604 = vmatprep.subr.bf16.mxu0 0
        %1605 = vmatpush1.bf16.msra.mxu0 0
        %1606 = vmatprep.subr.bf16.mxu0 0
        %1607 = vmatpush1.bf16.msra.mxu0 0
        %1608 = vmatprep.subr.bf16.mxu0 0
        %1609 = vmatpush1.bf16.msra.mxu0 0
        %1610 = vmatprep.subr.bf16.mxu0 0
        %1611 = vmatpush1.bf16.msra.mxu0 0
        %1612 = vmatprep.subr.bf16.mxu0 0
        %1613 = vmatpush1.bf16.msra.mxu0 0
        %1614 = vmatprep.subr.bf16.mxu0 0
        %1615 = vmatpush1.bf16.msra.mxu0 0
        %1616 = vmatprep.subr.bf16.mxu0 0
        %1617 = vmatpush1.bf16.msra.mxu0 0
        %1618 = vmatprep.mubr.bf16.mxu0 0
        %1619 = vmatmul.mubr.bf16.gmra.mrb[0].mxu0 %v1584
        %v1620 = vpop.f32.mrb[0].mxu0
        %v1621 = vadd.f32 0.0, %v1620
        %v1622 = vpop.f32.mrb[0].mxu0
        %v1623 = vpop.f32.mrb[0].mxu0
        %v1624 = vpop.f32.mrb[0].mxu0
        %1625 = vdwg.mxu0
        %1626 = vmatprep.subr.bf16.mxu0 0
        %1627 = vmatpush1.bf16.msra.mxu0 %v591
        %1628 = vmatprep.subr.bf16.mxu0 0
        %1629 = vmatpush1.bf16.msra.mxu0 %v592
        %1630 = vmatprep.subr.bf16.mxu0 0
        %1631 = vmatpush1.bf16.msra.mxu0 %v593
        %1632 = vmatprep.subr.bf16.mxu0 0
        %1633 = vmatpush1.bf16.msra.mxu0 %v594
        %1634 = vmatprep.subr.bf16.mxu0 0
        %1635 = vmatpush1.bf16.msra.mxu0 %v604
        %1636 = vmatprep.subr.bf16.mxu0 0
        %1637 = vmatpush1.bf16.msra.mxu0 0
        %1638 = vmatprep.subr.bf16.mxu0 0
        %1639 = vmatpush1.bf16.msra.mxu0 0
        %1640 = vmatprep.subr.bf16.mxu0 0
        %1641 = vmatpush1.bf16.msra.mxu0 0
        %1642 = vmatprep.subr.bf16.mxu0 0
        %1643 = vmatpush1.bf16.msra.mxu0 0
        %1644 = vmatprep.subr.bf16.mxu0 0
        %1645 = vmatpush1.bf16.msra.mxu0 0
        %1646 = vmatprep.subr.bf16.mxu0 0
        %1647 = vmatpush1.bf16.msra.mxu0 0
        %1648 = vmatprep.subr.bf16.mxu0 0
        %1649 = vmatpush1.bf16.msra.mxu0 0
        %1650 = vmatprep.subr.bf16.mxu0 0
        %1651 = vmatpush1.bf16.msra.mxu0 0
        %1652 = vmatprep.subr.bf16.mxu0 0
        %1653 = vmatpush1.bf16.msra.mxu0 0
        %1654 = vmatprep.subr.bf16.mxu0 0
        %1655 = vmatpush1.bf16.msra.mxu0 0
        %1656 = vmatprep.subr.bf16.mxu0 0
        %1657 = vmatpush1.bf16.msra.mxu0 0
        %1658 = vmatprep.mubr.bf16.mxu0 0
        %1659 = vmatmul.mubr.bf16.gmra.mrb[0].mxu0 %v1114
        %v1660 = vpop.f32.mrb[0].mxu0
        %v1661 = vadd.f32 %v1621, %v1660
        %v1662 = vpop.f32.mrb[0].mxu0
        %v1663 = vpop.f32.mrb[0].mxu0
        %v1664 = vpop.f32.mrb[0].mxu0
        %1665 = vdwg.mxu0
        %s1666 = scalar_lea.vmem %s438, 24 [#allocation2]
        %v1667 = vld [vmem:[%s1666] sm:$0xf]
        %v1669 = vsel %vm525, %v1667, 0
        %1671 = vmatprep.subr.bf16.mxu0 0
        %1672 = vmatpush1.bf16.msra.mxu0 %v676
        %1673 = vmatprep.subr.bf16.mxu0 0
        %1674 = vmatpush1.bf16.msra.mxu0 %v677
        %1675 = vmatprep.subr.bf16.mxu0 0
        %1676 = vmatpush1.bf16.msra.mxu0 %v678
        %1677 = vmatprep.subr.bf16.mxu0 0
        %1678 = vmatpush1.bf16.msra.mxu0 %v679
        %1679 = vmatprep.subr.bf16.mxu0 0
        %1680 = vmatpush1.bf16.msra.mxu0 %v689
        %1681 = vmatprep.subr.bf16.mxu0 0
        %1682 = vmatpush1.bf16.msra.mxu0 0
        %1683 = vmatprep.subr.bf16.mxu0 0
        %1684 = vmatpush1.bf16.msra.mxu0 0
        %1685 = vmatprep.subr.bf16.mxu0 0
        %1686 = vmatpush1.bf16.msra.mxu0 0
        %1687 = vmatprep.subr.bf16.mxu0 0
        %1688 = vmatpush1.bf16.msra.mxu0 0
        %1689 = vmatprep.subr.bf16.mxu0 0
        %1690 = vmatpush1.bf16.msra.mxu0 0
        %1691 = vmatprep.subr.bf16.mxu0 0
        %1692 = vmatpush1.bf16.msra.mxu0 0
        %1693 = vmatprep.subr.bf16.mxu0 0
        %1694 = vmatpush1.bf16.msra.mxu0 0
        %1695 = vmatprep.subr.bf16.mxu0 0
        %1696 = vmatpush1.bf16.msra.mxu0 0
        %1697 = vmatprep.subr.bf16.mxu0 0
        %1698 = vmatpush1.bf16.msra.mxu0 0
        %1699 = vmatprep.subr.bf16.mxu0 0
        %1700 = vmatpush1.bf16.msra.mxu0 0
        %1701 = vmatprep.subr.bf16.mxu0 0
        %1702 = vmatpush1.bf16.msra.mxu0 0
        %1703 = vmatprep.mubr.bf16.mxu0 0
        %1704 = vmatmul.mubr.bf16.gmra.mrb[0].mxu0 %v1669
        %v1705 = vpop.f32.mrb[0].mxu0
        %v1706 = vadd.f32 0.0, %v1705
        %v1707 = vpop.f32.mrb[0].mxu0
        %v1708 = vpop.f32.mrb[0].mxu0
        %v1709 = vpop.f32.mrb[0].mxu0
        %1710 = vdwg.mxu0
        %v1711 = vadd.f32 %v1661, %v1706
        %v1712 = vadd.f32 %v1711, %v737
        %v1713 = vmax.f32 %v1712, 0.0
        %v1714 = vpack.c.bf16 %v1713, %v1713
        %s1715 = scalar_lea.vmem %s4, 64
        %v1716 = vld [vmem:[%s1715] sm:$0xf]
        %v1717 = vld [vmem:[%s1715 + $0x4] sm:$0xf]
        %v1718 = vld [vmem:[%s1715 + $0x8] sm:$0xf]
        %v1719 = vld [vmem:[%s1715 + $0xc] sm:$0xf]
        %v1720 = vld [vmem:[%s1715 + $0x10] sm:$0xf]
        %v1721 = vld [vmem:[%s1715 + $0x14] sm:$0xf]
        %v1722 = vld [vmem:[%s1715 + $0x18] sm:$0xf]
        %v1723 = vld [vmem:[%s1715 + $0x1c] sm:$0xf]
        %v1732 = vunpack.c.l.b16 %v1716
        %v1733 = vunpack.c.l.b16 %v1717
        %v1734 = vunpack.c.l.b16 %v1718
        %v1735 = vunpack.c.l.b16 %v1719
        %v1736 = vunpack.c.l.b16 %v1720
        %v1737 = vunpack.c.l.b16 %v1721
        %v1738 = vunpack.c.l.b16 %v1722
        %v1739 = vunpack.c.l.b16 %v1723
        %v1740 = vpack.c.b16 %v1733, %v1732
        %v1741 = vpack.c.b16 %v1735, %v1734
        %v1742 = vpack.c.b16 %v1737, %v1736
        %v1743 = vpack.c.b16 %v1739, %v1738
        %v1749 = vsel %vm1193, %v1714, 0
        %1751 = vmatprep.subr.bf16.mxu0 0
        %1752 = vmatpush1.bf16.msra.mxu0 %v1740
        %1753 = vmatprep.subr.bf16.mxu0 0
        %1754 = vmatpush1.bf16.msra.mxu0 %v1741
        %1755 = vmatprep.subr.bf16.mxu0 0
        %1756 = vmatpush1.bf16.msra.mxu0 %v1742
        %1757 = vmatprep.subr.bf16.mxu0 0
        %1758 = vmatpush1.bf16.msra.mxu0 %v1743
        %1759 = vmatprep.subr.bf16.mxu0 0
        %1760 = vmatpush1.bf16.msra.mxu0 0
        %1761 = vmatprep.subr.bf16.mxu0 0
        %1762 = vmatpush1.bf16.msra.mxu0 0
        %1763 = vmatprep.subr.bf16.mxu0 0
        %1764 = vmatpush1.bf16.msra.mxu0 0
        %1765 = vmatprep.subr.bf16.mxu0 0
        %1766 = vmatpush1.bf16.msra.mxu0 0
        %1767 = vmatprep.subr.bf16.mxu0 0
        %1768 = vmatpush1.bf16.msra.mxu0 0
        %1769 = vmatprep.subr.bf16.mxu0 0
        %1770 = vmatpush1.bf16.msra.mxu0 0
        %1771 = vmatprep.subr.bf16.mxu0 0
        %1772 = vmatpush1.bf16.msra.mxu0 0
        %1773 = vmatprep.subr.bf16.mxu0 0
        %1774 = vmatpush1.bf16.msra.mxu0 0
        %1775 = vmatprep.subr.bf16.mxu0 0
        %1776 = vmatpush1.bf16.msra.mxu0 0
        %1777 = vmatprep.subr.bf16.mxu0 0
        %1778 = vmatpush1.bf16.msra.mxu0 0
        %1779 = vmatprep.subr.bf16.mxu0 0
        %1780 = vmatpush1.bf16.msra.mxu0 0
        %1781 = vmatprep.subr.bf16.mxu0 0
        %1782 = vmatpush1.bf16.msra.mxu0 0
        %1783 = vmatprep.mubr.bf16.mxu0 0
        %1784 = vmatmul.mubr.bf16.gmra.mrb[0].mxu0 %v1749
        %v1785 = vpop.f32.mrb[0].mxu0
        %v1786 = vadd.f32 0.0, %v1785
        %v1787 = vpop.f32.mrb[0].mxu0
        %v1788 = vpop.f32.mrb[0].mxu0
        %v1789 = vpop.f32.mrb[0].mxu0
        %1790 = vdwg.mxu0
        %v1791 = vadd.f32 %v1299, %v1786
        %s1792 = scalar_lea.vmem %s438, 92 [#allocation2]
        %v1793 = vld [vmem:[%s1792] sm:$0xf]
        %v1795 = vsel %vm525, %v1793, 0
        %1797 = vmatprep.subr.bf16.mxu0 0
        %1798 = vmatpush1.bf16.msra.mxu0 %v792
        %1799 = vmatprep.subr.bf16.mxu0 0
        %1800 = vmatpush1.bf16.msra.mxu0 %v793
        %1801 = vmatprep.subr.bf16.mxu0 0
        %1802 = vmatpush1.bf16.msra.mxu0 %v794
        %1803 = vmatprep.subr.bf16.mxu0 0
        %1804 = vmatpush1.bf16.msra.mxu0 %v795
        %1805 = vmatprep.subr.bf16.mxu0 0
        %1806 = vmatpush1.bf16.msra.mxu0 %v805
        %1807 = vmatprep.subr.bf16.mxu0 0
        %1808 = vmatpush1.bf16.msra.mxu0 0
        %1809 = vmatprep.subr.bf16.mxu0 0
        %1810 = vmatpush1.bf16.msra.mxu0 0
        %1811 = vmatprep.subr.bf16.mxu0 0
        %1812 = vmatpush1.bf16.msra.mxu0 0
        %1813 = vmatprep.subr.bf16.mxu0 0
        %1814 = vmatpush1.bf16.msra.mxu0 0
        %1815 = vmatprep.subr.bf16.mxu0 0
        %1816 = vmatpush1.bf16.msra.mxu0 0
        %1817 = vmatprep.subr.bf16.mxu0 0
        %1818 = vmatpush1.bf16.msra.mxu0 0
        %1819 = vmatprep.subr.bf16.mxu0 0
        %1820 = vmatpush1.bf16.msra.mxu0 0
        %1821 = vmatprep.subr.bf16.mxu0 0
        %1822 = vmatpush1.bf16.msra.mxu0 0
        %1823 = vmatprep.subr.bf16.mxu0 0
        %1824 = vmatpush1.bf16.msra.mxu0 0
        %1825 = vmatprep.subr.bf16.mxu0 0
        %1826 = vmatpush1.bf16.msra.mxu0 0
        %1827 = vmatprep.subr.bf16.mxu0 0
        %1828 = vmatpush1.bf16.msra.mxu0 0
        %1829 = vmatprep.mubr.bf16.mxu0 0
        %1830 = vmatmul.mubr.bf16.gmra.mrb[0].mxu0 %v1795
        %v1831 = vpop.f32.mrb[0].mxu0
        %v1832 = vadd.f32 0.0, %v1831
        %v1833 = vpop.f32.mrb[0].mxu0
        %v1834 = vpop.f32.mrb[0].mxu0
        %v1835 = vpop.f32.mrb[0].mxu0
        %1836 = vdwg.mxu0
        %1837 = vmatprep.subr.bf16.mxu0 0
        %1838 = vmatpush1.bf16.msra.mxu0 %v865
        %1839 = vmatprep.subr.bf16.mxu0 0
        %1840 = vmatpush1.bf16.msra.mxu0 %v866
        %1841 = vmatprep.subr.bf16.mxu0 0
        %1842 = vmatpush1.bf16.msra.mxu0 %v867
        %1843 = vmatprep.subr.bf16.mxu0 0
        %1844 = vmatpush1.bf16.msra.mxu0 %v868
        %1845 = vmatprep.subr.bf16.mxu0 0
        %1846 = vmatpush1.bf16.msra.mxu0 %v878
        %1847 = vmatprep.subr.bf16.mxu0 0
        %1848 = vmatpush1.bf16.msra.mxu0 0
        %1849 = vmatprep.subr.bf16.mxu0 0
        %1850 = vmatpush1.bf16.msra.mxu0 0
        %1851 = vmatprep.subr.bf16.mxu0 0
        %1852 = vmatpush1.bf16.msra.mxu0 0
        %1853 = vmatprep.subr.bf16.mxu0 0
        %1854 = vmatpush1.bf16.msra.mxu0 0
        %1855 = vmatprep.subr.bf16.mxu0 0
        %1856 = vmatpush1.bf16.msra.mxu0 0
        %1857 = vmatprep.subr.bf16.mxu0 0
        %1858 = vmatpush1.bf16.msra.mxu0 0
        %1859 = vmatprep.subr.bf16.mxu0 0
        %1860 = vmatpush1.bf16.msra.mxu0 0
        %1861 = vmatprep.subr.bf16.mxu0 0
        %1862 = vmatpush1.bf16.msra.mxu0 0
        %1863 = vmatprep.subr.bf16.mxu0 0
        %1864 = vmatpush1.bf16.msra.mxu0 0
        %1865 = vmatprep.subr.bf16.mxu0 0
        %1866 = vmatpush1.bf16.msra.mxu0 0
        %1867 = vmatprep.subr.bf16.mxu0 0
        %1868 = vmatpush1.bf16.msra.mxu0 0
        %1869 = vmatprep.mubr.bf16.mxu0 0
        %1870 = vmatmul.mubr.bf16.gmra.mrb[0].mxu0 %v1392
        %v1871 = vpop.f32.mrb[0].mxu0
        %v1872 = vadd.f32 %v1832, %v1871
        %v1873 = vpop.f32.mrb[0].mxu0
        %v1874 = vpop.f32.mrb[0].mxu0
        %v1875 = vpop.f32.mrb[0].mxu0
        %1876 = vdwg.mxu0
        %s1877 = scalar_lea.vmem %s438, 96 [#allocation2]
        %v1878 = vld [vmem:[%s1877] sm:$0xf]
        %v1880 = vsel %vm525, %v1878, 0
        %1882 = vmatprep.subr.bf16.mxu0 0
        %1883 = vmatpush1.bf16.msra.mxu0 %v950
        %1884 = vmatprep.subr.bf16.mxu0 0
        %1885 = vmatpush1.bf16.msra.mxu0 %v951
        %1886 = vmatprep.subr.bf16.mxu0 0
        %1887 = vmatpush1.bf16.msra.mxu0 %v952
        %1888 = vmatprep.subr.bf16.mxu0 0
        %1889 = vmatpush1.bf16.msra.mxu0 %v953
        %1890 = vmatprep.subr.bf16.mxu0 0
        %1891 = vmatpush1.bf16.msra.mxu0 %v963
        %1892 = vmatprep.subr.bf16.mxu0 0
        %1893 = vmatpush1.bf16.msra.mxu0 0
        %1894 = vmatprep.subr.bf16.mxu0 0
        %1895 = vmatpush1.bf16.msra.mxu0 0
        %1896 = vmatprep.subr.bf16.mxu0 0
        %1897 = vmatpush1.bf16.msra.mxu0 0
        %1898 = vmatprep.subr.bf16.mxu0 0
        %1899 = vmatpush1.bf16.msra.mxu0 0
        %1900 = vmatprep.subr.bf16.mxu0 0
        %1901 = vmatpush1.bf16.msra.mxu0 0
        %1902 = vmatprep.subr.bf16.mxu0 0
        %1903 = vmatpush1.bf16.msra.mxu0 0
        %1904 = vmatprep.subr.bf16.mxu0 0
        %1905 = vmatpush1.bf16.msra.mxu0 0
        %1906 = vmatprep.subr.bf16.mxu0 0
        %1907 = vmatpush1.bf16.msra.mxu0 0
        %1908 = vmatprep.subr.bf16.mxu0 0
        %1909 = vmatpush1.bf16.msra.mxu0 0
        %1910 = vmatprep.subr.bf16.mxu0 0
        %1911 = vmatpush1.bf16.msra.mxu0 0
        %1912 = vmatprep.subr.bf16.mxu0 0
        %1913 = vmatpush1.bf16.msra.mxu0 0
        %1914 = vmatprep.mubr.bf16.mxu0 0
        %1915 = vmatmul.mubr.bf16.gmra.mrb[0].mxu0 %v1880
        %v1916 = vpop.f32.mrb[0].mxu0
        %v1917 = vadd.f32 0.0, %v1916
        %v1918 = vpop.f32.mrb[0].mxu0
        %v1919 = vpop.f32.mrb[0].mxu0
        %v1920 = vpop.f32.mrb[0].mxu0
        %1921 = vdwg.mxu0
        %v1922 = vadd.f32 %v1872, %v1917
        %v1923 = vadd.f32 %v1922, %v1012
        %v1924 = vmax.f32 %v1923, 0.0
        %v1925 = vpack.c.bf16 %v1924, %v1924
        %s1926 = scalar_lea.vmem %s4, 320
        %v1927 = vld [vmem:[%s1926] sm:$0xf]
        %v1928 = vld [vmem:[%s1926 + $0x4] sm:$0xf]
        %v1929 = vld [vmem:[%s1926 + $0x8] sm:$0xf]
        %v1930 = vld [vmem:[%s1926 + $0xc] sm:$0xf]
        %v1931 = vld [vmem:[%s1926 + $0x10] sm:$0xf]
        %v1932 = vld [vmem:[%s1926 + $0x14] sm:$0xf]
        %v1933 = vld [vmem:[%s1926 + $0x18] sm:$0xf]
        %v1934 = vld [vmem:[%s1926 + $0x1c] sm:$0xf]
        %v1943 = vunpack.c.l.b16 %v1927
        %v1944 = vunpack.c.l.b16 %v1928
        %v1945 = vunpack.c.l.b16 %v1929
        %v1946 = vunpack.c.l.b16 %v1930
        %v1947 = vunpack.c.l.b16 %v1931
        %v1948 = vunpack.c.l.b16 %v1932
        %v1949 = vunpack.c.l.b16 %v1933
        %v1950 = vunpack.c.l.b16 %v1934
        %v1951 = vpack.c.b16 %v1944, %v1943
        %v1952 = vpack.c.b16 %v1946, %v1945
        %v1953 = vpack.c.b16 %v1948, %v1947
        %v1954 = vpack.c.b16 %v1950, %v1949
        %v1960 = vsel %vm1193, %v1925, 0
        %1962 = vmatprep.subr.bf16.mxu0 0
        %1963 = vmatpush1.bf16.msra.mxu0 %v1951
        %1964 = vmatprep.subr.bf16.mxu0 0
        %1965 = vmatpush1.bf16.msra.mxu0 %v1952
        %1966 = vmatprep.subr.bf16.mxu0 0
        %1967 = vmatpush1.bf16.msra.mxu0 %v1953
        %1968 = vmatprep.subr.bf16.mxu0 0
        %1969 = vmatpush1.bf16.msra.mxu0 %v1954
        %1970 = vmatprep.subr.bf16.mxu0 0
        %1971 = vmatpush1.bf16.msra.mxu0 0
        %1972 = vmatprep.subr.bf16.mxu0 0
        %1973 = vmatpush1.bf16.msra.mxu0 0
        %1974 = vmatprep.subr.bf16.mxu0 0
        %1975 = vmatpush1.bf16.msra.mxu0 0
        %1976 = vmatprep.subr.bf16.mxu0 0
        %1977 = vmatpush1.bf16.msra.mxu0 0
        %1978 = vmatprep.subr.bf16.mxu0 0
        %1979 = vmatpush1.bf16.msra.mxu0 0
        %1980 = vmatprep.subr.bf16.mxu0 0
        %1981 = vmatpush1.bf16.msra.mxu0 0
        %1982 = vmatprep.subr.bf16.mxu0 0
        %1983 = vmatpush1.bf16.msra.mxu0 0
        %1984 = vmatprep.subr.bf16.mxu0 0
        %1985 = vmatpush1.bf16.msra.mxu0 0
        %1986 = vmatprep.subr.bf16.mxu0 0
        %1987 = vmatpush1.bf16.msra.mxu0 0
        %1988 = vmatprep.subr.bf16.mxu0 0
        %1989 = vmatpush1.bf16.msra.mxu0 0
        %1990 = vmatprep.subr.bf16.mxu0 0
        %1991 = vmatpush1.bf16.msra.mxu0 0
        %1992 = vmatprep.subr.bf16.mxu0 0
        %1993 = vmatpush1.bf16.msra.mxu0 0
        %1994 = vmatprep.mubr.bf16.mxu0 0
        %1995 = vmatmul.mubr.bf16.gmra.mrb[0].mxu0 %v1960
        %v1996 = vpop.f32.mrb[0].mxu0
        %v1997 = vadd.f32 0.0, %v1996
        %v1998 = vpop.f32.mrb[0].mxu0
        %v1999 = vpop.f32.mrb[0].mxu0
        %v2000 = vpop.f32.mrb[0].mxu0
        %2001 = vdwg.mxu0
        %v2002 = vadd.f32 %v1576, %v1997
        %s2003 = scalar_lea.vmem %s438, 28 [#allocation2]
        %v2004 = vld [vmem:[%s2003] sm:$0xf]
        %v2006 = vsel %vm525, %v2004, 0
        %2008 = vmatprep.subr.bf16.mxu0 0
        %2009 = vmatpush1.bf16.msra.mxu0 %v516
        %2010 = vmatprep.subr.bf16.mxu0 0
        %2011 = vmatpush1.bf16.msra.mxu0 %v517
        %2012 = vmatprep.subr.bf16.mxu0 0
        %2013 = vmatpush1.bf16.msra.mxu0 %v518
        %2014 = vmatprep.subr.bf16.mxu0 0
        %2015 = vmatpush1.bf16.msra.mxu0 %v519
        %2016 = vmatprep.subr.bf16.mxu0 0
        %2017 = vmatpush1.bf16.msra.mxu0 %v531
        %2018 = vmatprep.subr.bf16.mxu0 0
        %2019 = vmatpush1.bf16.msra.mxu0 0
        %2020 = vmatprep.subr.bf16.mxu0 0
        %2021 = vmatpush1.bf16.msra.mxu0 0
        %2022 = vmatprep.subr.bf16.mxu0 0
        %2023 = vmatpush1.bf16.msra.mxu0 0
        %2024 = vmatprep.subr.bf16.mxu0 0
        %2025 = vmatpush1.bf16.msra.mxu0 0
        %2026 = vmatprep.subr.bf16.mxu0 0
        %2027 = vmatpush1.bf16.msra.mxu0 0
        %2028 = vmatprep.subr.bf16.mxu0 0
        %2029 = vmatpush1.bf16.msra.mxu0 0
        %2030 = vmatprep.subr.bf16.mxu0 0
        %2031 = vmatpush1.bf16.msra.mxu0 0
        %2032 = vmatprep.subr.bf16.mxu0 0
        %2033 = vmatpush1.bf16.msra.mxu0 0
        %2034 = vmatprep.subr.bf16.mxu0 0
        %2035 = vmatpush1.bf16.msra.mxu0 0
        %2036 = vmatprep.subr.bf16.mxu0 0
        %2037 = vmatpush1.bf16.msra.mxu0 0
        %2038 = vmatprep.subr.bf16.mxu0 0
        %2039 = vmatpush1.bf16.msra.mxu0 0
        %2040 = vmatprep.mubr.bf16.mxu0 0
        %2041 = vmatmul.mubr.bf16.gmra.mrb[0].mxu0 %v2006
        %v2042 = vpop.f32.mrb[0].mxu0
        %v2043 = vadd.f32 0.0, %v2042
        %v2044 = vpop.f32.mrb[0].mxu0
        %v2045 = vpop.f32.mrb[0].mxu0
        %v2046 = vpop.f32.mrb[0].mxu0
        %2047 = vdwg.mxu0
        %2048 = vmatprep.subr.bf16.mxu0 0
        %2049 = vmatpush1.bf16.msra.mxu0 %v591
        %2050 = vmatprep.subr.bf16.mxu0 0
        %2051 = vmatpush1.bf16.msra.mxu0 %v592
        %2052 = vmatprep.subr.bf16.mxu0 0
        %2053 = vmatpush1.bf16.msra.mxu0 %v593
        %2054 = vmatprep.subr.bf16.mxu0 0
        %2055 = vmatpush1.bf16.msra.mxu0 %v594
        %2056 = vmatprep.subr.bf16.mxu0 0
        %2057 = vmatpush1.bf16.msra.mxu0 %v604
        %2058 = vmatprep.subr.bf16.mxu0 0
        %2059 = vmatpush1.bf16.msra.mxu0 0
        %2060 = vmatprep.subr.bf16.mxu0 0
        %2061 = vmatpush1.bf16.msra.mxu0 0
        %2062 = vmatprep.subr.bf16.mxu0 0
        %2063 = vmatpush1.bf16.msra.mxu0 0
        %2064 = vmatprep.subr.bf16.mxu0 0
        %2065 = vmatpush1.bf16.msra.mxu0 0
        %2066 = vmatprep.subr.bf16.mxu0 0
        %2067 = vmatpush1.bf16.msra.mxu0 0
        %2068 = vmatprep.subr.bf16.mxu0 0
        %2069 = vmatpush1.bf16.msra.mxu0 0
        %2070 = vmatprep.subr.bf16.mxu0 0
        %2071 = vmatpush1.bf16.msra.mxu0 0
        %2072 = vmatprep.subr.bf16.mxu0 0
        %2073 = vmatpush1.bf16.msra.mxu0 0
        %2074 = vmatprep.subr.bf16.mxu0 0
        %2075 = vmatpush1.bf16.msra.mxu0 0
        %2076 = vmatprep.subr.bf16.mxu0 0
        %2077 = vmatpush1.bf16.msra.mxu0 0
        %2078 = vmatprep.subr.bf16.mxu0 0
        %2079 = vmatpush1.bf16.msra.mxu0 0
        %2080 = vmatprep.mubr.bf16.mxu0 0
        %2081 = vmatmul.mubr.bf16.gmra.mrb[0].mxu0 %v1669
        %v2082 = vpop.f32.mrb[0].mxu0
        %v2083 = vadd.f32 %v2043, %v2082
        %v2084 = vpop.f32.mrb[0].mxu0
        %v2085 = vpop.f32.mrb[0].mxu0
        %v2086 = vpop.f32.mrb[0].mxu0
        %2087 = vdwg.mxu0
        %s2088 = scalar_lea.vmem %s438, 32 [#allocation2]
        %v2089 = vld [vmem:[%s2088] sm:$0xf]
        %v2091 = vsel %vm525, %v2089, 0
        %2093 = vmatprep.subr.bf16.mxu0 0
        %2094 = vmatpush1.bf16.msra.mxu0 %v676
        %2095 = vmatprep.subr.bf16.mxu0 0
        %2096 = vmatpush1.bf16.msra.mxu0 %v677
        %2097 = vmatprep.subr.bf16.mxu0 0
        %2098 = vmatpush1.bf16.msra.mxu0 %v678
        %2099 = vmatprep.subr.bf16.mxu0 0
        %2100 = vmatpush1.bf16.msra.mxu0 %v679
        %2101 = vmatprep.subr.bf16.mxu0 0
        %2102 = vmatpush1.bf16.msra.mxu0 %v689
        %2103 = vmatprep.subr.bf16.mxu0 0
        %2104 = vmatpush1.bf16.msra.mxu0 0
        %2105 = vmatprep.subr.bf16.mxu0 0
        %2106 = vmatpush1.bf16.msra.mxu0 0
        %2107 = vmatprep.subr.bf16.mxu0 0
        %2108 = vmatpush1.bf16.msra.mxu0 0
        %2109 = vmatprep.subr.bf16.mxu0 0
        %2110 = vmatpush1.bf16.msra.mxu0 0
        %2111 = vmatprep.subr.bf16.mxu0 0
        %2112 = vmatpush1.bf16.msra.mxu0 0
        %2113 = vmatprep.subr.bf16.mxu0 0
        %2114 = vmatpush1.bf16.msra.mxu0 0
        %2115 = vmatprep.subr.bf16.mxu0 0
        %2116 = vmatpush1.bf16.msra.mxu0 0
        %2117 = vmatprep.subr.bf16.mxu0 0
        %2118 = vmatpush1.bf16.msra.mxu0 0
        %2119 = vmatprep.subr.bf16.mxu0 0
        %2120 = vmatpush1.bf16.msra.mxu0 0
        %2121 = vmatprep.subr.bf16.mxu0 0
        %2122 = vmatpush1.bf16.msra.mxu0 0
        %2123 = vmatprep.subr.bf16.mxu0 0
        %2124 = vmatpush1.bf16.msra.mxu0 0
        %2125 = vmatprep.mubr.bf16.mxu0 0
        %2126 = vmatmul.mubr.bf16.gmra.mrb[0].mxu0 %v2091
        %v2127 = vpop.f32.mrb[0].mxu0
        %v2128 = vadd.f32 0.0, %v2127
        %v2129 = vpop.f32.mrb[0].mxu0
        %v2130 = vpop.f32.mrb[0].mxu0
        %v2131 = vpop.f32.mrb[0].mxu0
        %2132 = vdwg.mxu0
        %v2133 = vadd.f32 %v2083, %v2128
        %v2134 = vadd.f32 %v2133, %v737
        %v2135 = vmax.f32 %v2134, 0.0
        %v2136 = vpack.c.bf16 %v2135, %v2135
        %s2137 = scalar_lea.vmem %s4, 96
        %v2138 = vld [vmem:[%s2137] sm:$0xf]
        %v2139 = vld [vmem:[%s2137 + $0x4] sm:$0xf]
        %v2140 = vld [vmem:[%s2137 + $0x8] sm:$0xf]
        %v2141 = vld [vmem:[%s2137 + $0xc] sm:$0xf]
        %v2142 = vld [vmem:[%s2137 + $0x10] sm:$0xf]
        %v2143 = vld [vmem:[%s2137 + $0x14] sm:$0xf]
        %v2144 = vld [vmem:[%s2137 + $0x18] sm:$0xf]
        %v2145 = vld [vmem:[%s2137 + $0x1c] sm:$0xf]
        %v2154 = vunpack.c.l.b16 %v2138
        %v2155 = vunpack.c.l.b16 %v2139
        %v2156 = vunpack.c.l.b16 %v2140
        %v2157 = vunpack.c.l.b16 %v2141
        %v2158 = vunpack.c.l.b16 %v2142
        %v2159 = vunpack.c.l.b16 %v2143
        %v2160 = vunpack.c.l.b16 %v2144
        %v2161 = vunpack.c.l.b16 %v2145
        %v2162 = vpack.c.b16 %v2155, %v2154
        %v2163 = vpack.c.b16 %v2157, %v2156
        %v2164 = vpack.c.b16 %v2159, %v2158
        %v2165 = vpack.c.b16 %v2161, %v2160
        %v2171 = vsel %vm1193, %v2136, 0
        %2173 = vmatprep.subr.bf16.mxu0 0
        %2174 = vmatpush1.bf16.msra.mxu0 %v2162
        %2175 = vmatprep.subr.bf16.mxu0 0
        %2176 = vmatpush1.bf16.msra.mxu0 %v2163
        %2177 = vmatprep.subr.bf16.mxu0 0
        %2178 = vmatpush1.bf16.msra.mxu0 %v2164
        %2179 = vmatprep.subr.bf16.mxu0 0
        %2180 = vmatpush1.bf16.msra.mxu0 %v2165
        %2181 = vmatprep.subr.bf16.mxu0 0
        %2182 = vmatpush1.bf16.msra.mxu0 0
        %2183 = vmatprep.subr.bf16.mxu0 0
        %2184 = vmatpush1.bf16.msra.mxu0 0
        %2185 = vmatprep.subr.bf16.mxu0 0
        %2186 = vmatpush1.bf16.msra.mxu0 0
        %2187 = vmatprep.subr.bf16.mxu0 0
        %2188 = vmatpush1.bf16.msra.mxu0 0
        %2189 = vmatprep.subr.bf16.mxu0 0
        %2190 = vmatpush1.bf16.msra.mxu0 0
        %2191 = vmatprep.subr.bf16.mxu0 0
        %2192 = vmatpush1.bf16.msra.mxu0 0
        %2193 = vmatprep.subr.bf16.mxu0 0
        %2194 = vmatpush1.bf16.msra.mxu0 0
        %2195 = vmatprep.subr.bf16.mxu0 0
        %2196 = vmatpush1.bf16.msra.mxu0 0
        %2197 = vmatprep.subr.bf16.mxu0 0
        %2198 = vmatpush1.bf16.msra.mxu0 0
        %2199 = vmatprep.subr.bf16.mxu0 0
        %2200 = vmatpush1.bf16.msra.mxu0 0
        %2201 = vmatprep.subr.bf16.mxu0 0
        %2202 = vmatpush1.bf16.msra.mxu0 0
        %2203 = vmatprep.subr.bf16.mxu0 0
        %2204 = vmatpush1.bf16.msra.mxu0 0
        %2205 = vmatprep.mubr.bf16.mxu0 0
        %2206 = vmatmul.mubr.bf16.gmra.mrb[0].mxu0 %v2171
        %v2207 = vpop.f32.mrb[0].mxu0
        %v2208 = vadd.f32 0.0, %v2207
        %v2209 = vpop.f32.mrb[0].mxu0
        %v2210 = vpop.f32.mrb[0].mxu0
        %v2211 = vpop.f32.mrb[0].mxu0
        %2212 = vdwg.mxu0
        %v2213 = vadd.f32 %v1791, %v2208
        %s2214 = scalar_lea.vmem %s438, 100 [#allocation2]
        %v2215 = vld [vmem:[%s2214] sm:$0xf]
        %v2217 = vsel %vm525, %v2215, 0
        %2219 = vmatprep.subr.bf16.mxu0 0
        %2220 = vmatpush1.bf16.msra.mxu0 %v792
        %2221 = vmatprep.subr.bf16.mxu0 0
        %2222 = vmatpush1.bf16.msra.mxu0 %v793
        %2223 = vmatprep.subr.bf16.mxu0 0
        %2224 = vmatpush1.bf16.msra.mxu0 %v794
        %2225 = vmatprep.subr.bf16.mxu0 0
        %2226 = vmatpush1.bf16.msra.mxu0 %v795
        %2227 = vmatprep.subr.bf16.mxu0 0
        %2228 = vmatpush1.bf16.msra.mxu0 %v805
        %2229 = vmatprep.subr.bf16.mxu0 0
        %2230 = vmatpush1.bf16.msra.mxu0 0
        %2231 = vmatprep.subr.bf16.mxu0 0
        %2232 = vmatpush1.bf16.msra.mxu0 0
        %2233 = vmatprep.subr.bf16.mxu0 0
        %2234 = vmatpush1.bf16.msra.mxu0 0
        %2235 = vmatprep.subr.bf16.mxu0 0
        %2236 = vmatpush1.bf16.msra.mxu0 0
        %2237 = vmatprep.subr.bf16.mxu0 0
        %2238 = vmatpush1.bf16.msra.mxu0 0
        %2239 = vmatprep.subr.bf16.mxu0 0
        %2240 = vmatpush1.bf16.msra.mxu0 0
        %2241 = vmatprep.subr.bf16.mxu0 0
        %2242 = vmatpush1.bf16.msra.mxu0 0
        %2243 = vmatprep.subr.bf16.mxu0 0
        %2244 = vmatpush1.bf16.msra.mxu0 0
        %2245 = vmatprep.subr.bf16.mxu0 0
        %2246 = vmatpush1.bf16.msra.mxu0 0
        %2247 = vmatprep.subr.bf16.mxu0 0
        %2248 = vmatpush1.bf16.msra.mxu0 0
        %2249 = vmatprep.subr.bf16.mxu0 0
        %2250 = vmatpush1.bf16.msra.mxu0 0
        %2251 = vmatprep.mubr.bf16.mxu0 0
        %2252 = vmatmul.mubr.bf16.gmra.mrb[0].mxu0 %v2217
        %v2253 = vpop.f32.mrb[0].mxu0
        %v2254 = vadd.f32 0.0, %v2253
        %v2255 = vpop.f32.mrb[0].mxu0
        %v2256 = vpop.f32.mrb[0].mxu0
        %v2257 = vpop.f32.mrb[0].mxu0
        %2258 = vdwg.mxu0
        %2259 = vmatprep.subr.bf16.mxu0 0
        %2260 = vmatpush1.bf16.msra.mxu0 %v865
        %2261 = vmatprep.subr.bf16.mxu0 0
        %2262 = vmatpush1.bf16.msra.mxu0 %v866
        %2263 = vmatprep.subr.bf16.mxu0 0
        %2264 = vmatpush1.bf16.msra.mxu0 %v867
        %2265 = vmatprep.subr.bf16.mxu0 0
        %2266 = vmatpush1.bf16.msra.mxu0 %v868
        %2267 = vmatprep.subr.bf16.mxu0 0
        %2268 = vmatpush1.bf16.msra.mxu0 %v878
        %2269 = vmatprep.subr.bf16.mxu0 0
        %2270 = vmatpush1.bf16.msra.mxu0 0
        %2271 = vmatprep.subr.bf16.mxu0 0
        %2272 = vmatpush1.bf16.msra.mxu0 0
        %2273 = vmatprep.subr.bf16.mxu0 0
        %2274 = vmatpush1.bf16.msra.mxu0 0
        %2275 = vmatprep.subr.bf16.mxu0 0
        %2276 = vmatpush1.bf16.msra.mxu0 0
        %2277 = vmatprep.subr.bf16.mxu0 0
        %2278 = vmatpush1.bf16.msra.mxu0 0
        %2279 = vmatprep.subr.bf16.mxu0 0
        %2280 = vmatpush1.bf16.msra.mxu0 0
        %2281 = vmatprep.subr.bf16.mxu0 0
        %2282 = vmatpush1.bf16.msra.mxu0 0
        %2283 = vmatprep.subr.bf16.mxu0 0
        %2284 = vmatpush1.bf16.msra.mxu0 0
        %2285 = vmatprep.subr.bf16.mxu0 0
        %2286 = vmatpush1.bf16.msra.mxu0 0
        %2287 = vmatprep.subr.bf16.mxu0 0
        %2288 = vmatpush1.bf16.msra.mxu0 0
        %2289 = vmatprep.subr.bf16.mxu0 0
        %2290 = vmatpush1.bf16.msra.mxu0 0
        %2291 = vmatprep.mubr.bf16.mxu0 0
        %2292 = vmatmul.mubr.bf16.gmra.mrb[0].mxu0 %v1880
        %v2293 = vpop.f32.mrb[0].mxu0
        %v2294 = vadd.f32 %v2254, %v2293
        %v2295 = vpop.f32.mrb[0].mxu0
        %v2296 = vpop.f32.mrb[0].mxu0
        %v2297 = vpop.f32.mrb[0].mxu0
        %2298 = vdwg.mxu0
        %s2299 = scalar_lea.vmem %s438, 104 [#allocation2]
        %v2300 = vld [vmem:[%s2299] sm:$0xf]
        %v2302 = vsel %vm525, %v2300, 0
        %2304 = vmatprep.subr.bf16.mxu0 0
        %2305 = vmatpush1.bf16.msra.mxu0 %v950
        %2306 = vmatprep.subr.bf16.mxu0 0
        %2307 = vmatpush1.bf16.msra.mxu0 %v951
        %2308 = vmatprep.subr.bf16.mxu0 0
        %2309 = vmatpush1.bf16.msra.mxu0 %v952
        %2310 = vmatprep.subr.bf16.mxu0 0
        %2311 = vmatpush1.bf16.msra.mxu0 %v953
        %2312 = vmatprep.subr.bf16.mxu0 0
        %2313 = vmatpush1.bf16.msra.mxu0 %v963
        %2314 = vmatprep.subr.bf16.mxu0 0
        %2315 = vmatpush1.bf16.msra.mxu0 0
        %2316 = vmatprep.subr.bf16.mxu0 0
        %2317 = vmatpush1.bf16.msra.mxu0 0
        %2318 = vmatprep.subr.bf16.mxu0 0
        %2319 = vmatpush1.bf16.msra.mxu0 0
        %2320 = vmatprep.subr.bf16.mxu0 0
        %2321 = vmatpush1.bf16.msra.mxu0 0
        %2322 = vmatprep.subr.bf16.mxu0 0
        %2323 = vmatpush1.bf16.msra.mxu0 0
        %2324 = vmatprep.subr.bf16.mxu0 0
        %2325 = vmatpush1.bf16.msra.mxu0 0
        %2326 = vmatprep.subr.bf16.mxu0 0
        %2327 = vmatpush1.bf16.msra.mxu0 0
        %2328 = vmatprep.subr.bf16.mxu0 0
        %2329 = vmatpush1.bf16.msra.mxu0 0
        %2330 = vmatprep.subr.bf16.mxu0 0
        %2331 = vmatpush1.bf16.msra.mxu0 0
        %2332 = vmatprep.subr.bf16.mxu0 0
        %2333 = vmatpush1.bf16.msra.mxu0 0
        %2334 = vmatprep.subr.bf16.mxu0 0
        %2335 = vmatpush1.bf16.msra.mxu0 0
        %2336 = vmatprep.mubr.bf16.mxu0 0
        %2337 = vmatmul.mubr.bf16.gmra.mrb[0].mxu0 %v2302
        %v2338 = vpop.f32.mrb[0].mxu0
        %v2339 = vadd.f32 0.0, %v2338
        %v2340 = vpop.f32.mrb[0].mxu0
        %v2341 = vpop.f32.mrb[0].mxu0
        %v2342 = vpop.f32.mrb[0].mxu0
        %2343 = vdwg.mxu0
        %v2344 = vadd.f32 %v2294, %v2339
        %v2345 = vadd.f32 %v2344, %v1012
        %v2346 = vmax.f32 %v2345, 0.0
        %v2347 = vpack.c.bf16 %v2346, %v2346
        %s2348 = scalar_lea.vmem %s4, 352
        %v2349 = vld [vmem:[%s2348] sm:$0xf]
        %v2350 = vld [vmem:[%s2348 + $0x4] sm:$0xf]
        %v2351 = vld [vmem:[%s2348 + $0x8] sm:$0xf]
        %v2352 = vld [vmem:[%s2348 + $0xc] sm:$0xf]
        %v2353 = vld [vmem:[%s2348 + $0x10] sm:$0xf]
        %v2354 = vld [vmem:[%s2348 + $0x14] sm:$0xf]
        %v2355 = vld [vmem:[%s2348 + $0x18] sm:$0xf]
        %v2356 = vld [vmem:[%s2348 + $0x1c] sm:$0xf]
        %v2365 = vunpack.c.l.b16 %v2349
        %v2366 = vunpack.c.l.b16 %v2350
        %v2367 = vunpack.c.l.b16 %v2351
        %v2368 = vunpack.c.l.b16 %v2352
        %v2369 = vunpack.c.l.b16 %v2353
        %v2370 = vunpack.c.l.b16 %v2354
        %v2371 = vunpack.c.l.b16 %v2355
        %v2372 = vunpack.c.l.b16 %v2356
        %v2373 = vpack.c.b16 %v2366, %v2365
        %v2374 = vpack.c.b16 %v2368, %v2367
        %v2375 = vpack.c.b16 %v2370, %v2369
        %v2376 = vpack.c.b16 %v2372, %v2371
        %v2382 = vsel %vm1193, %v2347, 0
        %2384 = vmatprep.subr.bf16.mxu0 0
        %2385 = vmatpush1.bf16.msra.mxu0 %v2373
        %2386 = vmatprep.subr.bf16.mxu0 0
        %2387 = vmatpush1.bf16.msra.mxu0 %v2374
        %2388 = vmatprep.subr.bf16.mxu0 0
        %2389 = vmatpush1.bf16.msra.mxu0 %v2375
        %2390 = vmatprep.subr.bf16.mxu0 0
        %2391 = vmatpush1.bf16.msra.mxu0 %v2376
        %2392 = vmatprep.subr.bf16.mxu0 0
        %2393 = vmatpush1.bf16.msra.mxu0 0
        %2394 = vmatprep.subr.bf16.mxu0 0
        %2395 = vmatpush1.bf16.msra.mxu0 0
        %2396 = vmatprep.subr.bf16.mxu0 0
        %2397 = vmatpush1.bf16.msra.mxu0 0
        %2398 = vmatprep.subr.bf16.mxu0 0
        %2399 = vmatpush1.bf16.msra.mxu0 0
        %2400 = vmatprep.subr.bf16.mxu0 0
        %2401 = vmatpush1.bf16.msra.mxu0 0
        %2402 = vmatprep.subr.bf16.mxu0 0
        %2403 = vmatpush1.bf16.msra.mxu0 0
        %2404 = vmatprep.subr.bf16.mxu0 0
        %2405 = vmatpush1.bf16.msra.mxu0 0
        %2406 = vmatprep.subr.bf16.mxu0 0
        %2407 = vmatpush1.bf16.msra.mxu0 0
        %2408 = vmatprep.subr.bf16.mxu0 0
        %2409 = vmatpush1.bf16.msra.mxu0 0
        %2410 = vmatprep.subr.bf16.mxu0 0
        %2411 = vmatpush1.bf16.msra.mxu0 0
        %2412 = vmatprep.subr.bf16.mxu0 0
        %2413 = vmatpush1.bf16.msra.mxu0 0
        %2414 = vmatprep.subr.bf16.mxu0 0
        %2415 = vmatpush1.bf16.msra.mxu0 0
        %2416 = vmatprep.mubr.bf16.mxu0 0
        %2417 = vmatmul.mubr.bf16.gmra.mrb[0].mxu0 %v2382
        %v2418 = vpop.f32.mrb[0].mxu0
        %v2419 = vadd.f32 0.0, %v2418
        %v2420 = vpop.f32.mrb[0].mxu0
        %v2421 = vpop.f32.mrb[0].mxu0
        %v2422 = vpop.f32.mrb[0].mxu0
        %2423 = vdwg.mxu0
        %v2424 = vadd.f32 %v2002, %v2419
        %s2425 = scalar_lea.vmem %s438, 36 [#allocation2]
        %v2426 = vld [vmem:[%s2425] sm:$0xf]
        %v2428 = vsel %vm525, %v2426, 0
        %2430 = vmatprep.subr.bf16.mxu0 0
        %2431 = vmatpush1.bf16.msra.mxu0 %v516
        %2432 = vmatprep.subr.bf16.mxu0 0
        %2433 = vmatpush1.bf16.msra.mxu0 %v517
        %2434 = vmatprep.subr.bf16.mxu0 0
        %2435 = vmatpush1.bf16.msra.mxu0 %v518
        %2436 = vmatprep.subr.bf16.mxu0 0
        %2437 = vmatpush1.bf16.msra.mxu0 %v519
        %2438 = vmatprep.subr.bf16.mxu0 0
        %2439 = vmatpush1.bf16.msra.mxu0 %v531
        %2440 = vmatprep.subr.bf16.mxu0 0
        %2441 = vmatpush1.bf16.msra.mxu0 0
        %2442 = vmatprep.subr.bf16.mxu0 0
        %2443 = vmatpush1.bf16.msra.mxu0 0
        %2444 = vmatprep.subr.bf16.mxu0 0
        %2445 = vmatpush1.bf16.msra.mxu0 0
        %2446 = vmatprep.subr.bf16.mxu0 0
        %2447 = vmatpush1.bf16.msra.mxu0 0
        %2448 = vmatprep.subr.bf16.mxu0 0
        %2449 = vmatpush1.bf16.msra.mxu0 0
        %2450 = vmatprep.subr.bf16.mxu0 0
        %2451 = vmatpush1.bf16.msra.mxu0 0
        %2452 = vmatprep.subr.bf16.mxu0 0
        %2453 = vmatpush1.bf16.msra.mxu0 0
        %2454 = vmatprep.subr.bf16.mxu0 0
        %2455 = vmatpush1.bf16.msra.mxu0 0
        %2456 = vmatprep.subr.bf16.mxu0 0
        %2457 = vmatpush1.bf16.msra.mxu0 0
        %2458 = vmatprep.subr.bf16.mxu0 0
        %2459 = vmatpush1.bf16.msra.mxu0 0
        %2460 = vmatprep.subr.bf16.mxu0 0
        %2461 = vmatpush1.bf16.msra.mxu0 0
        %2462 = vmatprep.mubr.bf16.mxu0 0
        %2463 = vmatmul.mubr.bf16.gmra.mrb[0].mxu0 %v2428
        %v2464 = vpop.f32.mrb[0].mxu0
        %v2465 = vadd.f32 0.0, %v2464
        %v2466 = vpop.f32.mrb[0].mxu0
        %v2467 = vpop.f32.mrb[0].mxu0
        %v2468 = vpop.f32.mrb[0].mxu0
        %2469 = vdwg.mxu0
        %2470 = vmatprep.subr.bf16.mxu0 0
        %2471 = vmatpush1.bf16.msra.mxu0 %v591
        %2472 = vmatprep.subr.bf16.mxu0 0
        %2473 = vmatpush1.bf16.msra.mxu0 %v592
        %2474 = vmatprep.subr.bf16.mxu0 0
        %2475 = vmatpush1.bf16.msra.mxu0 %v593
        %2476 = vmatprep.subr.bf16.mxu0 0
        %2477 = vmatpush1.bf16.msra.mxu0 %v594
        %2478 = vmatprep.subr.bf16.mxu0 0
        %2479 = vmatpush1.bf16.msra.mxu0 %v604
        %2480 = vmatprep.subr.bf16.mxu0 0
        %2481 = vmatpush1.bf16.msra.mxu0 0
        %2482 = vmatprep.subr.bf16.mxu0 0
        %2483 = vmatpush1.bf16.msra.mxu0 0
        %2484 = vmatprep.subr.bf16.mxu0 0
        %2485 = vmatpush1.bf16.msra.mxu0 0
        %2486 = vmatprep.subr.bf16.mxu0 0
        %2487 = vmatpush1.bf16.msra.mxu0 0
        %2488 = vmatprep.subr.bf16.mxu0 0
        %2489 = vmatpush1.bf16.msra.mxu0 0
        %2490 = vmatprep.subr.bf16.mxu0 0
        %2491 = vmatpush1.bf16.msra.mxu0 0
        %2492 = vmatprep.subr.bf16.mxu0 0
        %2493 = vmatpush1.bf16.msra.mxu0 0
        %2494 = vmatprep.subr.bf16.mxu0 0
        %2495 = vmatpush1.bf16.msra.mxu0 0
        %2496 = vmatprep.subr.bf16.mxu0 0
        %2497 = vmatpush1.bf16.msra.mxu0 0
        %2498 = vmatprep.subr.bf16.mxu0 0
        %2499 = vmatpush1.bf16.msra.mxu0 0
        %2500 = vmatprep.subr.bf16.mxu0 0
        %2501 = vmatpush1.bf16.msra.mxu0 0
        %2502 = vmatprep.mubr.bf16.mxu0 0
        %2503 = vmatmul.mubr.bf16.gmra.mrb[0].mxu0 %v2091
        %v2504 = vpop.f32.mrb[0].mxu0
        %v2505 = vadd.f32 %v2465, %v2504
        %v2506 = vpop.f32.mrb[0].mxu0
        %v2507 = vpop.f32.mrb[0].mxu0
        %v2508 = vpop.f32.mrb[0].mxu0
        %2509 = vdwg.mxu0
        %s2510 = scalar_lea.vmem %s438, 40 [#allocation2]
        %v2511 = vld [vmem:[%s2510] sm:$0xf]
        %v2513 = vsel %vm525, %v2511, 0
        %2515 = vmatprep.subr.bf16.mxu0 0
        %2516 = vmatpush1.bf16.msra.mxu0 %v676
        %2517 = vmatprep.subr.bf16.mxu0 0
        %2518 = vmatpush1.bf16.msra.mxu0 %v677
        %2519 = vmatprep.subr.bf16.mxu0 0
        %2520 = vmatpush1.bf16.msra.mxu0 %v678
        %2521 = vmatprep.subr.bf16.mxu0 0
        %2522 = vmatpush1.bf16.msra.mxu0 %v679
        %2523 = vmatprep.subr.bf16.mxu0 0
        %2524 = vmatpush1.bf16.msra.mxu0 %v689
        %2525 = vmatprep.subr.bf16.mxu0 0
        %2526 = vmatpush1.bf16.msra.mxu0 0
        %2527 = vmatprep.subr.bf16.mxu0 0
        %2528 = vmatpush1.bf16.msra.mxu0 0
        %2529 = vmatprep.subr.bf16.mxu0 0
        %2530 = vmatpush1.bf16.msra.mxu0 0
        %2531 = vmatprep.subr.bf16.mxu0 0
        %2532 = vmatpush1.bf16.msra.mxu0 0
        %2533 = vmatprep.subr.bf16.mxu0 0
        %2534 = vmatpush1.bf16.msra.mxu0 0
        %2535 = vmatprep.subr.bf16.mxu0 0
        %2536 = vmatpush1.bf16.msra.mxu0 0
        %2537 = vmatprep.subr.bf16.mxu0 0
        %2538 = vmatpush1.bf16.msra.mxu0 0
        %2539 = vmatprep.subr.bf16.mxu0 0
        %2540 = vmatpush1.bf16.msra.mxu0 0
        %2541 = vmatprep.subr.bf16.mxu0 0
        %2542 = vmatpush1.bf16.msra.mxu0 0
        %2543 = vmatprep.subr.bf16.mxu0 0
        %2544 = vmatpush1.bf16.msra.mxu0 0
        %2545 = vmatprep.subr.bf16.mxu0 0
        %2546 = vmatpush1.bf16.msra.mxu0 0
        %2547 = vmatprep.mubr.bf16.mxu0 0
        %2548 = vmatmul.mubr.bf16.gmra.mrb[0].mxu0 %v2513
        %v2549 = vpop.f32.mrb[0].mxu0
        %v2550 = vadd.f32 0.0, %v2549
        %v2551 = vpop.f32.mrb[0].mxu0
        %v2552 = vpop.f32.mrb[0].mxu0
        %v2553 = vpop.f32.mrb[0].mxu0
        %2554 = vdwg.mxu0
        %v2555 = vadd.f32 %v2505, %v2550
        %v2556 = vadd.f32 %v2555, %v737
        %v2557 = vmax.f32 %v2556, 0.0
        %v2558 = vpack.c.bf16 %v2557, %v2557
        %s2559 = scalar_lea.vmem %s4, 128
        %v2560 = vld [vmem:[%s2559] sm:$0xf]
        %v2561 = vld [vmem:[%s2559 + $0x4] sm:$0xf]
        %v2562 = vld [vmem:[%s2559 + $0x8] sm:$0xf]
        %v2563 = vld [vmem:[%s2559 + $0xc] sm:$0xf]
        %v2564 = vld [vmem:[%s2559 + $0x10] sm:$0xf]
        %v2565 = vld [vmem:[%s2559 + $0x14] sm:$0xf]
        %v2566 = vld [vmem:[%s2559 + $0x18] sm:$0xf]
        %v2567 = vld [vmem:[%s2559 + $0x1c] sm:$0xf]
        %v2576 = vunpack.c.l.b16 %v2560
        %v2577 = vunpack.c.l.b16 %v2561
        %v2578 = vunpack.c.l.b16 %v2562
        %v2579 = vunpack.c.l.b16 %v2563
        %v2580 = vunpack.c.l.b16 %v2564
        %v2581 = vunpack.c.l.b16 %v2565
        %v2582 = vunpack.c.l.b16 %v2566
        %v2583 = vunpack.c.l.b16 %v2567
        %v2584 = vpack.c.b16 %v2577, %v2576
        %v2585 = vpack.c.b16 %v2579, %v2578
        %v2586 = vpack.c.b16 %v2581, %v2580
        %v2587 = vpack.c.b16 %v2583, %v2582
        %v2593 = vsel %vm1193, %v2558, 0
        %2595 = vmatprep.subr.bf16.mxu0 0
        %2596 = vmatpush1.bf16.msra.mxu0 %v2584
        %2597 = vmatprep.subr.bf16.mxu0 0
        %2598 = vmatpush1.bf16.msra.mxu0 %v2585
        %2599 = vmatprep.subr.bf16.mxu0 0
        %2600 = vmatpush1.bf16.msra.mxu0 %v2586
        %2601 = vmatprep.subr.bf16.mxu0 0
        %2602 = vmatpush1.bf16.msra.mxu0 %v2587
        %2603 = vmatprep.subr.bf16.mxu0 0
        %2604 = vmatpush1.bf16.msra.mxu0 0
        %2605 = vmatprep.subr.bf16.mxu0 0
        %2606 = vmatpush1.bf16.msra.mxu0 0
        %2607 = vmatprep.subr.bf16.mxu0 0
        %2608 = vmatpush1.bf16.msra.mxu0 0
        %2609 = vmatprep.subr.bf16.mxu0 0
        %2610 = vmatpush1.bf16.msra.mxu0 0
        %2611 = vmatprep.subr.bf16.mxu0 0
        %2612 = vmatpush1.bf16.msra.mxu0 0
        %2613 = vmatprep.subr.bf16.mxu0 0
        %2614 = vmatpush1.bf16.msra.mxu0 0
        %2615 = vmatprep.subr.bf16.mxu0 0
        %2616 = vmatpush1.bf16.msra.mxu0 0
        %2617 = vmatprep.subr.bf16.mxu0 0
        %2618 = vmatpush1.bf16.msra.mxu0 0
        %2619 = vmatprep.subr.bf16.mxu0 0
        %2620 = vmatpush1.bf16.msra.mxu0 0
        %2621 = vmatprep.subr.bf16.mxu0 0
        %2622 = vmatpush1.bf16.msra.mxu0 0
        %2623 = vmatprep.subr.bf16.mxu0 0
        %2624 = vmatpush1.bf16.msra.mxu0 0
        %2625 = vmatprep.subr.bf16.mxu0 0
        %2626 = vmatpush1.bf16.msra.mxu0 0
        %2627 = vmatprep.mubr.bf16.mxu0 0
        %2628 = vmatmul.mubr.bf16.gmra.mrb[0].mxu0 %v2593
        %v2629 = vpop.f32.mrb[0].mxu0
        %v2630 = vadd.f32 0.0, %v2629
        %v2631 = vpop.f32.mrb[0].mxu0
        %v2632 = vpop.f32.mrb[0].mxu0
        %v2633 = vpop.f32.mrb[0].mxu0
        %2634 = vdwg.mxu0
        %v2635 = vadd.f32 %v2213, %v2630
        %s2636 = scalar_lea.vmem %s438, 108 [#allocation2]
        %v2637 = vld [vmem:[%s2636] sm:$0xf]
        %v2639 = vsel %vm525, %v2637, 0
        %2641 = vmatprep.subr.bf16.mxu0 0
        %2642 = vmatpush1.bf16.msra.mxu0 %v792
        %2643 = vmatprep.subr.bf16.mxu0 0
        %2644 = vmatpush1.bf16.msra.mxu0 %v793
        %2645 = vmatprep.subr.bf16.mxu0 0
        %2646 = vmatpush1.bf16.msra.mxu0 %v794
        %2647 = vmatprep.subr.bf16.mxu0 0
        %2648 = vmatpush1.bf16.msra.mxu0 %v795
        %2649 = vmatprep.subr.bf16.mxu0 0
        %2650 = vmatpush1.bf16.msra.mxu0 %v805
        %2651 = vmatprep.subr.bf16.mxu0 0
        %2652 = vmatpush1.bf16.msra.mxu0 0
        %2653 = vmatprep.subr.bf16.mxu0 0
        %2654 = vmatpush1.bf16.msra.mxu0 0
        %2655 = vmatprep.subr.bf16.mxu0 0
        %2656 = vmatpush1.bf16.msra.mxu0 0
        %2657 = vmatprep.subr.bf16.mxu0 0
        %2658 = vmatpush1.bf16.msra.mxu0 0
        %2659 = vmatprep.subr.bf16.mxu0 0
        %2660 = vmatpush1.bf16.msra.mxu0 0
        %2661 = vmatprep.subr.bf16.mxu0 0
        %2662 = vmatpush1.bf16.msra.mxu0 0
        %2663 = vmatprep.subr.bf16.mxu0 0
        %2664 = vmatpush1.bf16.msra.mxu0 0
        %2665 = vmatprep.subr.bf16.mxu0 0
        %2666 = vmatpush1.bf16.msra.mxu0 0
        %2667 = vmatprep.subr.bf16.mxu0 0
        %2668 = vmatpush1.bf16.msra.mxu0 0
        %2669 = vmatprep.subr.bf16.mxu0 0
        %2670 = vmatpush1.bf16.msra.mxu0 0
        %2671 = vmatprep.subr.bf16.mxu0 0
        %2672 = vmatpush1.bf16.msra.mxu0 0
        %2673 = vmatprep.mubr.bf16.mxu0 0
        %2674 = vmatmul.mubr.bf16.gmra.mrb[0].mxu0 %v2639
        %v2675 = vpop.f32.mrb[0].mxu0
        %v2676 = vadd.f32 0.0, %v2675
        %v2677 = vpop.f32.mrb[0].mxu0
        %v2678 = vpop.f32.mrb[0].mxu0
        %v2679 = vpop.f32.mrb[0].mxu0
        %2680 = vdwg.mxu0
        %2681 = vmatprep.subr.bf16.mxu0 0
        %2682 = vmatpush1.bf16.msra.mxu0 %v865
        %2683 = vmatprep.subr.bf16.mxu0 0
        %2684 = vmatpush1.bf16.msra.mxu0 %v866
        %2685 = vmatprep.subr.bf16.mxu0 0
        %2686 = vmatpush1.bf16.msra.mxu0 %v867
        %2687 = vmatprep.subr.bf16.mxu0 0
        %2688 = vmatpush1.bf16.msra.mxu0 %v868
        %2689 = vmatprep.subr.bf16.mxu0 0
        %2690 = vmatpush1.bf16.msra.mxu0 %v878
        %2691 = vmatprep.subr.bf16.mxu0 0
        %2692 = vmatpush1.bf16.msra.mxu0 0
        %2693 = vmatprep.subr.bf16.mxu0 0
        %2694 = vmatpush1.bf16.msra.mxu0 0
        %2695 = vmatprep.subr.bf16.mxu0 0
        %2696 = vmatpush1.bf16.msra.mxu0 0
        %2697 = vmatprep.subr.bf16.mxu0 0
        %2698 = vmatpush1.bf16.msra.mxu0 0
        %2699 = vmatprep.subr.bf16.mxu0 0
        %2700 = vmatpush1.bf16.msra.mxu0 0
        %2701 = vmatprep.subr.bf16.mxu0 0
        %2702 = vmatpush1.bf16.msra.mxu0 0
        %2703 = vmatprep.subr.bf16.mxu0 0
        %2704 = vmatpush1.bf16.msra.mxu0 0
        %2705 = vmatprep.subr.bf16.mxu0 0
        %2706 = vmatpush1.bf16.msra.mxu0 0
        %2707 = vmatprep.subr.bf16.mxu0 0
        %2708 = vmatpush1.bf16.msra.mxu0 0
        %2709 = vmatprep.subr.bf16.mxu0 0
        %2710 = vmatpush1.bf16.msra.mxu0 0
        %2711 = vmatprep.subr.bf16.mxu0 0
        %2712 = vmatpush1.bf16.msra.mxu0 0
        %2713 = vmatprep.mubr.bf16.mxu0 0
        %2714 = vmatmul.mubr.bf16.gmra.mrb[0].mxu0 %v2302
        %v2715 = vpop.f32.mrb[0].mxu0
        %v2716 = vadd.f32 %v2676, %v2715
        %v2717 = vpop.f32.mrb[0].mxu0
        %v2718 = vpop.f32.mrb[0].mxu0
        %v2719 = vpop.f32.mrb[0].mxu0
        %2720 = vdwg.mxu0
        %s2721 = scalar_lea.vmem %s438, 112 [#allocation2]
        %v2722 = vld [vmem:[%s2721] sm:$0xf]
        %v2724 = vsel %vm525, %v2722, 0
        %2726 = vmatprep.subr.bf16.mxu0 0
        %2727 = vmatpush1.bf16.msra.mxu0 %v950
        %2728 = vmatprep.subr.bf16.mxu0 0
        %2729 = vmatpush1.bf16.msra.mxu0 %v951
        %2730 = vmatprep.subr.bf16.mxu0 0
        %2731 = vmatpush1.bf16.msra.mxu0 %v952
        %2732 = vmatprep.subr.bf16.mxu0 0
        %2733 = vmatpush1.bf16.msra.mxu0 %v953
        %2734 = vmatprep.subr.bf16.mxu0 0
        %2735 = vmatpush1.bf16.msra.mxu0 %v963
        %2736 = vmatprep.subr.bf16.mxu0 0
        %2737 = vmatpush1.bf16.msra.mxu0 0
        %2738 = vmatprep.subr.bf16.mxu0 0
        %2739 = vmatpush1.bf16.msra.mxu0 0
        %2740 = vmatprep.subr.bf16.mxu0 0
        %2741 = vmatpush1.bf16.msra.mxu0 0
        %2742 = vmatprep.subr.bf16.mxu0 0
        %2743 = vmatpush1.bf16.msra.mxu0 0
        %2744 = vmatprep.subr.bf16.mxu0 0
        %2745 = vmatpush1.bf16.msra.mxu0 0
        %2746 = vmatprep.subr.bf16.mxu0 0
        %2747 = vmatpush1.bf16.msra.mxu0 0
        %2748 = vmatprep.subr.bf16.mxu0 0
        %2749 = vmatpush1.bf16.msra.mxu0 0
        %2750 = vmatprep.subr.bf16.mxu0 0
        %2751 = vmatpush1.bf16.msra.mxu0 0
        %2752 = vmatprep.subr.bf16.mxu0 0
        %2753 = vmatpush1.bf16.msra.mxu0 0
        %2754 = vmatprep.subr.bf16.mxu0 0
        %2755 = vmatpush1.bf16.msra.mxu0 0
        %2756 = vmatprep.subr.bf16.mxu0 0
        %2757 = vmatpush1.bf16.msra.mxu0 0
        %2758 = vmatprep.mubr.bf16.mxu0 0
        %2759 = vmatmul.mubr.bf16.gmra.mrb[0].mxu0 %v2724
        %v2760 = vpop.f32.mrb[0].mxu0
        %v2761 = vadd.f32 0.0, %v2760
        %v2762 = vpop.f32.mrb[0].mxu0
        %v2763 = vpop.f32.mrb[0].mxu0
        %v2764 = vpop.f32.mrb[0].mxu0
        %2765 = vdwg.mxu0
        %v2766 = vadd.f32 %v2716, %v2761
        %v2767 = vadd.f32 %v2766, %v1012
        %v2768 = vmax.f32 %v2767, 0.0
        %v2769 = vpack.c.bf16 %v2768, %v2768
        %s2770 = scalar_lea.vmem %s4, 384
        %v2771 = vld [vmem:[%s2770] sm:$0xf]
        %v2772 = vld [vmem:[%s2770 + $0x4] sm:$0xf]
        %v2773 = vld [vmem:[%s2770 + $0x8] sm:$0xf]
        %v2774 = vld [vmem:[%s2770 + $0xc] sm:$0xf]
        %v2775 = vld [vmem:[%s2770 + $0x10] sm:$0xf]
        %v2776 = vld [vmem:[%s2770 + $0x14] sm:$0xf]
        %v2777 = vld [vmem:[%s2770 + $0x18] sm:$0xf]
        %v2778 = vld [vmem:[%s2770 + $0x1c] sm:$0xf]
        %v2787 = vunpack.c.l.b16 %v2771
        %v2788 = vunpack.c.l.b16 %v2772
        %v2789 = vunpack.c.l.b16 %v2773
        %v2790 = vunpack.c.l.b16 %v2774
        %v2791 = vunpack.c.l.b16 %v2775
        %v2792 = vunpack.c.l.b16 %v2776
        %v2793 = vunpack.c.l.b16 %v2777
        %v2794 = vunpack.c.l.b16 %v2778
        %v2795 = vpack.c.b16 %v2788, %v2787
        %v2796 = vpack.c.b16 %v2790, %v2789
        %v2797 = vpack.c.b16 %v2792, %v2791
        %v2798 = vpack.c.b16 %v2794, %v2793
        %v2804 = vsel %vm1193, %v2769, 0
        %2806 = vmatprep.subr.bf16.mxu0 0
        %2807 = vmatpush1.bf16.msra.mxu0 %v2795
        %2808 = vmatprep.subr.bf16.mxu0 0
        %2809 = vmatpush1.bf16.msra.mxu0 %v2796
        %2810 = vmatprep.subr.bf16.mxu0 0
        %2811 = vmatpush1.bf16.msra.mxu0 %v2797
        %2812 = vmatprep.subr.bf16.mxu0 0
        %2813 = vmatpush1.bf16.msra.mxu0 %v2798
        %2814 = vmatprep.subr.bf16.mxu0 0
        %2815 = vmatpush1.bf16.msra.mxu0 0
        %2816 = vmatprep.subr.bf16.mxu0 0
        %2817 = vmatpush1.bf16.msra.mxu0 0
        %2818 = vmatprep.subr.bf16.mxu0 0
        %2819 = vmatpush1.bf16.msra.mxu0 0
        %2820 = vmatprep.subr.bf16.mxu0 0
        %2821 = vmatpush1.bf16.msra.mxu0 0
        %2822 = vmatprep.subr.bf16.mxu0 0
        %2823 = vmatpush1.bf16.msra.mxu0 0
        %2824 = vmatprep.subr.bf16.mxu0 0
        %2825 = vmatpush1.bf16.msra.mxu0 0
        %2826 = vmatprep.subr.bf16.mxu0 0
        %2827 = vmatpush1.bf16.msra.mxu0 0
        %2828 = vmatprep.subr.bf16.mxu0 0
        %2829 = vmatpush1.bf16.msra.mxu0 0
        %2830 = vmatprep.subr.bf16.mxu0 0
        %2831 = vmatpush1.bf16.msra.mxu0 0
        %2832 = vmatprep.subr.bf16.mxu0 0
        %2833 = vmatpush1.bf16.msra.mxu0 0
        %2834 = vmatprep.subr.bf16.mxu0 0
        %2835 = vmatpush1.bf16.msra.mxu0 0
        %2836 = vmatprep.subr.bf16.mxu0 0
        %2837 = vmatpush1.bf16.msra.mxu0 0
        %2838 = vmatprep.mubr.bf16.mxu0 0
        %2839 = vmatmul.mubr.bf16.gmra.mrb[0].mxu0 %v2804
        %v2840 = vpop.f32.mrb[0].mxu0
        %v2841 = vadd.f32 0.0, %v2840
        %v2842 = vpop.f32.mrb[0].mxu0
        %v2843 = vpop.f32.mrb[0].mxu0
        %v2844 = vpop.f32.mrb[0].mxu0
        %2845 = vdwg.mxu0
        %v2846 = vadd.f32 %v2424, %v2841
        %s2847 = scalar_lea.vmem %s438, 44 [#allocation2]
        %v2848 = vld [vmem:[%s2847] sm:$0xf]
        %v2850 = vsel %vm525, %v2848, 0
        %2852 = vmatprep.subr.bf16.mxu0 0
        %2853 = vmatpush1.bf16.msra.mxu0 %v516
        %2854 = vmatprep.subr.bf16.mxu0 0
        %2855 = vmatpush1.bf16.msra.mxu0 %v517
        %2856 = vmatprep.subr.bf16.mxu0 0
        %2857 = vmatpush1.bf16.msra.mxu0 %v518
        %2858 = vmatprep.subr.bf16.mxu0 0
        %2859 = vmatpush1.bf16.msra.mxu0 %v519
        %2860 = vmatprep.subr.bf16.mxu0 0
        %2861 = vmatpush1.bf16.msra.mxu0 %v531
        %2862 = vmatprep.subr.bf16.mxu0 0
        %2863 = vmatpush1.bf16.msra.mxu0 0
        %2864 = vmatprep.subr.bf16.mxu0 0
        %2865 = vmatpush1.bf16.msra.mxu0 0
        %2866 = vmatprep.subr.bf16.mxu0 0
        %2867 = vmatpush1.bf16.msra.mxu0 0
        %2868 = vmatprep.subr.bf16.mxu0 0
        %2869 = vmatpush1.bf16.msra.mxu0 0
        %2870 = vmatprep.subr.bf16.mxu0 0
        %2871 = vmatpush1.bf16.msra.mxu0 0
        %2872 = vmatprep.subr.bf16.mxu0 0
        %2873 = vmatpush1.bf16.msra.mxu0 0
        %2874 = vmatprep.subr.bf16.mxu0 0
        %2875 = vmatpush1.bf16.msra.mxu0 0
        %2876 = vmatprep.subr.bf16.mxu0 0
        %2877 = vmatpush1.bf16.msra.mxu0 0
        %2878 = vmatprep.subr.bf16.mxu0 0
        %2879 = vmatpush1.bf16.msra.mxu0 0
        %2880 = vmatprep.subr.bf16.mxu0 0
        %2881 = vmatpush1.bf16.msra.mxu0 0
        %2882 = vmatprep.subr.bf16.mxu0 0
        %2883 = vmatpush1.bf16.msra.mxu0 0
        %2884 = vmatprep.mubr.bf16.mxu0 0
        %2885 = vmatmul.mubr.bf16.gmra.mrb[0].mxu0 %v2850
        %v2886 = vpop.f32.mrb[0].mxu0
        %v2887 = vadd.f32 0.0, %v2886
        %v2888 = vpop.f32.mrb[0].mxu0
        %v2889 = vpop.f32.mrb[0].mxu0
        %v2890 = vpop.f32.mrb[0].mxu0
        %2891 = vdwg.mxu0
        %2892 = vmatprep.subr.bf16.mxu0 0
        %2893 = vmatpush1.bf16.msra.mxu0 %v591
        %2894 = vmatprep.subr.bf16.mxu0 0
        %2895 = vmatpush1.bf16.msra.mxu0 %v592
        %2896 = vmatprep.subr.bf16.mxu0 0
        %2897 = vmatpush1.bf16.msra.mxu0 %v593
        %2898 = vmatprep.subr.bf16.mxu0 0
        %2899 = vmatpush1.bf16.msra.mxu0 %v594
        %2900 = vmatprep.subr.bf16.mxu0 0
        %2901 = vmatpush1.bf16.msra.mxu0 %v604
        %2902 = vmatprep.subr.bf16.mxu0 0
        %2903 = vmatpush1.bf16.msra.mxu0 0
        %2904 = vmatprep.subr.bf16.mxu0 0
        %2905 = vmatpush1.bf16.msra.mxu0 0
        %2906 = vmatprep.subr.bf16.mxu0 0
        %2907 = vmatpush1.bf16.msra.mxu0 0
        %2908 = vmatprep.subr.bf16.mxu0 0
        %2909 = vmatpush1.bf16.msra.mxu0 0
        %2910 = vmatprep.subr.bf16.mxu0 0
        %2911 = vmatpush1.bf16.msra.mxu0 0
        %2912 = vmatprep.subr.bf16.mxu0 0
        %2913 = vmatpush1.bf16.msra.mxu0 0
        %2914 = vmatprep.subr.bf16.mxu0 0
        %2915 = vmatpush1.bf16.msra.mxu0 0
        %2916 = vmatprep.subr.bf16.mxu0 0
        %2917 = vmatpush1.bf16.msra.mxu0 0
        %2918 = vmatprep.subr.bf16.mxu0 0
        %2919 = vmatpush1.bf16.msra.mxu0 0
        %2920 = vmatprep.subr.bf16.mxu0 0
        %2921 = vmatpush1.bf16.msra.mxu0 0
        %2922 = vmatprep.subr.bf16.mxu0 0
        %2923 = vmatpush1.bf16.msra.mxu0 0
        %2924 = vmatprep.mubr.bf16.mxu0 0
        %2925 = vmatmul.mubr.bf16.gmra.mrb[0].mxu0 %v2513
        %v2926 = vpop.f32.mrb[0].mxu0
        %v2927 = vadd.f32 %v2887, %v2926
        %v2928 = vpop.f32.mrb[0].mxu0
        %v2929 = vpop.f32.mrb[0].mxu0
        %v2930 = vpop.f32.mrb[0].mxu0
        %2931 = vdwg.mxu0
        %s2932 = scalar_lea.vmem %s438, 48 [#allocation2]
        %v2933 = vld [vmem:[%s2932] sm:$0xf]
        %v2935 = vsel %vm525, %v2933, 0
        %2937 = vmatprep.subr.bf16.mxu0 0
        %2938 = vmatpush1.bf16.msra.mxu0 %v676
        %2939 = vmatprep.subr.bf16.mxu0 0
        %2940 = vmatpush1.bf16.msra.mxu0 %v677
        %2941 = vmatprep.subr.bf16.mxu0 0
        %2942 = vmatpush1.bf16.msra.mxu0 %v678
        %2943 = vmatprep.subr.bf16.mxu0 0
        %2944 = vmatpush1.bf16.msra.mxu0 %v679
        %2945 = vmatprep.subr.bf16.mxu0 0
        %2946 = vmatpush1.bf16.msra.mxu0 %v689
        %2947 = vmatprep.subr.bf16.mxu0 0
        %2948 = vmatpush1.bf16.msra.mxu0 0
        %2949 = vmatprep.subr.bf16.mxu0 0
        %2950 = vmatpush1.bf16.msra.mxu0 0
        %2951 = vmatprep.subr.bf16.mxu0 0
        %2952 = vmatpush1.bf16.msra.mxu0 0
        %2953 = vmatprep.subr.bf16.mxu0 0
        %2954 = vmatpush1.bf16.msra.mxu0 0
        %2955 = vmatprep.subr.bf16.mxu0 0
        %2956 = vmatpush1.bf16.msra.mxu0 0
        %2957 = vmatprep.subr.bf16.mxu0 0
        %2958 = vmatpush1.bf16.msra.mxu0 0
        %2959 = vmatprep.subr.bf16.mxu0 0
        %2960 = vmatpush1.bf16.msra.mxu0 0
        %2961 = vmatprep.subr.bf16.mxu0 0
        %2962 = vmatpush1.bf16.msra.mxu0 0
        %2963 = vmatprep.subr.bf16.mxu0 0
        %2964 = vmatpush1.bf16.msra.mxu0 0
        %2965 = vmatprep.subr.bf16.mxu0 0
        %2966 = vmatpush1.bf16.msra.mxu0 0
        %2967 = vmatprep.subr.bf16.mxu0 0
        %2968 = vmatpush1.bf16.msra.mxu0 0
        %2969 = vmatprep.mubr.bf16.mxu0 0
        %2970 = vmatmul.mubr.bf16.gmra.mrb[0].mxu0 %v2935
        %v2971 = vpop.f32.mrb[0].mxu0
        %v2972 = vadd.f32 0.0, %v2971
        %v2973 = vpop.f32.mrb[0].mxu0
        %v2974 = vpop.f32.mrb[0].mxu0
        %v2975 = vpop.f32.mrb[0].mxu0
        %2976 = vdwg.mxu0
        %v2977 = vadd.f32 %v2927, %v2972
        %v2978 = vadd.f32 %v2977, %v737
        %v2979 = vmax.f32 %v2978, 0.0
        %v2980 = vpack.c.bf16 %v2979, %v2979
        %s2981 = scalar_lea.vmem %s4, 160
        %v2982 = vld [vmem:[%s2981] sm:$0xf]
        %v2983 = vld [vmem:[%s2981 + $0x4] sm:$0xf]
        %v2984 = vld [vmem:[%s2981 + $0x8] sm:$0xf]
        %v2985 = vld [vmem:[%s2981 + $0xc] sm:$0xf]
        %v2986 = vld [vmem:[%s2981 + $0x10] sm:$0xf]
        %v2987 = vld [vmem:[%s2981 + $0x14] sm:$0xf]
        %v2988 = vld [vmem:[%s2981 + $0x18] sm:$0xf]
        %v2989 = vld [vmem:[%s2981 + $0x1c] sm:$0xf]
        %v2998 = vunpack.c.l.b16 %v2982
        %v2999 = vunpack.c.l.b16 %v2983
        %v3000 = vunpack.c.l.b16 %v2984
        %v3001 = vunpack.c.l.b16 %v2985
        %v3002 = vunpack.c.l.b16 %v2986
        %v3003 = vunpack.c.l.b16 %v2987
        %v3004 = vunpack.c.l.b16 %v2988
        %v3005 = vunpack.c.l.b16 %v2989
        %v3006 = vpack.c.b16 %v2999, %v2998
        %v3007 = vpack.c.b16 %v3001, %v3000
        %v3008 = vpack.c.b16 %v3003, %v3002
        %v3009 = vpack.c.b16 %v3005, %v3004
        %v3015 = vsel %vm1193, %v2980, 0
        %3017 = vmatprep.subr.bf16.mxu0 0
        %3018 = vmatpush1.bf16.msra.mxu0 %v3006
        %3019 = vmatprep.subr.bf16.mxu0 0
        %3020 = vmatpush1.bf16.msra.mxu0 %v3007
        %3021 = vmatprep.subr.bf16.mxu0 0
        %3022 = vmatpush1.bf16.msra.mxu0 %v3008
        %3023 = vmatprep.subr.bf16.mxu0 0
        %3024 = vmatpush1.bf16.msra.mxu0 %v3009
        %3025 = vmatprep.subr.bf16.mxu0 0
        %3026 = vmatpush1.bf16.msra.mxu0 0
        %3027 = vmatprep.subr.bf16.mxu0 0
        %3028 = vmatpush1.bf16.msra.mxu0 0
        %3029 = vmatprep.subr.bf16.mxu0 0
        %3030 = vmatpush1.bf16.msra.mxu0 0
        %3031 = vmatprep.subr.bf16.mxu0 0
        %3032 = vmatpush1.bf16.msra.mxu0 0
        %3033 = vmatprep.subr.bf16.mxu0 0
        %3034 = vmatpush1.bf16.msra.mxu0 0
        %3035 = vmatprep.subr.bf16.mxu0 0
        %3036 = vmatpush1.bf16.msra.mxu0 0
        %3037 = vmatprep.subr.bf16.mxu0 0
        %3038 = vmatpush1.bf16.msra.mxu0 0
        %3039 = vmatprep.subr.bf16.mxu0 0
        %3040 = vmatpush1.bf16.msra.mxu0 0
        %3041 = vmatprep.subr.bf16.mxu0 0
        %3042 = vmatpush1.bf16.msra.mxu0 0
        %3043 = vmatprep.subr.bf16.mxu0 0
        %3044 = vmatpush1.bf16.msra.mxu0 0
        %3045 = vmatprep.subr.bf16.mxu0 0
        %3046 = vmatpush1.bf16.msra.mxu0 0
        %3047 = vmatprep.subr.bf16.mxu0 0
        %3048 = vmatpush1.bf16.msra.mxu0 0
        %3049 = vmatprep.mubr.bf16.mxu0 0
        %3050 = vmatmul.mubr.bf16.gmra.mrb[0].mxu0 %v3015
        %v3051 = vpop.f32.mrb[0].mxu0
        %v3052 = vadd.f32 0.0, %v3051
        %v3053 = vpop.f32.mrb[0].mxu0
        %v3054 = vpop.f32.mrb[0].mxu0
        %v3055 = vpop.f32.mrb[0].mxu0
        %3056 = vdwg.mxu0
        %v3057 = vadd.f32 %v2635, %v3052
        %s3058 = scalar_lea.vmem %s438, 116 [#allocation2]
        %v3059 = vld [vmem:[%s3058] sm:$0xf]
        %v3061 = vsel %vm525, %v3059, 0
        %3063 = vmatprep.subr.bf16.mxu0 0
        %3064 = vmatpush1.bf16.msra.mxu0 %v792
        %3065 = vmatprep.subr.bf16.mxu0 0
        %3066 = vmatpush1.bf16.msra.mxu0 %v793
        %3067 = vmatprep.subr.bf16.mxu0 0
        %3068 = vmatpush1.bf16.msra.mxu0 %v794
        %3069 = vmatprep.subr.bf16.mxu0 0
        %3070 = vmatpush1.bf16.msra.mxu0 %v795
        %3071 = vmatprep.subr.bf16.mxu0 0
        %3072 = vmatpush1.bf16.msra.mxu0 %v805
        %3073 = vmatprep.subr.bf16.mxu0 0
        %3074 = vmatpush1.bf16.msra.mxu0 0
        %3075 = vmatprep.subr.bf16.mxu0 0
        %3076 = vmatpush1.bf16.msra.mxu0 0
        %3077 = vmatprep.subr.bf16.mxu0 0
        %3078 = vmatpush1.bf16.msra.mxu0 0
        %3079 = vmatprep.subr.bf16.mxu0 0
        %3080 = vmatpush1.bf16.msra.mxu0 0
        %3081 = vmatprep.subr.bf16.mxu0 0
        %3082 = vmatpush1.bf16.msra.mxu0 0
        %3083 = vmatprep.subr.bf16.mxu0 0
        %3084 = vmatpush1.bf16.msra.mxu0 0
        %3085 = vmatprep.subr.bf16.mxu0 0
        %3086 = vmatpush1.bf16.msra.mxu0 0
        %3087 = vmatprep.subr.bf16.mxu0 0
        %3088 = vmatpush1.bf16.msra.mxu0 0
        %3089 = vmatprep.subr.bf16.mxu0 0
        %3090 = vmatpush1.bf16.msra.mxu0 0
        %3091 = vmatprep.subr.bf16.mxu0 0
        %3092 = vmatpush1.bf16.msra.mxu0 0
        %3093 = vmatprep.subr.bf16.mxu0 0
        %3094 = vmatpush1.bf16.msra.mxu0 0
        %3095 = vmatprep.mubr.bf16.mxu0 0
        %3096 = vmatmul.mubr.bf16.gmra.mrb[0].mxu0 %v3061
        %v3097 = vpop.f32.mrb[0].mxu0
        %v3098 = vadd.f32 0.0, %v3097
        %v3099 = vpop.f32.mrb[0].mxu0
        %v3100 = vpop.f32.mrb[0].mxu0
        %v3101 = vpop.f32.mrb[0].mxu0
        %3102 = vdwg.mxu0
        %3103 = vmatprep.subr.bf16.mxu0 0
        %3104 = vmatpush1.bf16.msra.mxu0 %v865
        %3105 = vmatprep.subr.bf16.mxu0 0
        %3106 = vmatpush1.bf16.msra.mxu0 %v866
        %3107 = vmatprep.subr.bf16.mxu0 0
        %3108 = vmatpush1.bf16.msra.mxu0 %v867
        %3109 = vmatprep.subr.bf16.mxu0 0
        %3110 = vmatpush1.bf16.msra.mxu0 %v868
        %3111 = vmatprep.subr.bf16.mxu0 0
        %3112 = vmatpush1.bf16.msra.mxu0 %v878
        %3113 = vmatprep.subr.bf16.mxu0 0
        %3114 = vmatpush1.bf16.msra.mxu0 0
        %3115 = vmatprep.subr.bf16.mxu0 0
        %3116 = vmatpush1.bf16.msra.mxu0 0
        %3117 = vmatprep.subr.bf16.mxu0 0
        %3118 = vmatpush1.bf16.msra.mxu0 0
        %3119 = vmatprep.subr.bf16.mxu0 0
        %3120 = vmatpush1.bf16.msra.mxu0 0
        %3121 = vmatprep.subr.bf16.mxu0 0
        %3122 = vmatpush1.bf16.msra.mxu0 0
        %3123 = vmatprep.subr.bf16.mxu0 0
        %3124 = vmatpush1.bf16.msra.mxu0 0
        %3125 = vmatprep.subr.bf16.mxu0 0
        %3126 = vmatpush1.bf16.msra.mxu0 0
        %3127 = vmatprep.subr.bf16.mxu0 0
        %3128 = vmatpush1.bf16.msra.mxu0 0
        %3129 = vmatprep.subr.bf16.mxu0 0
        %3130 = vmatpush1.bf16.msra.mxu0 0
        %3131 = vmatprep.subr.bf16.mxu0 0
        %3132 = vmatpush1.bf16.msra.mxu0 0
        %3133 = vmatprep.subr.bf16.mxu0 0
        %3134 = vmatpush1.bf16.msra.mxu0 0
        %3135 = vmatprep.mubr.bf16.mxu0 0
        %3136 = vmatmul.mubr.bf16.gmra.mrb[0].mxu0 %v2724
        %v3137 = vpop.f32.mrb[0].mxu0
        %v3138 = vadd.f32 %v3098, %v3137
        %v3139 = vpop.f32.mrb[0].mxu0
        %v3140 = vpop.f32.mrb[0].mxu0
        %v3141 = vpop.f32.mrb[0].mxu0
        %3142 = vdwg.mxu0
        %s3143 = scalar_lea.vmem %s438, 120 [#allocation2]
        %v3144 = vld [vmem:[%s3143] sm:$0xf]
        %v3146 = vsel %vm525, %v3144, 0
        %3148 = vmatprep.subr.bf16.mxu0 0
        %3149 = vmatpush1.bf16.msra.mxu0 %v950
        %3150 = vmatprep.subr.bf16.mxu0 0
        %3151 = vmatpush1.bf16.msra.mxu0 %v951
        %3152 = vmatprep.subr.bf16.mxu0 0
        %3153 = vmatpush1.bf16.msra.mxu0 %v952
        %3154 = vmatprep.subr.bf16.mxu0 0
        %3155 = vmatpush1.bf16.msra.mxu0 %v953
        %3156 = vmatprep.subr.bf16.mxu0 0
        %3157 = vmatpush1.bf16.msra.mxu0 %v963
        %3158 = vmatprep.subr.bf16.mxu0 0
        %3159 = vmatpush1.bf16.msra.mxu0 0
        %3160 = vmatprep.subr.bf16.mxu0 0
        %3161 = vmatpush1.bf16.msra.mxu0 0
        %3162 = vmatprep.subr.bf16.mxu0 0
        %3163 = vmatpush1.bf16.msra.mxu0 0
        %3164 = vmatprep.subr.bf16.mxu0 0
        %3165 = vmatpush1.bf16.msra.mxu0 0
        %3166 = vmatprep.subr.bf16.mxu0 0
        %3167 = vmatpush1.bf16.msra.mxu0 0
        %3168 = vmatprep.subr.bf16.mxu0 0
        %3169 = vmatpush1.bf16.msra.mxu0 0
        %3170 = vmatprep.subr.bf16.mxu0 0
        %3171 = vmatpush1.bf16.msra.mxu0 0
        %3172 = vmatprep.subr.bf16.mxu0 0
        %3173 = vmatpush1.bf16.msra.mxu0 0
        %3174 = vmatprep.subr.bf16.mxu0 0
        %3175 = vmatpush1.bf16.msra.mxu0 0
        %3176 = vmatprep.subr.bf16.mxu0 0
        %3177 = vmatpush1.bf16.msra.mxu0 0
        %3178 = vmatprep.subr.bf16.mxu0 0
        %3179 = vmatpush1.bf16.msra.mxu0 0
        %3180 = vmatprep.mubr.bf16.mxu0 0
        %3181 = vmatmul.mubr.bf16.gmra.mrb[0].mxu0 %v3146
        %v3182 = vpop.f32.mrb[0].mxu0
        %v3183 = vadd.f32 0.0, %v3182
        %v3184 = vpop.f32.mrb[0].mxu0
        %v3185 = vpop.f32.mrb[0].mxu0
        %v3186 = vpop.f32.mrb[0].mxu0
        %3187 = vdwg.mxu0
        %v3188 = vadd.f32 %v3138, %v3183
        %v3189 = vadd.f32 %v3188, %v1012
        %v3190 = vmax.f32 %v3189, 0.0
        %v3191 = vpack.c.bf16 %v3190, %v3190
        %s3192 = scalar_lea.vmem %s4, 416
        %v3193 = vld [vmem:[%s3192] sm:$0xf]
        %v3194 = vld [vmem:[%s3192 + $0x4] sm:$0xf]
        %v3195 = vld [vmem:[%s3192 + $0x8] sm:$0xf]
        %v3196 = vld [vmem:[%s3192 + $0xc] sm:$0xf]
        %v3197 = vld [vmem:[%s3192 + $0x10] sm:$0xf]
        %v3198 = vld [vmem:[%s3192 + $0x14] sm:$0xf]
        %v3199 = vld [vmem:[%s3192 + $0x18] sm:$0xf]
        %v3200 = vld [vmem:[%s3192 + $0x1c] sm:$0xf]
        %v3209 = vunpack.c.l.b16 %v3193
        %v3210 = vunpack.c.l.b16 %v3194
        %v3211 = vunpack.c.l.b16 %v3195
        %v3212 = vunpack.c.l.b16 %v3196
        %v3213 = vunpack.c.l.b16 %v3197
        %v3214 = vunpack.c.l.b16 %v3198
        %v3215 = vunpack.c.l.b16 %v3199
        %v3216 = vunpack.c.l.b16 %v3200
        %v3217 = vpack.c.b16 %v3210, %v3209
        %v3218 = vpack.c.b16 %v3212, %v3211
        %v3219 = vpack.c.b16 %v3214, %v3213
        %v3220 = vpack.c.b16 %v3216, %v3215
        %v3226 = vsel %vm1193, %v3191, 0
        %3228 = vmatprep.subr.bf16.mxu0 0
        %3229 = vmatpush1.bf16.msra.mxu0 %v3217
        %3230 = vmatprep.subr.bf16.mxu0 0
        %3231 = vmatpush1.bf16.msra.mxu0 %v3218
        %3232 = vmatprep.subr.bf16.mxu0 0
        %3233 = vmatpush1.bf16.msra.mxu0 %v3219
        %3234 = vmatprep.subr.bf16.mxu0 0
        %3235 = vmatpush1.bf16.msra.mxu0 %v3220
        %3236 = vmatprep.subr.bf16.mxu0 0
        %3237 = vmatpush1.bf16.msra.mxu0 0
        %3238 = vmatprep.subr.bf16.mxu0 0
        %3239 = vmatpush1.bf16.msra.mxu0 0
        %3240 = vmatprep.subr.bf16.mxu0 0
        %3241 = vmatpush1.bf16.msra.mxu0 0
        %3242 = vmatprep.subr.bf16.mxu0 0
        %3243 = vmatpush1.bf16.msra.mxu0 0
        %3244 = vmatprep.subr.bf16.mxu0 0
        %3245 = vmatpush1.bf16.msra.mxu0 0
        %3246 = vmatprep.subr.bf16.mxu0 0
        %3247 = vmatpush1.bf16.msra.mxu0 0
        %3248 = vmatprep.subr.bf16.mxu0 0
        %3249 = vmatpush1.bf16.msra.mxu0 0
        %3250 = vmatprep.subr.bf16.mxu0 0
        %3251 = vmatpush1.bf16.msra.mxu0 0
        %3252 = vmatprep.subr.bf16.mxu0 0
        %3253 = vmatpush1.bf16.msra.mxu0 0
        %3254 = vmatprep.subr.bf16.mxu0 0
        %3255 = vmatpush1.bf16.msra.mxu0 0
        %3256 = vmatprep.subr.bf16.mxu0 0
        %3257 = vmatpush1.bf16.msra.mxu0 0
        %3258 = vmatprep.subr.bf16.mxu0 0
        %3259 = vmatpush1.bf16.msra.mxu0 0
        %3260 = vmatprep.mubr.bf16.mxu0 0
        %3261 = vmatmul.mubr.bf16.gmra.mrb[0].mxu0 %v3226
        %v3262 = vpop.f32.mrb[0].mxu0
        %v3263 = vadd.f32 0.0, %v3262
        %v3264 = vpop.f32.mrb[0].mxu0
        %v3265 = vpop.f32.mrb[0].mxu0
        %v3266 = vpop.f32.mrb[0].mxu0
        %3267 = vdwg.mxu0
        %v3268 = vadd.f32 %v2846, %v3263
        %s3269 = scalar_lea.vmem %s438, 52 [#allocation2]
        %v3270 = vld [vmem:[%s3269] sm:$0xf]
        %v3272 = vsel %vm525, %v3270, 0
        %3274 = vmatprep.subr.bf16.mxu0 0
        %3275 = vmatpush1.bf16.msra.mxu0 %v516
        %3276 = vmatprep.subr.bf16.mxu0 0
        %3277 = vmatpush1.bf16.msra.mxu0 %v517
        %3278 = vmatprep.subr.bf16.mxu0 0
        %3279 = vmatpush1.bf16.msra.mxu0 %v518
        %3280 = vmatprep.subr.bf16.mxu0 0
        %3281 = vmatpush1.bf16.msra.mxu0 %v519
        %3282 = vmatprep.subr.bf16.mxu0 0
        %3283 = vmatpush1.bf16.msra.mxu0 %v531
        %3284 = vmatprep.subr.bf16.mxu0 0
        %3285 = vmatpush1.bf16.msra.mxu0 0
        %3286 = vmatprep.subr.bf16.mxu0 0
        %3287 = vmatpush1.bf16.msra.mxu0 0
        %3288 = vmatprep.subr.bf16.mxu0 0
        %3289 = vmatpush1.bf16.msra.mxu0 0
        %3290 = vmatprep.subr.bf16.mxu0 0
        %3291 = vmatpush1.bf16.msra.mxu0 0
        %3292 = vmatprep.subr.bf16.mxu0 0
        %3293 = vmatpush1.bf16.msra.mxu0 0
        %3294 = vmatprep.subr.bf16.mxu0 0
        %3295 = vmatpush1.bf16.msra.mxu0 0
        %3296 = vmatprep.subr.bf16.mxu0 0
        %3297 = vmatpush1.bf16.msra.mxu0 0
        %3298 = vmatprep.subr.bf16.mxu0 0
        %3299 = vmatpush1.bf16.msra.mxu0 0
        %3300 = vmatprep.subr.bf16.mxu0 0
        %3301 = vmatpush1.bf16.msra.mxu0 0
        %3302 = vmatprep.subr.bf16.mxu0 0
        %3303 = vmatpush1.bf16.msra.mxu0 0
        %3304 = vmatprep.subr.bf16.mxu0 0
        %3305 = vmatpush1.bf16.msra.mxu0 0
        %3306 = vmatprep.mubr.bf16.mxu0 0
        %3307 = vmatmul.mubr.bf16.gmra.mrb[0].mxu0 %v3272
        %v3308 = vpop.f32.mrb[0].mxu0
        %v3309 = vadd.f32 0.0, %v3308
        %v3310 = vpop.f32.mrb[0].mxu0
        %v3311 = vpop.f32.mrb[0].mxu0
        %v3312 = vpop.f32.mrb[0].mxu0
        %3313 = vdwg.mxu0
        %3314 = vmatprep.subr.bf16.mxu0 0
        %3315 = vmatpush1.bf16.msra.mxu0 %v591
        %3316 = vmatprep.subr.bf16.mxu0 0
        %3317 = vmatpush1.bf16.msra.mxu0 %v592
        %3318 = vmatprep.subr.bf16.mxu0 0
        %3319 = vmatpush1.bf16.msra.mxu0 %v593
        %3320 = vmatprep.subr.bf16.mxu0 0
        %3321 = vmatpush1.bf16.msra.mxu0 %v594
        %3322 = vmatprep.subr.bf16.mxu0 0
        %3323 = vmatpush1.bf16.msra.mxu0 %v604
        %3324 = vmatprep.subr.bf16.mxu0 0
        %3325 = vmatpush1.bf16.msra.mxu0 0
        %3326 = vmatprep.subr.bf16.mxu0 0
        %3327 = vmatpush1.bf16.msra.mxu0 0
        %3328 = vmatprep.subr.bf16.mxu0 0
        %3329 = vmatpush1.bf16.msra.mxu0 0
        %3330 = vmatprep.subr.bf16.mxu0 0
        %3331 = vmatpush1.bf16.msra.mxu0 0
        %3332 = vmatprep.subr.bf16.mxu0 0
        %3333 = vmatpush1.bf16.msra.mxu0 0
        %3334 = vmatprep.subr.bf16.mxu0 0
        %3335 = vmatpush1.bf16.msra.mxu0 0
        %3336 = vmatprep.subr.bf16.mxu0 0
        %3337 = vmatpush1.bf16.msra.mxu0 0
        %3338 = vmatprep.subr.bf16.mxu0 0
        %3339 = vmatpush1.bf16.msra.mxu0 0
        %3340 = vmatprep.subr.bf16.mxu0 0
        %3341 = vmatpush1.bf16.msra.mxu0 0
        %3342 = vmatprep.subr.bf16.mxu0 0
        %3343 = vmatpush1.bf16.msra.mxu0 0
        %3344 = vmatprep.subr.bf16.mxu0 0
        %3345 = vmatpush1.bf16.msra.mxu0 0
        %3346 = vmatprep.mubr.bf16.mxu0 0
        %3347 = vmatmul.mubr.bf16.gmra.mrb[0].mxu0 %v2935
        %v3348 = vpop.f32.mrb[0].mxu0
        %v3349 = vadd.f32 %v3309, %v3348
        %v3350 = vpop.f32.mrb[0].mxu0
        %v3351 = vpop.f32.mrb[0].mxu0
        %v3352 = vpop.f32.mrb[0].mxu0
        %3353 = vdwg.mxu0
        %s3354 = scalar_lea.vmem %s438, 56 [#allocation2]
        %v3355 = vld [vmem:[%s3354] sm:$0xf]
        %v3357 = vsel %vm525, %v3355, 0
        %3359 = vmatprep.subr.bf16.mxu0 0
        %3360 = vmatpush1.bf16.msra.mxu0 %v676
        %3361 = vmatprep.subr.bf16.mxu0 0
        %3362 = vmatpush1.bf16.msra.mxu0 %v677
        %3363 = vmatprep.subr.bf16.mxu0 0
        %3364 = vmatpush1.bf16.msra.mxu0 %v678
        %3365 = vmatprep.subr.bf16.mxu0 0
        %3366 = vmatpush1.bf16.msra.mxu0 %v679
        %3367 = vmatprep.subr.bf16.mxu0 0
        %3368 = vmatpush1.bf16.msra.mxu0 %v689
        %3369 = vmatprep.subr.bf16.mxu0 0
        %3370 = vmatpush1.bf16.msra.mxu0 0
        %3371 = vmatprep.subr.bf16.mxu0 0
        %3372 = vmatpush1.bf16.msra.mxu0 0
        %3373 = vmatprep.subr.bf16.mxu0 0
        %3374 = vmatpush1.bf16.msra.mxu0 0
        %3375 = vmatprep.subr.bf16.mxu0 0
        %3376 = vmatpush1.bf16.msra.mxu0 0
        %3377 = vmatprep.subr.bf16.mxu0 0
        %3378 = vmatpush1.bf16.msra.mxu0 0
        %3379 = vmatprep.subr.bf16.mxu0 0
        %3380 = vmatpush1.bf16.msra.mxu0 0
        %3381 = vmatprep.subr.bf16.mxu0 0
        %3382 = vmatpush1.bf16.msra.mxu0 0
        %3383 = vmatprep.subr.bf16.mxu0 0
        %3384 = vmatpush1.bf16.msra.mxu0 0
        %3385 = vmatprep.subr.bf16.mxu0 0
        %3386 = vmatpush1.bf16.msra.mxu0 0
        %3387 = vmatprep.subr.bf16.mxu0 0
        %3388 = vmatpush1.bf16.msra.mxu0 0
        %3389 = vmatprep.subr.bf16.mxu0 0
        %3390 = vmatpush1.bf16.msra.mxu0 0
        %3391 = vmatprep.mubr.bf16.mxu0 0
        %3392 = vmatmul.mubr.bf16.gmra.mrb[0].mxu0 %v3357
        %v3393 = vpop.f32.mrb[0].mxu0
        %v3394 = vadd.f32 0.0, %v3393
        %v3395 = vpop.f32.mrb[0].mxu0
        %v3396 = vpop.f32.mrb[0].mxu0
        %v3397 = vpop.f32.mrb[0].mxu0
        %3398 = vdwg.mxu0
        %v3399 = vadd.f32 %v3349, %v3394
        %v3400 = vadd.f32 %v3399, %v737
        %v3401 = vmax.f32 %v3400, 0.0
        %v3402 = vpack.c.bf16 %v3401, %v3401
        %s3403 = scalar_lea.vmem %s4, 192
        %v3404 = vld [vmem:[%s3403] sm:$0xf]
        %v3405 = vld [vmem:[%s3403 + $0x4] sm:$0xf]
        %v3406 = vld [vmem:[%s3403 + $0x8] sm:$0xf]
        %v3407 = vld [vmem:[%s3403 + $0xc] sm:$0xf]
        %v3408 = vld [vmem:[%s3403 + $0x10] sm:$0xf]
        %v3409 = vld [vmem:[%s3403 + $0x14] sm:$0xf]
        %v3410 = vld [vmem:[%s3403 + $0x18] sm:$0xf]
        %v3411 = vld [vmem:[%s3403 + $0x1c] sm:$0xf]
        %v3420 = vunpack.c.l.b16 %v3404
        %v3421 = vunpack.c.l.b16 %v3405
        %v3422 = vunpack.c.l.b16 %v3406
        %v3423 = vunpack.c.l.b16 %v3407
        %v3424 = vunpack.c.l.b16 %v3408
        %v3425 = vunpack.c.l.b16 %v3409
        %v3426 = vunpack.c.l.b16 %v3410
        %v3427 = vunpack.c.l.b16 %v3411
        %v3428 = vpack.c.b16 %v3421, %v3420
        %v3429 = vpack.c.b16 %v3423, %v3422
        %v3430 = vpack.c.b16 %v3425, %v3424
        %v3431 = vpack.c.b16 %v3427, %v3426
        %v3437 = vsel %vm1193, %v3402, 0
        %3439 = vmatprep.subr.bf16.mxu0 0
        %3440 = vmatpush1.bf16.msra.mxu0 %v3428
        %3441 = vmatprep.subr.bf16.mxu0 0
        %3442 = vmatpush1.bf16.msra.mxu0 %v3429
        %3443 = vmatprep.subr.bf16.mxu0 0
        %3444 = vmatpush1.bf16.msra.mxu0 %v3430
        %3445 = vmatprep.subr.bf16.mxu0 0
        %3446 = vmatpush1.bf16.msra.mxu0 %v3431
        %3447 = vmatprep.subr.bf16.mxu0 0
        %3448 = vmatpush1.bf16.msra.mxu0 0
        %3449 = vmatprep.subr.bf16.mxu0 0
        %3450 = vmatpush1.bf16.msra.mxu0 0
        %3451 = vmatprep.subr.bf16.mxu0 0
        %3452 = vmatpush1.bf16.msra.mxu0 0
        %3453 = vmatprep.subr.bf16.mxu0 0
        %3454 = vmatpush1.bf16.msra.mxu0 0
        %3455 = vmatprep.subr.bf16.mxu0 0
        %3456 = vmatpush1.bf16.msra.mxu0 0
        %3457 = vmatprep.subr.bf16.mxu0 0
        %3458 = vmatpush1.bf16.msra.mxu0 0
        %3459 = vmatprep.subr.bf16.mxu0 0
        %3460 = vmatpush1.bf16.msra.mxu0 0
        %3461 = vmatprep.subr.bf16.mxu0 0
        %3462 = vmatpush1.bf16.msra.mxu0 0
        %3463 = vmatprep.subr.bf16.mxu0 0
        %3464 = vmatpush1.bf16.msra.mxu0 0
        %3465 = vmatprep.subr.bf16.mxu0 0
        %3466 = vmatpush1.bf16.msra.mxu0 0
        %3467 = vmatprep.subr.bf16.mxu0 0
        %3468 = vmatpush1.bf16.msra.mxu0 0
        %3469 = vmatprep.subr.bf16.mxu0 0
        %3470 = vmatpush1.bf16.msra.mxu0 0
        %3471 = vmatprep.mubr.bf16.mxu0 0
        %3472 = vmatmul.mubr.bf16.gmra.mrb[0].mxu0 %v3437
        %v3473 = vpop.f32.mrb[0].mxu0
        %v3474 = vadd.f32 0.0, %v3473
        %v3475 = vpop.f32.mrb[0].mxu0
        %v3476 = vpop.f32.mrb[0].mxu0
        %v3477 = vpop.f32.mrb[0].mxu0
        %3478 = vdwg.mxu0
        %v3479 = vadd.f32 %v3057, %v3474
        %s3480 = scalar_lea.vmem %s438, 124 [#allocation2]
        %v3481 = vld [vmem:[%s3480] sm:$0xf]
        %v3483 = vsel %vm525, %v3481, 0
        %3485 = vmatprep.subr.bf16.mxu0 0
        %3486 = vmatpush1.bf16.msra.mxu0 %v792
        %3487 = vmatprep.subr.bf16.mxu0 0
        %3488 = vmatpush1.bf16.msra.mxu0 %v793
        %3489 = vmatprep.subr.bf16.mxu0 0
        %3490 = vmatpush1.bf16.msra.mxu0 %v794
        %3491 = vmatprep.subr.bf16.mxu0 0
        %3492 = vmatpush1.bf16.msra.mxu0 %v795
        %3493 = vmatprep.subr.bf16.mxu0 0
        %3494 = vmatpush1.bf16.msra.mxu0 %v805
        %3495 = vmatprep.subr.bf16.mxu0 0
        %3496 = vmatpush1.bf16.msra.mxu0 0
        %3497 = vmatprep.subr.bf16.mxu0 0
        %3498 = vmatpush1.bf16.msra.mxu0 0
        %3499 = vmatprep.subr.bf16.mxu0 0
        %3500 = vmatpush1.bf16.msra.mxu0 0
        %3501 = vmatprep.subr.bf16.mxu0 0
        %3502 = vmatpush1.bf16.msra.mxu0 0
        %3503 = vmatprep.subr.bf16.mxu0 0
        %3504 = vmatpush1.bf16.msra.mxu0 0
        %3505 = vmatprep.subr.bf16.mxu0 0
        %3506 = vmatpush1.bf16.msra.mxu0 0
        %3507 = vmatprep.subr.bf16.mxu0 0
        %3508 = vmatpush1.bf16.msra.mxu0 0
        %3509 = vmatprep.subr.bf16.mxu0 0
        %3510 = vmatpush1.bf16.msra.mxu0 0
        %3511 = vmatprep.subr.bf16.mxu0 0
        %3512 = vmatpush1.bf16.msra.mxu0 0
        %3513 = vmatprep.subr.bf16.mxu0 0
        %3514 = vmatpush1.bf16.msra.mxu0 0
        %3515 = vmatprep.subr.bf16.mxu0 0
        %3516 = vmatpush1.bf16.msra.mxu0 0
        %3517 = vmatprep.mubr.bf16.mxu0 0
        %3518 = vmatmul.mubr.bf16.gmra.mrb[0].mxu0 %v3483
        %v3519 = vpop.f32.mrb[0].mxu0
        %v3520 = vadd.f32 0.0, %v3519
        %v3521 = vpop.f32.mrb[0].mxu0
        %v3522 = vpop.f32.mrb[0].mxu0
        %v3523 = vpop.f32.mrb[0].mxu0
        %3524 = vdwg.mxu0
        %3525 = vmatprep.subr.bf16.mxu0 0
        %3526 = vmatpush1.bf16.msra.mxu0 %v865
        %3527 = vmatprep.subr.bf16.mxu0 0
        %3528 = vmatpush1.bf16.msra.mxu0 %v866
        %3529 = vmatprep.subr.bf16.mxu0 0
        %3530 = vmatpush1.bf16.msra.mxu0 %v867
        %3531 = vmatprep.subr.bf16.mxu0 0
        %3532 = vmatpush1.bf16.msra.mxu0 %v868
        %3533 = vmatprep.subr.bf16.mxu0 0
        %3534 = vmatpush1.bf16.msra.mxu0 %v878
        %3535 = vmatprep.subr.bf16.mxu0 0
        %3536 = vmatpush1.bf16.msra.mxu0 0
        %3537 = vmatprep.subr.bf16.mxu0 0
        %3538 = vmatpush1.bf16.msra.mxu0 0
        %3539 = vmatprep.subr.bf16.mxu0 0
        %3540 = vmatpush1.bf16.msra.mxu0 0
        %3541 = vmatprep.subr.bf16.mxu0 0
        %3542 = vmatpush1.bf16.msra.mxu0 0
        %3543 = vmatprep.subr.bf16.mxu0 0
        %3544 = vmatpush1.bf16.msra.mxu0 0
        %3545 = vmatprep.subr.bf16.mxu0 0
        %3546 = vmatpush1.bf16.msra.mxu0 0
        %3547 = vmatprep.subr.bf16.mxu0 0
        %3548 = vmatpush1.bf16.msra.mxu0 0
        %3549 = vmatprep.subr.bf16.mxu0 0
        %3550 = vmatpush1.bf16.msra.mxu0 0
        %3551 = vmatprep.subr.bf16.mxu0 0
        %3552 = vmatpush1.bf16.msra.mxu0 0
        %3553 = vmatprep.subr.bf16.mxu0 0
        %3554 = vmatpush1.bf16.msra.mxu0 0
        %3555 = vmatprep.subr.bf16.mxu0 0
        %3556 = vmatpush1.bf16.msra.mxu0 0
        %3557 = vmatprep.mubr.bf16.mxu0 0
        %3558 = vmatmul.mubr.bf16.gmra.mrb[0].mxu0 %v3146
        %v3559 = vpop.f32.mrb[0].mxu0
        %v3560 = vadd.f32 %v3520, %v3559
        %v3561 = vpop.f32.mrb[0].mxu0
        %v3562 = vpop.f32.mrb[0].mxu0
        %v3563 = vpop.f32.mrb[0].mxu0
        %3564 = vdwg.mxu0
        %s3565 = scalar_lea.vmem %s438, 128 [#allocation2]
        %v3566 = vld [vmem:[%s3565] sm:$0xf]
        %v3568 = vsel %vm525, %v3566, 0
        %3570 = vmatprep.subr.bf16.mxu0 0
        %3571 = vmatpush1.bf16.msra.mxu0 %v950
        %3572 = vmatprep.subr.bf16.mxu0 0
        %3573 = vmatpush1.bf16.msra.mxu0 %v951
        %3574 = vmatprep.subr.bf16.mxu0 0
        %3575 = vmatpush1.bf16.msra.mxu0 %v952
        %3576 = vmatprep.subr.bf16.mxu0 0
        %3577 = vmatpush1.bf16.msra.mxu0 %v953
        %3578 = vmatprep.subr.bf16.mxu0 0
        %3579 = vmatpush1.bf16.msra.mxu0 %v963
        %3580 = vmatprep.subr.bf16.mxu0 0
        %3581 = vmatpush1.bf16.msra.mxu0 0
        %3582 = vmatprep.subr.bf16.mxu0 0
        %3583 = vmatpush1.bf16.msra.mxu0 0
        %3584 = vmatprep.subr.bf16.mxu0 0
        %3585 = vmatpush1.bf16.msra.mxu0 0
        %3586 = vmatprep.subr.bf16.mxu0 0
        %3587 = vmatpush1.bf16.msra.mxu0 0
        %3588 = vmatprep.subr.bf16.mxu0 0
        %3589 = vmatpush1.bf16.msra.mxu0 0
        %3590 = vmatprep.subr.bf16.mxu0 0
        %3591 = vmatpush1.bf16.msra.mxu0 0
        %3592 = vmatprep.subr.bf16.mxu0 0
        %3593 = vmatpush1.bf16.msra.mxu0 0
        %3594 = vmatprep.subr.bf16.mxu0 0
        %3595 = vmatpush1.bf16.msra.mxu0 0
        %3596 = vmatprep.subr.bf16.mxu0 0
        %3597 = vmatpush1.bf16.msra.mxu0 0
        %3598 = vmatprep.subr.bf16.mxu0 0
        %3599 = vmatpush1.bf16.msra.mxu0 0
        %3600 = vmatprep.subr.bf16.mxu0 0
        %3601 = vmatpush1.bf16.msra.mxu0 0
        %3602 = vmatprep.mubr.bf16.mxu0 0
        %3603 = vmatmul.mubr.bf16.gmra.mrb[0].mxu0 %v3568
        %v3604 = vpop.f32.mrb[0].mxu0
        %v3605 = vadd.f32 0.0, %v3604
        %v3606 = vpop.f32.mrb[0].mxu0
        %v3607 = vpop.f32.mrb[0].mxu0
        %v3608 = vpop.f32.mrb[0].mxu0
        %3609 = vdwg.mxu0
        %v3610 = vadd.f32 %v3560, %v3605
        %v3611 = vadd.f32 %v3610, %v1012
        %v3612 = vmax.f32 %v3611, 0.0
        %v3613 = vpack.c.bf16 %v3612, %v3612
        %s3614 = scalar_lea.vmem %s4, 448
        %v3615 = vld [vmem:[%s3614] sm:$0xf]
        %v3616 = vld [vmem:[%s3614 + $0x4] sm:$0xf]
        %v3617 = vld [vmem:[%s3614 + $0x8] sm:$0xf]
        %v3618 = vld [vmem:[%s3614 + $0xc] sm:$0xf]
        %v3619 = vld [vmem:[%s3614 + $0x10] sm:$0xf]
        %v3620 = vld [vmem:[%s3614 + $0x14] sm:$0xf]
        %v3621 = vld [vmem:[%s3614 + $0x18] sm:$0xf]
        %v3622 = vld [vmem:[%s3614 + $0x1c] sm:$0xf]
        %v3631 = vunpack.c.l.b16 %v3615
        %v3632 = vunpack.c.l.b16 %v3616
        %v3633 = vunpack.c.l.b16 %v3617
        %v3634 = vunpack.c.l.b16 %v3618
        %v3635 = vunpack.c.l.b16 %v3619
        %v3636 = vunpack.c.l.b16 %v3620
        %v3637 = vunpack.c.l.b16 %v3621
        %v3638 = vunpack.c.l.b16 %v3622
        %v3639 = vpack.c.b16 %v3632, %v3631
        %v3640 = vpack.c.b16 %v3634, %v3633
        %v3641 = vpack.c.b16 %v3636, %v3635
        %v3642 = vpack.c.b16 %v3638, %v3637
        %v3648 = vsel %vm1193, %v3613, 0
        %3650 = vmatprep.subr.bf16.mxu0 0
        %3651 = vmatpush1.bf16.msra.mxu0 %v3639
        %3652 = vmatprep.subr.bf16.mxu0 0
        %3653 = vmatpush1.bf16.msra.mxu0 %v3640
        %3654 = vmatprep.subr.bf16.mxu0 0
        %3655 = vmatpush1.bf16.msra.mxu0 %v3641
        %3656 = vmatprep.subr.bf16.mxu0 0
        %3657 = vmatpush1.bf16.msra.mxu0 %v3642
        %3658 = vmatprep.subr.bf16.mxu0 0
        %3659 = vmatpush1.bf16.msra.mxu0 0
        %3660 = vmatprep.subr.bf16.mxu0 0
        %3661 = vmatpush1.bf16.msra.mxu0 0
        %3662 = vmatprep.subr.bf16.mxu0 0
        %3663 = vmatpush1.bf16.msra.mxu0 0
        %3664 = vmatprep.subr.bf16.mxu0 0
        %3665 = vmatpush1.bf16.msra.mxu0 0
        %3666 = vmatprep.subr.bf16.mxu0 0
        %3667 = vmatpush1.bf16.msra.mxu0 0
        %3668 = vmatprep.subr.bf16.mxu0 0
        %3669 = vmatpush1.bf16.msra.mxu0 0
        %3670 = vmatprep.subr.bf16.mxu0 0
        %3671 = vmatpush1.bf16.msra.mxu0 0
        %3672 = vmatprep.subr.bf16.mxu0 0
        %3673 = vmatpush1.bf16.msra.mxu0 0
        %3674 = vmatprep.subr.bf16.mxu0 0
        %3675 = vmatpush1.bf16.msra.mxu0 0
        %3676 = vmatprep.subr.bf16.mxu0 0
        %3677 = vmatpush1.bf16.msra.mxu0 0
        %3678 = vmatprep.subr.bf16.mxu0 0
        %3679 = vmatpush1.bf16.msra.mxu0 0
        %3680 = vmatprep.subr.bf16.mxu0 0
        %3681 = vmatpush1.bf16.msra.mxu0 0
        %3682 = vmatprep.mubr.bf16.mxu0 0
        %3683 = vmatmul.mubr.bf16.gmra.mrb[0].mxu0 %v3648
        %v3684 = vpop.f32.mrb[0].mxu0
        %v3685 = vadd.f32 0.0, %v3684
        %v3686 = vpop.f32.mrb[0].mxu0
        %v3687 = vpop.f32.mrb[0].mxu0
        %v3688 = vpop.f32.mrb[0].mxu0
        %3689 = vdwg.mxu0
        %v3690 = vadd.f32 %v3268, %v3685
        %s3691 = scalar_lea.vmem %s438, 60 [#allocation2]
        %v3692 = vld [vmem:[%s3691] sm:$0xf]
        %v3694 = vsel %vm525, %v3692, 0
        %3696 = vmatprep.subr.bf16.mxu0 0
        %3697 = vmatpush1.bf16.msra.mxu0 %v516
        %3698 = vmatprep.subr.bf16.mxu0 0
        %3699 = vmatpush1.bf16.msra.mxu0 %v517
        %3700 = vmatprep.subr.bf16.mxu0 0
        %3701 = vmatpush1.bf16.msra.mxu0 %v518
        %3702 = vmatprep.subr.bf16.mxu0 0
        %3703 = vmatpush1.bf16.msra.mxu0 %v519
        %3704 = vmatprep.subr.bf16.mxu0 0
        %3705 = vmatpush1.bf16.msra.mxu0 %v531
        %3706 = vmatprep.subr.bf16.mxu0 0
        %3707 = vmatpush1.bf16.msra.mxu0 0
        %3708 = vmatprep.subr.bf16.mxu0 0
        %3709 = vmatpush1.bf16.msra.mxu0 0
        %3710 = vmatprep.subr.bf16.mxu0 0
        %3711 = vmatpush1.bf16.msra.mxu0 0
        %3712 = vmatprep.subr.bf16.mxu0 0
        %3713 = vmatpush1.bf16.msra.mxu0 0
        %3714 = vmatprep.subr.bf16.mxu0 0
        %3715 = vmatpush1.bf16.msra.mxu0 0
        %3716 = vmatprep.subr.bf16.mxu0 0
        %3717 = vmatpush1.bf16.msra.mxu0 0
        %3718 = vmatprep.subr.bf16.mxu0 0
        %3719 = vmatpush1.bf16.msra.mxu0 0
        %3720 = vmatprep.subr.bf16.mxu0 0
        %3721 = vmatpush1.bf16.msra.mxu0 0
        %3722 = vmatprep.subr.bf16.mxu0 0
        %3723 = vmatpush1.bf16.msra.mxu0 0
        %3724 = vmatprep.subr.bf16.mxu0 0
        %3725 = vmatpush1.bf16.msra.mxu0 0
        %3726 = vmatprep.subr.bf16.mxu0 0
        %3727 = vmatpush1.bf16.msra.mxu0 0
        %3728 = vmatprep.mubr.bf16.mxu0 0
        %3729 = vmatmul.mubr.bf16.gmra.mrb[0].mxu0 %v3694
        %v3730 = vpop.f32.mrb[0].mxu0
        %v3731 = vadd.f32 0.0, %v3730
        %v3732 = vpop.f32.mrb[0].mxu0
        %v3733 = vpop.f32.mrb[0].mxu0
        %v3734 = vpop.f32.mrb[0].mxu0
        %3735 = vdwg.mxu0
        %3736 = vmatprep.subr.bf16.mxu0 0
        %3737 = vmatpush1.bf16.msra.mxu0 %v591
        %3738 = vmatprep.subr.bf16.mxu0 0
        %3739 = vmatpush1.bf16.msra.mxu0 %v592
        %3740 = vmatprep.subr.bf16.mxu0 0
        %3741 = vmatpush1.bf16.msra.mxu0 %v593
        %3742 = vmatprep.subr.bf16.mxu0 0
        %3743 = vmatpush1.bf16.msra.mxu0 %v594
        %3744 = vmatprep.subr.bf16.mxu0 0
        %3745 = vmatpush1.bf16.msra.mxu0 %v604
        %3746 = vmatprep.subr.bf16.mxu0 0
        %3747 = vmatpush1.bf16.msra.mxu0 0
        %3748 = vmatprep.subr.bf16.mxu0 0
        %3749 = vmatpush1.bf16.msra.mxu0 0
        %3750 = vmatprep.subr.bf16.mxu0 0
        %3751 = vmatpush1.bf16.msra.mxu0 0
        %3752 = vmatprep.subr.bf16.mxu0 0
        %3753 = vmatpush1.bf16.msra.mxu0 0
        %3754 = vmatprep.subr.bf16.mxu0 0
        %3755 = vmatpush1.bf16.msra.mxu0 0
        %3756 = vmatprep.subr.bf16.mxu0 0
        %3757 = vmatpush1.bf16.msra.mxu0 0
        %3758 = vmatprep.subr.bf16.mxu0 0
        %3759 = vmatpush1.bf16.msra.mxu0 0
        %3760 = vmatprep.subr.bf16.mxu0 0
        %3761 = vmatpush1.bf16.msra.mxu0 0
        %3762 = vmatprep.subr.bf16.mxu0 0
        %3763 = vmatpush1.bf16.msra.mxu0 0
        %3764 = vmatprep.subr.bf16.mxu0 0
        %3765 = vmatpush1.bf16.msra.mxu0 0
        %3766 = vmatprep.subr.bf16.mxu0 0
        %3767 = vmatpush1.bf16.msra.mxu0 0
        %3768 = vmatprep.mubr.bf16.mxu0 0
        %3769 = vmatmul.mubr.bf16.gmra.mrb[0].mxu0 %v3357
        %v3770 = vpop.f32.mrb[0].mxu0
        %v3771 = vadd.f32 %v3731, %v3770
        %v3772 = vpop.f32.mrb[0].mxu0
        %v3773 = vpop.f32.mrb[0].mxu0
        %v3774 = vpop.f32.mrb[0].mxu0
        %3775 = vdwg.mxu0
        %s3776 = scalar_lea.vmem %s438, 64 [#allocation2]
        %v3777 = vld [vmem:[%s3776] sm:$0xf]
        %v3779 = vsel %vm525, %v3777, 0
        %3781 = vmatprep.subr.bf16.mxu0 0
        %3782 = vmatpush1.bf16.msra.mxu0 %v676
        %3783 = vmatprep.subr.bf16.mxu0 0
        %3784 = vmatpush1.bf16.msra.mxu0 %v677
        %3785 = vmatprep.subr.bf16.mxu0 0
        %3786 = vmatpush1.bf16.msra.mxu0 %v678
        %3787 = vmatprep.subr.bf16.mxu0 0
        %3788 = vmatpush1.bf16.msra.mxu0 %v679
        %3789 = vmatprep.subr.bf16.mxu0 0
        %3790 = vmatpush1.bf16.msra.mxu0 %v689
        %3791 = vmatprep.subr.bf16.mxu0 0
        %3792 = vmatpush1.bf16.msra.mxu0 0
        %3793 = vmatprep.subr.bf16.mxu0 0
        %3794 = vmatpush1.bf16.msra.mxu0 0
        %3795 = vmatprep.subr.bf16.mxu0 0
        %3796 = vmatpush1.bf16.msra.mxu0 0
        %3797 = vmatprep.subr.bf16.mxu0 0
        %3798 = vmatpush1.bf16.msra.mxu0 0
        %3799 = vmatprep.subr.bf16.mxu0 0
        %3800 = vmatpush1.bf16.msra.mxu0 0
        %3801 = vmatprep.subr.bf16.mxu0 0
        %3802 = vmatpush1.bf16.msra.mxu0 0
        %3803 = vmatprep.subr.bf16.mxu0 0
        %3804 = vmatpush1.bf16.msra.mxu0 0
        %3805 = vmatprep.subr.bf16.mxu0 0
        %3806 = vmatpush1.bf16.msra.mxu0 0
        %3807 = vmatprep.subr.bf16.mxu0 0
        %3808 = vmatpush1.bf16.msra.mxu0 0
        %3809 = vmatprep.subr.bf16.mxu0 0
        %3810 = vmatpush1.bf16.msra.mxu0 0
        %3811 = vmatprep.subr.bf16.mxu0 0
        %3812 = vmatpush1.bf16.msra.mxu0 0
        %3813 = vmatprep.mubr.bf16.mxu0 0
        %3814 = vmatmul.mubr.bf16.gmra.mrb[0].mxu0 %v3779
        %v3815 = vpop.f32.mrb[0].mxu0
        %v3816 = vadd.f32 0.0, %v3815
        %v3817 = vpop.f32.mrb[0].mxu0
        %v3818 = vpop.f32.mrb[0].mxu0
        %v3819 = vpop.f32.mrb[0].mxu0
        %3820 = vdwg.mxu0
        %v3821 = vadd.f32 %v3771, %v3816
        %v3822 = vadd.f32 %v3821, %v737
        %v3823 = vmax.f32 %v3822, 0.0
        %v3824 = vpack.c.bf16 %v3823, %v3823
        %s3825 = scalar_lea.vmem %s4, 224
        %v3826 = vld [vmem:[%s3825] sm:$0xf]
        %v3827 = vld [vmem:[%s3825 + $0x4] sm:$0xf]
        %v3828 = vld [vmem:[%s3825 + $0x8] sm:$0xf]
        %v3829 = vld [vmem:[%s3825 + $0xc] sm:$0xf]
        %v3830 = vld [vmem:[%s3825 + $0x10] sm:$0xf]
        %v3831 = vld [vmem:[%s3825 + $0x14] sm:$0xf]
        %v3832 = vld [vmem:[%s3825 + $0x18] sm:$0xf]
        %v3833 = vld [vmem:[%s3825 + $0x1c] sm:$0xf]
        %v3842 = vunpack.c.l.b16 %v3826
        %v3843 = vunpack.c.l.b16 %v3827
        %v3844 = vunpack.c.l.b16 %v3828
        %v3845 = vunpack.c.l.b16 %v3829
        %v3846 = vunpack.c.l.b16 %v3830
        %v3847 = vunpack.c.l.b16 %v3831
        %v3848 = vunpack.c.l.b16 %v3832
        %v3849 = vunpack.c.l.b16 %v3833
        %v3850 = vpack.c.b16 %v3843, %v3842
        %v3851 = vpack.c.b16 %v3845, %v3844
        %v3852 = vpack.c.b16 %v3847, %v3846
        %v3853 = vpack.c.b16 %v3849, %v3848
        %v3859 = vsel %vm1193, %v3824, 0
        %3861 = vmatprep.subr.bf16.mxu0 0
        %3862 = vmatpush1.bf16.msra.mxu0 %v3850
        %3863 = vmatprep.subr.bf16.mxu0 0
        %3864 = vmatpush1.bf16.msra.mxu0 %v3851
        %3865 = vmatprep.subr.bf16.mxu0 0
        %3866 = vmatpush1.bf16.msra.mxu0 %v3852
        %3867 = vmatprep.subr.bf16.mxu0 0
        %3868 = vmatpush1.bf16.msra.mxu0 %v3853
        %3869 = vmatprep.subr.bf16.mxu0 0
        %3870 = vmatpush1.bf16.msra.mxu0 0
        %3871 = vmatprep.subr.bf16.mxu0 0
        %3872 = vmatpush1.bf16.msra.mxu0 0
        %3873 = vmatprep.subr.bf16.mxu0 0
        %3874 = vmatpush1.bf16.msra.mxu0 0
        %3875 = vmatprep.subr.bf16.mxu0 0
        %3876 = vmatpush1.bf16.msra.mxu0 0
        %3877 = vmatprep.subr.bf16.mxu0 0
        %3878 = vmatpush1.bf16.msra.mxu0 0
        %3879 = vmatprep.subr.bf16.mxu0 0
        %3880 = vmatpush1.bf16.msra.mxu0 0
        %3881 = vmatprep.subr.bf16.mxu0 0
        %3882 = vmatpush1.bf16.msra.mxu0 0
        %3883 = vmatprep.subr.bf16.mxu0 0
        %3884 = vmatpush1.bf16.msra.mxu0 0
        %3885 = vmatprep.subr.bf16.mxu0 0
        %3886 = vmatpush1.bf16.msra.mxu0 0
        %3887 = vmatprep.subr.bf16.mxu0 0
        %3888 = vmatpush1.bf16.msra.mxu0 0
        %3889 = vmatprep.subr.bf16.mxu0 0
        %3890 = vmatpush1.bf16.msra.mxu0 0
        %3891 = vmatprep.subr.bf16.mxu0 0
        %3892 = vmatpush1.bf16.msra.mxu0 0
        %3893 = vmatprep.mubr.bf16.mxu0 0
        %3894 = vmatmul.mubr.bf16.gmra.mrb[0].mxu0 %v3859
        %v3895 = vpop.f32.mrb[0].mxu0
        %v3896 = vadd.f32 0.0, %v3895
        %v3897 = vpop.f32.mrb[0].mxu0
        %v3898 = vpop.f32.mrb[0].mxu0
        %v3899 = vpop.f32.mrb[0].mxu0
        %3900 = vdwg.mxu0
        %v3901 = vadd.f32 %v3479, %v3896
        %s3902 = scalar_lea.vmem %s438, 132 [#allocation2]
        %v3903 = vld [vmem:[%s3902] sm:$0xf]
        %v3905 = vsel %vm525, %v3903, 0
        %3907 = vmatprep.subr.bf16.mxu0 0
        %3908 = vmatpush1.bf16.msra.mxu0 %v792
        %3909 = vmatprep.subr.bf16.mxu0 0
        %3910 = vmatpush1.bf16.msra.mxu0 %v793
        %3911 = vmatprep.subr.bf16.mxu0 0
        %3912 = vmatpush1.bf16.msra.mxu0 %v794
        %3913 = vmatprep.subr.bf16.mxu0 0
        %3914 = vmatpush1.bf16.msra.mxu0 %v795
        %3915 = vmatprep.subr.bf16.mxu0 0
        %3916 = vmatpush1.bf16.msra.mxu0 %v805
        %3917 = vmatprep.subr.bf16.mxu0 0
        %3918 = vmatpush1.bf16.msra.mxu0 0
        %3919 = vmatprep.subr.bf16.mxu0 0
        %3920 = vmatpush1.bf16.msra.mxu0 0
        %3921 = vmatprep.subr.bf16.mxu0 0
        %3922 = vmatpush1.bf16.msra.mxu0 0
        %3923 = vmatprep.subr.bf16.mxu0 0
        %3924 = vmatpush1.bf16.msra.mxu0 0
        %3925 = vmatprep.subr.bf16.mxu0 0
        %3926 = vmatpush1.bf16.msra.mxu0 0
        %3927 = vmatprep.subr.bf16.mxu0 0
        %3928 = vmatpush1.bf16.msra.mxu0 0
        %3929 = vmatprep.subr.bf16.mxu0 0
        %3930 = vmatpush1.bf16.msra.mxu0 0
        %3931 = vmatprep.subr.bf16.mxu0 0
        %3932 = vmatpush1.bf16.msra.mxu0 0
        %3933 = vmatprep.subr.bf16.mxu0 0
        %3934 = vmatpush1.bf16.msra.mxu0 0
        %3935 = vmatprep.subr.bf16.mxu0 0
        %3936 = vmatpush1.bf16.msra.mxu0 0
        %3937 = vmatprep.subr.bf16.mxu0 0
        %3938 = vmatpush1.bf16.msra.mxu0 0
        %3939 = vmatprep.mubr.bf16.mxu0 0
        %3940 = vmatmul.mubr.bf16.gmra.mrb[0].mxu0 %v3905
        %v3941 = vpop.f32.mrb[0].mxu0
        %v3942 = vadd.f32 0.0, %v3941
        %v3943 = vpop.f32.mrb[0].mxu0
        %v3944 = vpop.f32.mrb[0].mxu0
        %v3945 = vpop.f32.mrb[0].mxu0
        %3946 = vdwg.mxu0
        %3947 = vmatprep.subr.bf16.mxu0 0
        %3948 = vmatpush1.bf16.msra.mxu0 %v865
        %3949 = vmatprep.subr.bf16.mxu0 0
        %3950 = vmatpush1.bf16.msra.mxu0 %v866
        %3951 = vmatprep.subr.bf16.mxu0 0
        %3952 = vmatpush1.bf16.msra.mxu0 %v867
        %3953 = vmatprep.subr.bf16.mxu0 0
        %3954 = vmatpush1.bf16.msra.mxu0 %v868
        %3955 = vmatprep.subr.bf16.mxu0 0
        %3956 = vmatpush1.bf16.msra.mxu0 %v878
        %3957 = vmatprep.subr.bf16.mxu0 0
        %3958 = vmatpush1.bf16.msra.mxu0 0
        %3959 = vmatprep.subr.bf16.mxu0 0
        %3960 = vmatpush1.bf16.msra.mxu0 0
        %3961 = vmatprep.subr.bf16.mxu0 0
        %3962 = vmatpush1.bf16.msra.mxu0 0
        %3963 = vmatprep.subr.bf16.mxu0 0
        %3964 = vmatpush1.bf16.msra.mxu0 0
        %3965 = vmatprep.subr.bf16.mxu0 0
        %3966 = vmatpush1.bf16.msra.mxu0 0
        %3967 = vmatprep.subr.bf16.mxu0 0
        %3968 = vmatpush1.bf16.msra.mxu0 0
        %3969 = vmatprep.subr.bf16.mxu0 0
        %3970 = vmatpush1.bf16.msra.mxu0 0
        %3971 = vmatprep.subr.bf16.mxu0 0
        %3972 = vmatpush1.bf16.msra.mxu0 0
        %3973 = vmatprep.subr.bf16.mxu0 0
        %3974 = vmatpush1.bf16.msra.mxu0 0
        %3975 = vmatprep.subr.bf16.mxu0 0
        %3976 = vmatpush1.bf16.msra.mxu0 0
        %3977 = vmatprep.subr.bf16.mxu0 0
        %3978 = vmatpush1.bf16.msra.mxu0 0
        %3979 = vmatprep.mubr.bf16.mxu0 0
        %3980 = vmatmul.mubr.bf16.gmra.mrb[0].mxu0 %v3568
        %v3981 = vpop.f32.mrb[0].mxu0
        %v3982 = vadd.f32 %v3942, %v3981
        %v3983 = vpop.f32.mrb[0].mxu0
        %v3984 = vpop.f32.mrb[0].mxu0
        %v3985 = vpop.f32.mrb[0].mxu0
        %3986 = vdwg.mxu0
        %s3987 = scalar_lea.vmem %s438, 136 [#allocation2]
        %v3988 = vld [vmem:[%s3987] sm:$0xf]
        %v3990 = vsel %vm525, %v3988, 0
        %3992 = vmatprep.subr.bf16.mxu0 0
        %3993 = vmatpush1.bf16.msra.mxu0 %v950
        %3994 = vmatprep.subr.bf16.mxu0 0
        %3995 = vmatpush1.bf16.msra.mxu0 %v951
        %3996 = vmatprep.subr.bf16.mxu0 0
        %3997 = vmatpush1.bf16.msra.mxu0 %v952
        %3998 = vmatprep.subr.bf16.mxu0 0
        %3999 = vmatpush1.bf16.msra.mxu0 %v953
        %4000 = vmatprep.subr.bf16.mxu0 0
        %4001 = vmatpush1.bf16.msra.mxu0 %v963
        %4002 = vmatprep.subr.bf16.mxu0 0
        %4003 = vmatpush1.bf16.msra.mxu0 0
        %4004 = vmatprep.subr.bf16.mxu0 0
        %4005 = vmatpush1.bf16.msra.mxu0 0
        %4006 = vmatprep.subr.bf16.mxu0 0
        %4007 = vmatpush1.bf16.msra.mxu0 0
        %4008 = vmatprep.subr.bf16.mxu0 0
        %4009 = vmatpush1.bf16.msra.mxu0 0
        %4010 = vmatprep.subr.bf16.mxu0 0
        %4011 = vmatpush1.bf16.msra.mxu0 0
        %4012 = vmatprep.subr.bf16.mxu0 0
        %4013 = vmatpush1.bf16.msra.mxu0 0
        %4014 = vmatprep.subr.bf16.mxu0 0
        %4015 = vmatpush1.bf16.msra.mxu0 0
        %4016 = vmatprep.subr.bf16.mxu0 0
        %4017 = vmatpush1.bf16.msra.mxu0 0
        %4018 = vmatprep.subr.bf16.mxu0 0
        %4019 = vmatpush1.bf16.msra.mxu0 0
        %4020 = vmatprep.subr.bf16.mxu0 0
        %4021 = vmatpush1.bf16.msra.mxu0 0
        %4022 = vmatprep.subr.bf16.mxu0 0
        %4023 = vmatpush1.bf16.msra.mxu0 0
        %4024 = vmatprep.mubr.bf16.mxu0 0
        %4025 = vmatmul.mubr.bf16.gmra.mrb[0].mxu0 %v3990
        %v4026 = vpop.f32.mrb[0].mxu0
        %v4027 = vadd.f32 0.0, %v4026
        %v4028 = vpop.f32.mrb[0].mxu0
        %v4029 = vpop.f32.mrb[0].mxu0
        %v4030 = vpop.f32.mrb[0].mxu0
        %4031 = vdwg.mxu0
        %v4032 = vadd.f32 %v3982, %v4027
        %v4033 = vadd.f32 %v4032, %v1012
        %v4034 = vmax.f32 %v4033, 0.0
        %v4035 = vpack.c.bf16 %v4034, %v4034
        %s4036 = scalar_lea.vmem %s4, 480
        %v4037 = vld [vmem:[%s4036] sm:$0xf]
        %v4038 = vld [vmem:[%s4036 + $0x4] sm:$0xf]
        %v4039 = vld [vmem:[%s4036 + $0x8] sm:$0xf]
        %v4040 = vld [vmem:[%s4036 + $0xc] sm:$0xf]
        %v4041 = vld [vmem:[%s4036 + $0x10] sm:$0xf]
        %v4042 = vld [vmem:[%s4036 + $0x14] sm:$0xf]
        %v4043 = vld [vmem:[%s4036 + $0x18] sm:$0xf]
        %v4044 = vld [vmem:[%s4036 + $0x1c] sm:$0xf]
        %v4053 = vunpack.c.l.b16 %v4037
        %v4054 = vunpack.c.l.b16 %v4038
        %v4055 = vunpack.c.l.b16 %v4039
        %v4056 = vunpack.c.l.b16 %v4040
        %v4057 = vunpack.c.l.b16 %v4041
        %v4058 = vunpack.c.l.b16 %v4042
        %v4059 = vunpack.c.l.b16 %v4043
        %v4060 = vunpack.c.l.b16 %v4044
        %v4061 = vpack.c.b16 %v4054, %v4053
        %v4062 = vpack.c.b16 %v4056, %v4055
        %v4063 = vpack.c.b16 %v4058, %v4057
        %v4064 = vpack.c.b16 %v4060, %v4059
        %v4070 = vsel %vm1193, %v4035, 0
        %4072 = vmatprep.subr.bf16.mxu0 0
        %4073 = vmatpush1.bf16.msra.mxu0 %v4061
        %4074 = vmatprep.subr.bf16.mxu0 0
        %4075 = vmatpush1.bf16.msra.mxu0 %v4062
        %4076 = vmatprep.subr.bf16.mxu0 0
        %4077 = vmatpush1.bf16.msra.mxu0 %v4063
        %4078 = vmatprep.subr.bf16.mxu0 0
        %4079 = vmatpush1.bf16.msra.mxu0 %v4064
        %4080 = vmatprep.subr.bf16.mxu0 0
        %4081 = vmatpush1.bf16.msra.mxu0 0
        %4082 = vmatprep.subr.bf16.mxu0 0
        %4083 = vmatpush1.bf16.msra.mxu0 0
        %4084 = vmatprep.subr.bf16.mxu0 0
        %4085 = vmatpush1.bf16.msra.mxu0 0
        %4086 = vmatprep.subr.bf16.mxu0 0
        %4087 = vmatpush1.bf16.msra.mxu0 0
        %4088 = vmatprep.subr.bf16.mxu0 0
        %4089 = vmatpush1.bf16.msra.mxu0 0
        %4090 = vmatprep.subr.bf16.mxu0 0
        %4091 = vmatpush1.bf16.msra.mxu0 0
        %4092 = vmatprep.subr.bf16.mxu0 0
        %4093 = vmatpush1.bf16.msra.mxu0 0
        %4094 = vmatprep.subr.bf16.mxu0 0
        %4095 = vmatpush1.bf16.msra.mxu0 0
        %4096 = vmatprep.subr.bf16.mxu0 0
        %4097 = vmatpush1.bf16.msra.mxu0 0
        %4098 = vmatprep.subr.bf16.mxu0 0
        %4099 = vmatpush1.bf16.msra.mxu0 0
        %4100 = vmatprep.subr.bf16.mxu0 0
        %4101 = vmatpush1.bf16.msra.mxu0 0
        %4102 = vmatprep.subr.bf16.mxu0 0
        %4103 = vmatpush1.bf16.msra.mxu0 0
        %4104 = vmatprep.mubr.bf16.mxu0 0
        %4105 = vmatmul.mubr.bf16.gmra.mrb[0].mxu0 %v4070
        %v4106 = vpop.f32.mrb[0].mxu0
        %v4107 = vadd.f32 0.0, %v4106
        %v4108 = vpop.f32.mrb[0].mxu0
        %v4109 = vpop.f32.mrb[0].mxu0
        %v4110 = vpop.f32.mrb[0].mxu0
        %4111 = vdwg.mxu0
        %v4112 = vadd.f32 %v3690, %v4107
        %v4113 = vld [vmem:[%s474] sm:$0xf]
        %v4114 = vld [vmem:[%s5] sm:$0xf]
        %v4115 = vld [vmem:[%s6] sm:$0x1]
        %v4117 = vlaneseq
        %v4118 = vshrl.u32 %v4117, 7
        %v4119 = vsub.s32 0, %v4118
        %v4120 = vrot.slane %v4115, %v4119
        %v4122 = vadd.f32 %v3901, %v4120
        %vm4123 = vcmask 261120
        %4124 = vst.msk [vmem:[%s470] sm:$0xff] %vm4123, %v4122
        %4125 = vrot.lane.b32.xlu0 %v4120, 96
        %v4126 = vpop.permute.xlu0 %4125
        %v4128 = vadd.f32 %v4112, %v4126
        %4130 = vrot.lane.b32.xlu0 %v4128, 32
        %v4131 = vpop.permute.xlu0 %4130
        %vm4133 = vcmask 523520
        %4134 = vst.msk [vmem:[%s470] sm:$0xff] %vm4133, %v4131
        %4135 = vrot.lane.b32.xlu0 %v4120, 64
        %v4136 = vpop.permute.xlu0 %4135
        %vm4138 = vcmask 64512
        %v4140 = vsel %vm4138, %v4113, 0
        %v4143 = vsel %vm529, %v4114, 0
        %4145 = vmatprep.subr.bf16.mxu0 0
        %4146 = vmatpush1.bf16.msra.mxu0 %v4143
        %4147 = vmatprep.subr.bf16.mxu0 0
        %4148 = vmatpush1.bf16.msra.mxu0 0
        %4149 = vmatprep.subr.bf16.mxu0 0
        %4150 = vmatpush1.bf16.msra.mxu0 0
        %4151 = vmatprep.subr.bf16.mxu0 0
        %4152 = vmatpush1.bf16.msra.mxu0 0
        %4153 = vmatprep.subr.bf16.mxu0 0
        %4154 = vmatpush1.bf16.msra.mxu0 0
        %4155 = vmatprep.subr.bf16.mxu0 0
        %4156 = vmatpush1.bf16.msra.mxu0 0
        %4157 = vmatprep.subr.bf16.mxu0 0
        %4158 = vmatpush1.bf16.msra.mxu0 0
        %4159 = vmatprep.subr.bf16.mxu0 0
        %4160 = vmatpush1.bf16.msra.mxu0 0
        %4161 = vmatprep.subr.bf16.mxu0 0
        %4162 = vmatpush1.bf16.msra.mxu0 0
        %4163 = vmatprep.subr.bf16.mxu0 0
        %4164 = vmatpush1.bf16.msra.mxu0 0
        %4165 = vmatprep.subr.bf16.mxu0 0
        %4166 = vmatpush1.bf16.msra.mxu0 0
        %4167 = vmatprep.subr.bf16.mxu0 0
        %4168 = vmatpush1.bf16.msra.mxu0 0
        %4169 = vmatprep.subr.bf16.mxu0 0
        %4170 = vmatpush1.bf16.msra.mxu0 0
        %4171 = vmatprep.subr.bf16.mxu0 0
        %4172 = vmatpush1.bf16.msra.mxu0 0
        %4173 = vmatprep.subr.bf16.mxu0 0
        %4174 = vmatpush1.bf16.msra.mxu0 0
        %4175 = vmatprep.subr.bf16.mxu0 0
        %4176 = vmatpush1.bf16.msra.mxu0 0
        %4177 = vmatprep.mubr.bf16.mxu0 0
        %4178 = vmatmul.mubr.bf16.gmra.mrb[0].mxu0 %v4140
        %v4179 = vpop.f32.mrb[0].mxu0
        %v4180 = vadd.f32 %v4136, %v4179
        %v4181 = vpop.f32.mrb[0].mxu0
        %v4182 = vpop.f32.mrb[0].mxu0
        %v4183 = vpop.f32.mrb[0].mxu0
        %4184 = vdwg.mxu0
        %4186 = vrot.lane.b32.xlu0 %v4180, 64
        %v4187 = vpop.permute.xlu0 %4186
        %vm4189 = vcmask 654848
        %4190 = vst.msk [vmem:[%s470] sm:$0xff] %vm4189, %v4187
        %s4191 = sand.u32 %s186, 1
        %s4192 = scalar_lea.sflag [#allocation4], %s4191
        %s4193 = sand.u32 %s186, 1
        %s4194 = smul.addr %s4193, 8
        %s4195 = scalar_lea.vmem [#allocation3], %s4194
        // Predicated region
        $region90: #{concat_encoders_forward.1} parent=84 // pred_check
          %p4196 = pneg %p196
        $region91: #{concat_encoders_forward.1} parent=84 // pred_check_branch
          %4198 = sbr.rel (%p4196) target = $region93
        $region92: #{concat_encoders_forward.1} parent=84 // pred_region
          %s4200 = ssub.s32 128, 128
          %4201 = vsyncadd %s4192, %s4200
          %s4202 = smul.addr %s21, 128
          %s4203 = scalar_lea.hbm %s7, %s4202
          %s4205 = sshll.u32 %s4195, 4
          %s4206 = int_to_ptr.vmem [resolvable:$true] %s4205
          %4208 = dma.vmem_to_hbm [thread:$0]  %s4206, 128, %s4203, %s4192
        $region93: #{concat_encoders_forward.1} parent=84 // pred_fallthru
          _
      $region85: #{concat_encoders_forward.1} parent=5 // pred_fallthru
        _
      %p4209 = scmp.le.s32.totalorder 2, %s16
      // Predicated region
      $region94: #{concat_encoders_forward.1} parent=5 // pred_check
        %p4210 = pneg %p4209
      $region95: #{concat_encoders_forward.1} parent=5 // pred_check_branch
        %4212 = sbr.rel (%p4210) target = $region97
      $region96: #{concat_encoders_forward.1} parent=5 // pred_region
        %s4213 = ssub.s32 %s16, 2
        // Predicated region
        $region98: #{concat_encoders_forward.1} parent=96 // pred_check
          %p4214 = pneg %p202
        $region99: #{concat_encoders_forward.1} parent=96 // pred_check_branch
          %4216 = sbr.rel (%p4214) target = $region101
        $region100: #{concat_encoders_forward.1} parent=96 // pred_region
          %s4217 = sand.u32 %s187, 1
          %s4218 = scalar_lea.sflag [#allocation4], %s4217
          %s4219 = sand.u32 %s187, 1
          %s4220 = smul.addr %s4219, 8
          %s4221 = scalar_lea.vmem [#allocation3], %s4220
          %4222 = dma.done %s4218, 128
        $region101: #{concat_encoders_forward.1} parent=96 // pred_fallthru
          _
      $region97: #{concat_encoders_forward.1} parent=5 // pred_fallthru
        _
    $region6: #{concat_encoders_forward.1} parent=1 // loop_footer
      %s20 = sadd.s32 1, %s16
    $region7: #{concat_encoders_forward.1} parent=1 // loop_footer_branch
      %15 = sbr.rel target = $region3
    $region8: #{concat_encoders_forward.1} parent=1 // loop_exit
      _
    %4223 = vsyncpa [#allocation4], 1
    %s4224 = scalar_lea.sflag [#allocation4], 1
    %4225 = vsyncpa %s4224, 1

</llo_original>
